<compile_context>
chip_gen: v6e
topology: v6e:2x2x1
jax: 0.10.0
libtpu: 0.0.40
codegen_flags: <defaults>
</compile_context>

<pallas_src>
import functools

import jax
import jax.numpy as jnp
from jax.experimental import pallas as pl
from jax.experimental.pallas import tpu as pltpu

EPS = 1e-5


def _fused_conv_bn_kernel(x_ref, w_ref, g_ref, b_ref, o_ref,
                          y_scr, scale_scr, shift_scr, *, n_batch, count, eps):
    # x_ref:     [1, Cin, HW]   f32 activations for batch n (phase 0 only)
    # w_ref:     [Cout, Cin]    f32 1x1 conv weight (resident)
    # g_ref/b_ref: [Cout, 1]    f32 BN gamma / beta (resident)
    # o_ref:     [1, Cout, HW]  f32 output for batch n (phase 1 only)
    # y_scr:     [N, Cout, HW]  f32 VMEM-resident conv output
    # scale_scr/shift_scr: [Cout, 1] folded BN affine
    phase = pl.program_id(0)
    n = pl.program_id(1)

    # ---- Phase 0: 1x1 conv (bf16 MXU, f32 accumulate) into resident scratch ----
    @pl.when(phase == 0)
    def _():
        xb = x_ref[0].astype(jnp.bfloat16)           # [Cin, HW]
        wb = w_ref[...].astype(jnp.bfloat16)         # [Cout, Cin]
        y_scr[n] = jnp.dot(wb, xb, preferred_element_type=jnp.float32)

    # ---- Phase boundary: batch stats + folded BN affine (mean-centered var) ----
    @pl.when((phase == 1) & (n == 0))
    def _():
        inv = 1.0 / count
        s = jnp.sum(y_scr[0], axis=1, keepdims=True)           # [Cout, 1]
        for i in range(1, n_batch):
            s = s + jnp.sum(y_scr[i], axis=1, keepdims=True)
        mean = s * inv

        d0 = y_scr[0] - mean
        v = jnp.sum(d0 * d0, axis=1, keepdims=True)
        for i in range(1, n_batch):
            d = y_scr[i] - mean
            v = v + jnp.sum(d * d, axis=1, keepdims=True)
        var = v * inv                                           # biased variance

        scale = g_ref[...] * jax.lax.rsqrt(var + eps)           # EUP rsqrt
        scale_scr[...] = scale
        shift_scr[...] = b_ref[...] - mean * scale

    # ---- Phase 1: o = y * scale + shift (2 VPU ops/elem), lane-dense store ----
    @pl.when(phase == 1)
    def _():
        o_ref[0] = (y_scr[n] * scale_scr[...] + shift_scr[...]).astype(o_ref.dtype)


def conv2d_1x1_batchnorm(x_nchw, weight_oihw, gamma, beta, *, eps=EPS):
    N, Cin, H, W = x_nchw.shape
    Cout = weight_oihw.shape[0]
    HW = H * W

    # NCHW stays NCHW: flatten spatial (free, contiguous), no pad, no cast.
    x3 = x_nchw.reshape(N, Cin, HW)
    w2 = weight_oihw.reshape(Cout, Cin)
    g2 = gamma.reshape(Cout, 1).astype(jnp.float32)
    b2 = beta.reshape(Cout, 1).astype(jnp.float32)

    kernel = functools.partial(
        _fused_conv_bn_kernel, n_batch=N, count=float(N * HW), eps=float(eps))

    flops = 2 * N * HW * Cin * Cout
    bytes_accessed = (N * Cin * HW * 4        # x read once (phase 0)
                      + Cout * Cin * 4        # W
                      + 2 * Cout * 4          # gamma, beta
                      + N * Cout * HW * 4)    # output written once (phase 1)

    out = pl.pallas_call(
        kernel,
        out_shape=jax.ShapeDtypeStruct((N, Cout, HW), jnp.float32),
        grid=(2, N),  # (phase, batch)
        in_specs=[
            # x: stream per-batch in phase 0; pin to the last block in phase 1
            # (unused there) so the phase transition issues no extra DMA.
            pl.BlockSpec((1, Cin, HW),
                         lambda p, n: ((1 - p) * n + p * (N - 1), 0, 0)),
            pl.BlockSpec((Cout, Cin), lambda p, n: (0, 0)),
            pl.BlockSpec((Cout, 1), lambda p, n: (0, 0)),
            pl.BlockSpec((Cout, 1), lambda p, n: (0, 0)),
        ],
        # Output: pinned to block 0 during phase 0 (never written there, and the
        # index does not change across the phase boundary, so no garbage
        # writeback); streamed per-batch in phase 1.
        out_specs=pl.BlockSpec((1, Cout, HW), lambda p, n: (p * n, 0, 0)),
        scratch_shapes=[
            pltpu.VMEM((N, Cout, HW), jnp.float32),   # resident conv output
            pltpu.VMEM((Cout, 1), jnp.float32),       # folded BN scale
            pltpu.VMEM((Cout, 1), jnp.float32),       # folded BN shift
        ],
        compiler_params=pltpu.CompilerParams(
            # Phase axis is a hard dependency; batch feeds a shared scratch.
            dimension_semantics=("arbitrary", "arbitrary"),
            vmem_limit_bytes=32 * 1024 * 1024),
        cost_estimate=pl.CostEstimate(
            flops=flops, transcendentals=Cout, bytes_accessed=bytes_accessed),
    )(x3, w2, g2, b2)

    return out.reshape(N, Cout, H, W)


def _reference(x_nchw, weight_oihw, gamma, beta, eps=EPS):
    # Pure-JAX reference with the same bf16-rounded matmul operands
    # (f32 accumulation), training-mode batchnorm with biased variance.
    N, Cin, H, W = x_nchw.shape
    Cout = weight_oihw.shape[0]
    xb = x_nchw.astype(jnp.bfloat16).astype(jnp.float32)
    wb = weight_oihw.reshape(Cout, Cin).astype(jnp.bfloat16).astype(jnp.float32)
    y = jnp.einsum("oi,nihw->nohw", wb, xb)
    mean = y.mean(axis=(0, 2, 3), keepdims=True)
    var = ((y - mean) ** 2).mean(axis=(0, 2, 3), keepdims=True)
    yn = (y - mean) / jnp.sqrt(var + eps)
    return yn * gamma.reshape(1, -1, 1, 1) + beta.reshape(1, -1, 1, 1)


if __name__ == "__main__":
    key = jax.random.PRNGKey(0)
    k1, k2, k3, k4 = jax.random.split(key, 4)

    # Module fixes Cin=208, Cout=440; spec input is 14x14 spatial. Batch=2 to
    # exercise the batch grid axis.
    N, Cin, H, W, Cout = 2, 208, 14, 14, 440

    x = jax.random.normal(k1, (N, Cin, H, W), jnp.float32)
    weight = jax.random.normal(k2, (Cout, Cin, 1, 1), jnp.float32) * 0.05
    gamma = 1.0 + 0.1 * jax.random.normal(k3, (Cout,), jnp.float32)
    beta = 0.1 * jax.random.normal(k4, (Cout,), jnp.float32)

    out = conv2d_1x1_batchnorm(x, weight, gamma, beta)
    jax.block_until_ready(out)

    ref = _reference(x, weight, gamma, beta)
    assert out.shape == (N, Cout, H, W)
    assert jnp.allclose(out, ref, atol=1e-2, rtol=1e-2), (
        float(jnp.max(jnp.abs(out - ref))))

    print("KERNEL_OK")
</pallas_src>

<mosaic_0001>
module attributes {stable_mosaic.version = 11 : i64} {
  func.func @_fused_conv_bn_kernel(%arg0: i32, %arg1: i32, %arg2: memref<1x208x196xf32, #tpu.memory_space<vmem>>, %arg3: memref<440x208xf32, #tpu.memory_space<vmem>>, %arg4: memref<440x1xf32, #tpu.memory_space<vmem>>, %arg5: memref<440x1xf32, #tpu.memory_space<vmem>>, %arg6: memref<1x440x196xf32, #tpu.memory_space<vmem>>, %arg7: memref<2x440x196xf32, #tpu.memory_space<vmem>>, %arg8: memref<440x1xf32, #tpu.memory_space<vmem>>, %arg9: memref<440x1xf32, #tpu.memory_space<vmem>>) attributes {dimension_semantics = [#tpu.dimension_semantics<arbitrary>, #tpu.dimension_semantics<arbitrary>], iteration_bounds = array<i64: 2, 2>, scalar_prefetch = 0 : i64, scratch_operands = 3 : i64, tpu.core_type = #tpu.core_type<tc>, window_params = [{transform_indices = @transform_0, window_bounds = array<i64: 1, 208, 196>}, {pipeline_mode = #tpu.pipeline_mode<synchronous>, transform_indices = @transform_1, window_bounds = array<i64: 440, 208>}, {pipeline_mode = #tpu.pipeline_mode<synchronous>, transform_indices = @transform_2, window_bounds = array<i64: 440, 1>}, {pipeline_mode = #tpu.pipeline_mode<synchronous>, transform_indices = @transform_3, window_bounds = array<i64: 440, 1>}, {transform_indices = @transform_4, window_bounds = array<i64: 1, 440, 196>}]} {
    %c0_i32 = arith.constant 0 : i32
    %0 = arith.cmpi eq, %arg0, %c0_i32 : i32
    %1 = arith.extui %0 : i1 to i32
    %c0_i32_0 = arith.constant 0 : i32
    %2 = arith.cmpi ne, %1, %c0_i32_0 : i32
    scf.if %2 {
      %c0 = arith.constant 0 : index
      %c0_5 = arith.constant 0 : index
      %c0_6 = arith.constant 0 : index
      %11 = vector.load %arg2[%c0, %c0_5, %c0_6] : memref<1x208x196xf32, #tpu.memory_space<vmem>>, vector<1x208x196xf32>
      %12 = vector.shape_cast %11 : vector<1x208x196xf32> to vector<208x196xf32>
      %13 = arith.truncf %12 : vector<208x196xf32> to vector<208x196xbf16>
      %c0_7 = arith.constant 0 : index
      %c0_8 = arith.constant 0 : index
      %14 = vector.load %arg3[%c0_7, %c0_8] : memref<440x208xf32, #tpu.memory_space<vmem>>, vector<440x208xf32>
      %15 = arith.truncf %14 : vector<440x208xf32> to vector<440x208xbf16>
      %cst = arith.constant dense<0.000000e+00> : vector<440x196xf32>
      %16 = tpu.matmul %15, %13, %cst {dimension_numbers = #tpu.dot_dimension_numbers<[1], [0], [0], [1], [0, 0, 1, 1], [], []>} : vector<440x208xbf16>, vector<208x196xbf16>, vector<440x196xf32> -> vector<440x196xf32>
      %17 = arith.index_cast %arg1 : i32 to index
      %c0_9 = arith.constant 0 : index
      %c0_10 = arith.constant 0 : index
      %18 = vector.load %arg7[%17, %c0_9, %c0_10] : memref<2x440x196xf32, #tpu.memory_space<vmem>>, vector<1x440x196xf32>
      %19 = vector.shape_cast %18 : vector<1x440x196xf32> to vector<440x196xf32>
      %20 = vector.shape_cast %16 : vector<440x196xf32> to vector<1x440x196xf32>
      tpu.vector_store %arg7[%17, %c0_9, %c0_10], %20 {strides = array<i32>} : memref<2x440x196xf32, #tpu.memory_space<vmem>>, vector<1x440x196xf32>,
    } else {
    }
    %c1_i32 = arith.constant 1 : i32
    %3 = arith.cmpi eq, %arg0, %c1_i32 : i32
    %c0_i32_1 = arith.constant 0 : i32
    %4 = arith.cmpi eq, %arg1, %c0_i32_1 : i32
    %5 = arith.andi %3, %4 : i1
    %6 = arith.extui %5 : i1 to i32
    %c0_i32_2 = arith.constant 0 : i32
    %7 = arith.cmpi ne, %6, %c0_i32_2 : i32
    scf.if %7 {
      %c0 = arith.constant 0 : index
      %c0_5 = arith.constant 0 : index
      %c0_6 = arith.constant 0 : index
      %11 = vector.load %arg7[%c0, %c0_5, %c0_6] : memref<2x440x196xf32, #tpu.memory_space<vmem>>, vector<1x440x196xf32>
      %12 = vector.shape_cast %11 : vector<1x440x196xf32> to vector<440x196xf32>
      %cst = arith.constant dense<0.000000e+00> : vector<440xf32>
      %13 = vector.multi_reduction <add>, %12, %cst [1] : vector<440x196xf32> to vector<440xf32>
      %14 = vector.shape_cast %13 : vector<440xf32> to vector<440x1xf32>
      %c1 = arith.constant 1 : index
      %c0_7 = arith.constant 0 : index
      %c0_8 = arith.constant 0 : index
      %15 = vector.load %arg7[%c1, %c0_7, %c0_8] : memref<2x440x196xf32, #tpu.memory_space<vmem>>, vector<1x440x196xf32>
      %16 = vector.shape_cast %15 : vector<1x440x196xf32> to vector<440x196xf32>
      %cst_9 = arith.constant dense<0.000000e+00> : vector<440xf32>
      %17 = vector.multi_reduction <add>, %16, %cst_9 [1] : vector<440x196xf32> to vector<440xf32>
      %18 = vector.shape_cast %17 : vector<440xf32> to vector<440x1xf32>
      %19 = arith.addf %14, %18 : vector<440x1xf32>
      %cst_10 = arith.constant 0.00255102036 : f32
      %20 = vector.broadcast %cst_10 : f32 to vector<440x1xf32>
      %21 = arith.mulf %19, %20 : vector<440x1xf32>
      %c0_11 = arith.constant 0 : index
      %c0_12 = arith.constant 0 : index
      %c0_13 = arith.constant 0 : index
      %22 = vector.load %arg7[%c0_11, %c0_12, %c0_13] : memref<2x440x196xf32, #tpu.memory_space<vmem>>, vector<1x440x196xf32>
      %23 = vector.shape_cast %22 : vector<1x440x196xf32> to vector<440x196xf32>
      %24 = vector.broadcast %21 : vector<440x1xf32> to vector<440x196xf32>
      %25 = arith.subf %23, %24 : vector<440x196xf32>
      %26 = arith.mulf %25, %25 : vector<440x196xf32>
      %cst_14 = arith.constant dense<0.000000e+00> : vector<440xf32>
      %27 = vector.multi_reduction <add>, %26, %cst_14 [1] : vector<440x196xf32> to vector<440xf32>
      %28 = vector.shape_cast %27 : vector<440xf32> to vector<440x1xf32>
      %c1_15 = arith.constant 1 : index
      %c0_16 = arith.constant 0 : index
      %c0_17 = arith.constant 0 : index
      %29 = vector.load %arg7[%c1_15, %c0_16, %c0_17] : memref<2x440x196xf32, #tpu.memory_space<vmem>>, vector<1x440x196xf32>
      %30 = vector.shape_cast %29 : vector<1x440x196xf32> to vector<440x196xf32>
      %31 = vector.broadcast %21 : vector<440x1xf32> to vector<440x196xf32>
      %32 = arith.subf %30, %31 : vector<440x196xf32>
      %33 = arith.mulf %32, %32 : vector<440x196xf32>
      %cst_18 = arith.constant dense<0.000000e+00> : vector<440xf32>
      %34 = vector.multi_reduction <add>, %33, %cst_18 [1] : vector<440x196xf32> to vector<440xf32>
      %35 = vector.shape_cast %34 : vector<440xf32> to vector<440x1xf32>
      %36 = arith.addf %28, %35 : vector<440x1xf32>
      %cst_19 = arith.constant 0.00255102036 : f32
      %37 = vector.broadcast %cst_19 : f32 to vector<440x1xf32>
      %38 = arith.mulf %36, %37 : vector<440x1xf32>
      %c0_20 = arith.constant 0 : index
      %c0_21 = arith.constant 0 : index
      %39 = vector.load %arg4[%c0_20, %c0_21] : memref<440x1xf32, #tpu.memory_space<vmem>>, vector<440x1xf32>
      %cst_22 = arith.constant 9.99999974E-6 : f32
      %40 = vector.broadcast %cst_22 : f32 to vector<440x1xf32>
      %41 = arith.addf %38, %40 : vector<440x1xf32>
      %42 = math.rsqrt %41 : vector<440x1xf32>
      %43 = arith.mulf %39, %42 : vector<440x1xf32>
      %c0_23 = arith.constant 0 : index
      %c0_24 = arith.constant 0 : index
      %44 = vector.load %arg8[%c0_23, %c0_24] : memref<440x1xf32, #tpu.memory_space<vmem>>, vector<440x1xf32>
      tpu.vector_store %arg8[%c0_23, %c0_24], %43 {strides = array<i32>} : memref<440x1xf32, #tpu.memory_space<vmem>>, vector<440x1xf32>,
      %c0_25 = arith.constant 0 : index
      %c0_26 = arith.constant 0 : index
      %45 = vector.load %arg5[%c0_25, %c0_26] : memref<440x1xf32, #tpu.memory_space<vmem>>, vector<440x1xf32>
      %46 = arith.mulf %21, %43 : vector<440x1xf32>
      %47 = arith.subf %45, %46 : vector<440x1xf32>
      %c0_27 = arith.constant 0 : index
      %c0_28 = arith.constant 0 : index
      %48 = vector.load %arg9[%c0_27, %c0_28] : memref<440x1xf32, #tpu.memory_space<vmem>>, vector<440x1xf32>
      tpu.vector_store %arg9[%c0_27, %c0_28], %47 {strides = array<i32>} : memref<440x1xf32, #tpu.memory_space<vmem>>, vector<440x1xf32>,
    } else {
    }
    %c1_i32_3 = arith.constant 1 : i32
    %8 = arith.cmpi eq, %arg0, %c1_i32_3 : i32
    %9 = arith.extui %8 : i1 to i32
    %c0_i32_4 = arith.constant 0 : i32
    %10 = arith.cmpi ne, %9, %c0_i32_4 : i32
    scf.if %10 {
      %11 = arith.index_cast %arg1 : i32 to index
      %c0 = arith.constant 0 : index
      %c0_5 = arith.constant 0 : index
      %12 = vector.load %arg7[%11, %c0, %c0_5] : memref<2x440x196xf32, #tpu.memory_space<vmem>>, vector<1x440x196xf32>
      %13 = vector.shape_cast %12 : vector<1x440x196xf32> to vector<440x196xf32>
      %c0_6 = arith.constant 0 : index
      %c0_7 = arith.constant 0 : index
      %14 = vector.load %arg8[%c0_6, %c0_7] : memref<440x1xf32, #tpu.memory_space<vmem>>, vector<440x1xf32>
      %15 = vector.broadcast %14 : vector<440x1xf32> to vector<440x196xf32>
      %16 = arith.mulf %13, %15 : vector<440x196xf32>
      %c0_8 = arith.constant 0 : index
      %c0_9 = arith.constant 0 : index
      %17 = vector.load %arg9[%c0_8, %c0_9] : memref<440x1xf32, #tpu.memory_space<vmem>>, vector<440x1xf32>
      %18 = vector.broadcast %17 : vector<440x1xf32> to vector<440x196xf32>
      %19 = arith.addf %16, %18 : vector<440x196xf32>
      %c0_10 = arith.constant 0 : index
      %c0_11 = arith.constant 0 : index
      %c0_12 = arith.constant 0 : index
      %20 = vector.load %arg6[%c0_10, %c0_11, %c0_12] : memref<1x440x196xf32, #tpu.memory_space<vmem>>, vector<1x440x196xf32>
      %21 = vector.shape_cast %20 : vector<1x440x196xf32> to vector<440x196xf32>
      %22 = vector.shape_cast %19 : vector<440x196xf32> to vector<1x440x196xf32>
      tpu.vector_store %arg6[%c0_10, %c0_11, %c0_12], %22 {strides = array<i32>} : memref<1x440x196xf32, #tpu.memory_space<vmem>>, vector<1x440x196xf32>,
    } else {
    }
    return
  }
  func.func @transform_0(%arg0: i32, %arg1: i32) -> (i32, i32, i32) {
    %c1_i32 = arith.constant 1 : i32
    %0 = arith.subi %c1_i32, %arg0 : i32
    %1 = arith.muli %0, %arg1 : i32
    %c1_i32_0 = arith.constant 1 : i32
    %2 = arith.muli %arg0, %c1_i32_0 : i32
    %3 = arith.addi %1, %2 : i32
    %c0_i32 = arith.constant 0 : i32
    %c0_i32_1 = arith.constant 0 : i32
    %c0_i32_2 = arith.constant 0 : i32
    return %3, %c0_i32, %c0_i32_1 : i32, i32, i32
  }
  func.func @transform_1(%arg0: i32, %arg1: i32) -> (i32, i32) {
    %c0_i32 = arith.constant 0 : i32
    %c0_i32_0 = arith.constant 0 : i32
    %c0_i32_1 = arith.constant 0 : i32
    return %c0_i32, %c0_i32_0 : i32, i32
  }
  func.func @transform_2(%arg0: i32, %arg1: i32) -> (i32, i32) {
    %c0_i32 = arith.constant 0 : i32
    %c0_i32_0 = arith.constant 0 : i32
    %c0_i32_1 = arith.constant 0 : i32
    return %c0_i32, %c0_i32_0 : i32, i32
  }
  func.func @transform_3(%arg0: i32, %arg1: i32) -> (i32, i32) {
    %c0_i32 = arith.constant 0 : i32
    %c0_i32_0 = arith.constant 0 : i32
    %c0_i32_1 = arith.constant 0 : i32
    return %c0_i32, %c0_i32_0 : i32, i32
  }
  func.func @transform_4(%arg0: i32, %arg1: i32) -> (i32, i32, i32) {
    %0 = arith.muli %arg0, %arg1 : i32
    %c0_i32 = arith.constant 0 : i32
    %c0_i32_0 = arith.constant 0 : i32
    %c0_i32_1 = arith.constant 0 : i32
    return %0, %c0_i32, %c0_i32_0 : i32, i32, i32
  }
}

</mosaic_0001>

<llo_original>
// kernel: tpu_custom_call.1
$region0: #{tpu_custom_call.1}
  #allocation0 [shape = 'u32[]', space=smem, size = 0x4, offset = 0x4, fixed_abs, tag = 'smem constant byte address 0x4 - core index']
  #allocation1 [shape = 'u32[144,128]{1,0:T(1,128)}', space=vmem, size = 0x12000, scoped, tag = 'internal scratch']
  #allocation2 [shape = 'f32[2,440,196]{2,1,0:T(8,128)}', space=vmem, size = 0xdc000, scoped, tag = 'scratch operand']
  #allocation3 [shape = 'f32[440,1]{1,0:T(8,128)}', space=vmem, size = 0x37000, scoped, tag = 'scratch operand']
  #allocation4 [shape = 'f32[440,1]{1,0:T(8,128)}', space=vmem, size = 0x37000, scoped, tag = 'scratch operand']
  %s0 = inlined_call_operand.vmem [shape: f32[2,208,196], index: 0, kind: input, shape index: {}]
  %s1 = inlined_call_operand.vmem [shape: f32[440,208], index: 1, kind: input, shape index: {}]
  %s2 = inlined_call_operand.vmem [shape: f32[440,1], index: 2, kind: input, shape index: {}]
  %s3 = inlined_call_operand.vmem [shape: f32[440,1], index: 3, kind: input, shape index: {}]
  %s4 = inlined_call_operand.vmem [shape: f32[2,440,196], index: 4, kind: output, shape index: {}]
  %s5 = sld [smem:[#allocation0]]
  $region61: #{tpu_custom_call.1} parent=0
    _
  %s7 = ssub.s32 1, %s5
  %s8 = scalar_select 0, %s7, %s5
  loop: start=0, step=1, limit=6
  $region2: #{tpu_custom_call.1} parent=0 // loop_pre_header
    _
  $region3: #{tpu_custom_call.1} parent=0 // loop_header
    %s10 = sphi 0, %s14
    %p11 = scmp.ge.s32.totalorder %s10, 6
    %s17 = sphi 0, %s29
    %s18 = sphi 0, %s25
    %s19 = sphi 0, %s17
    %s20 = sphi 0, %s18
    %s21 = sphi 0, %s19
    %s22 = sphi 0, %s20
    %s38 = sphi 0, %s40
    %s41 = sphi 0, %s38
    %s42 = sphi 0, %s41
    %s58 = sphi 0, %s42
    %s62 = sphi 0, %s62
    %s64 = sphi 0, %s62
    %s65 = sphi 0, %s64
    %s79 = sphi 0, %s65
    %s83 = sphi 0, %s83
    %s85 = sphi 0, %s83
    %s86 = sphi 0, %s85
    %s100 = sphi 0, %s86
    %s104 = sphi 0, %s104
    %s106 = sphi 0, %s104
    %s107 = sphi 0, %s106
    %s121 = sphi 0, %s107
    %s129 = sphi 0, %s131
    %s132 = sphi 0, %s129
    %s133 = sphi 0, %s132
    %s149 = sphi 0, %s133
  $region4: #{tpu_custom_call.1} parent=0 // loop_header_branch
    %13 = sbr.rel (%p11) target = $region8
  $region5: #{tpu_custom_call.1} parent=0 // loop_body
    %s15 = ssub.s32 %s10, 1
    %s16 = ssub.s32 %s10, 2
    %s23 = sadd.s32 1, %s18
    %p24 = scmp.ge.s32.totalorder %s23, 2
    %s25 = scalar_select %p24, 0, %s23
    %s26 = sadd.s32 1, %s17
    %s27 = scalar_select %p24, %s26, %s17
    %p28 = scmp.ge.s32.totalorder %s27, 2
    %s29 = scalar_select %p28, 0, %s27
    %s30 = ssub.s32 1, %s17
    %s31 = smul.u32 %s30, %s18
    %s32 = sadd.s32 %s31, %s17
    %s33 = ssub.s32 1, %s29
    %s34 = smul.u32 %s33, %s25
    %s35 = sadd.s32 %s34, %s29
    %s36 = ssub.s32 %s32, %s35
    %p37 = scmp.eq.s32.totalorder %s36, 0
    %s39 = sadd.s32 %s38, 1
    %s40 = scalar_select %p37, %s38, %s39
    %p43 = pneg %p37
    %p44 = scmp.eq.s32.totalorder %s10, 3
    %p45 = por %p43, %p44
    %p46 = scmp.ne.s32.totalorder %s38, %s41
    %p47 = scmp.eq.s32.totalorder %s10, 0
    %p48 = por %p46, %p47
    %p49 = scmp.ne.s32.totalorder %s38, %s41
    %p50 = scmp.eq.s32.totalorder %s15, 3
    %p51 = por %p49, %p50
    %p52 = scmp.ne.s32.totalorder %s41, %s42
    %p53 = scmp.eq.s32.totalorder %s15, 0
    %p54 = por %p52, %p53
    %p55 = scmp.ne.s32.totalorder %s41, %s42
    %p56 = scmp.eq.s32.totalorder %s16, 3
    %p57 = por %p55, %p56
    %p59 = scmp.ne.s32.totalorder %s42, %s58
    %p60 = scmp.eq.s32.totalorder %s16, 0
    %p61 = por %p59, %p60
    %s63 = sadd.s32 %s62, 1
    %p66 = scmp.eq.s32.totalorder %s10, 3
    %p67 = scmp.ne.s32.totalorder %s62, %s64
    %p68 = scmp.eq.s32.totalorder %s10, 0
    %p69 = por %p67, %p68
    %p70 = scmp.ne.s32.totalorder %s62, %s64
    %p71 = scmp.eq.s32.totalorder %s15, 3
    %p72 = por %p70, %p71
    %p73 = scmp.ne.s32.totalorder %s64, %s65
    %p74 = scmp.eq.s32.totalorder %s15, 0
    %p75 = por %p73, %p74
    %p76 = scmp.ne.s32.totalorder %s64, %s65
    %p77 = scmp.eq.s32.totalorder %s16, 3
    %p78 = por %p76, %p77
    %p80 = scmp.ne.s32.totalorder %s65, %s79
    %p81 = scmp.eq.s32.totalorder %s16, 0
    %p82 = por %p80, %p81
    %s84 = sadd.s32 %s83, 1
    %p87 = scmp.eq.s32.totalorder %s10, 3
    %p88 = scmp.ne.s32.totalorder %s83, %s85
    %p89 = scmp.eq.s32.totalorder %s10, 0
    %p90 = por %p88, %p89
    %p91 = scmp.ne.s32.totalorder %s83, %s85
    %p92 = scmp.eq.s32.totalorder %s15, 3
    %p93 = por %p91, %p92
    %p94 = scmp.ne.s32.totalorder %s85, %s86
    %p95 = scmp.eq.s32.totalorder %s15, 0
    %p96 = por %p94, %p95
    %p97 = scmp.ne.s32.totalorder %s85, %s86
    %p98 = scmp.eq.s32.totalorder %s16, 3
    %p99 = por %p97, %p98
    %p101 = scmp.ne.s32.totalorder %s86, %s100
    %p102 = scmp.eq.s32.totalorder %s16, 0
    %p103 = por %p101, %p102
    %s105 = sadd.s32 %s104, 1
    %p108 = scmp.eq.s32.totalorder %s10, 3
    %p109 = scmp.ne.s32.totalorder %s104, %s106
    %p110 = scmp.eq.s32.totalorder %s10, 0
    %p111 = por %p109, %p110
    %p112 = scmp.ne.s32.totalorder %s104, %s106
    %p113 = scmp.eq.s32.totalorder %s15, 3
    %p114 = por %p112, %p113
    %p115 = scmp.ne.s32.totalorder %s106, %s107
    %p116 = scmp.eq.s32.totalorder %s15, 0
    %p117 = por %p115, %p116
    %p118 = scmp.ne.s32.totalorder %s106, %s107
    %p119 = scmp.eq.s32.totalorder %s16, 3
    %p120 = por %p118, %p119
    %p122 = scmp.ne.s32.totalorder %s107, %s121
    %p123 = scmp.eq.s32.totalorder %s16, 0
    %p124 = por %p122, %p123
    %s125 = smul.u32 %s17, %s18
    %s126 = smul.u32 %s29, %s25
    %s127 = ssub.s32 %s125, %s126
    %p128 = scmp.eq.s32.totalorder %s127, 0
    %s130 = sadd.s32 %s129, 1
    %s131 = scalar_select %p128, %s129, %s130
    %p134 = pneg %p128
    %p135 = scmp.eq.s32.totalorder %s10, 3
    %p136 = por %p134, %p135
    %p137 = scmp.ne.s32.totalorder %s129, %s132
    %p138 = scmp.eq.s32.totalorder %s10, 0
    %p139 = por %p137, %p138
    %p140 = scmp.ne.s32.totalorder %s129, %s132
    %p141 = scmp.eq.s32.totalorder %s15, 3
    %p142 = por %p140, %p141
    %p143 = scmp.ne.s32.totalorder %s132, %s133
    %p144 = scmp.eq.s32.totalorder %s15, 0
    %p145 = por %p143, %p144
    %p146 = scmp.ne.s32.totalorder %s132, %s133
    %p147 = scmp.eq.s32.totalorder %s16, 3
    %p148 = por %p146, %p147
    %p150 = scmp.ne.s32.totalorder %s133, %s149
    %p151 = scmp.eq.s32.totalorder %s16, 0
    %p152 = por %p150, %p151
    %p153 = scmp.le.s32.totalorder 1, %s10
    %p154 = scmp.lt.s32.totalorder %s10, 5
    %p155 = pnand %p153, %p154
    %p156 = pneg %p155
    // Predicated region
    $region9: #{tpu_custom_call.1} parent=5 // pred_check
      _
    $region10: #{tpu_custom_call.1} parent=5 // pred_check_branch
      %158 = sbr.rel (%p155) target = $region12
    $region11: #{tpu_custom_call.1} parent=5 // pred_region
      %s159 = ssub.s32 %s10, 1
      // Predicated region
      $region13: #{tpu_custom_call.1} parent=11 // pred_check
        %p160 = pneg %p75
      $region14: #{tpu_custom_call.1} parent=11 // pred_check_branch
        %162 = sbr.rel (%p160) target = $region16
      $region15: #{tpu_custom_call.1} parent=11 // pred_region
        _
      $region16: #{tpu_custom_call.1} parent=11 // pred_fallthru
        _
      // Predicated region
      $region17: #{tpu_custom_call.1} parent=11 // pred_check
        %p163 = pneg %p96
      $region18: #{tpu_custom_call.1} parent=11 // pred_check_branch
        %165 = sbr.rel (%p163) target = $region20
      $region19: #{tpu_custom_call.1} parent=11 // pred_region
        _
      $region20: #{tpu_custom_call.1} parent=11 // pred_fallthru
        _
      // Predicated region
      $region21: #{tpu_custom_call.1} parent=11 // pred_check
        %p166 = pneg %p117
      $region22: #{tpu_custom_call.1} parent=11 // pred_check_branch
        %168 = sbr.rel (%p166) target = $region24
      $region23: #{tpu_custom_call.1} parent=11 // pred_region
        _
      $region24: #{tpu_custom_call.1} parent=11 // pred_fallthru
        _
    $region12: #{tpu_custom_call.1} parent=5 // pred_fallthru
      _
    %p169 = scmp.lt.s32.totalorder %s10, 4
    // Predicated region
    $region25: #{tpu_custom_call.1} parent=5 // pred_check
      %p170 = pneg %p169
    $region26: #{tpu_custom_call.1} parent=5 // pred_check_branch
      %172 = sbr.rel (%p170) target = $region28
    $region27: #{tpu_custom_call.1} parent=5 // pred_region
      // Predicated region
      $region29: #{tpu_custom_call.1} parent=27 // pred_check
        %p173 = pneg %p48
      $region30: #{tpu_custom_call.1} parent=27 // pred_check_branch
        %175 = sbr.rel (%p173) target = $region32
      $region31: #{tpu_custom_call.1} parent=27 // pred_region
        %s176 = ssub.s32 1, %s17
        %s177 = smul.u32 %s176, %s18
        %s178 = sadd.s32 %s177, %s17
        %p179 = scmp.lt.s32.totalorder %s178, 1
        %s180 = scalar_select %p179, %s178, 1
        %s181 = smul.addr %s180, 52
        %s182 = smul.addr %s181, 8
        %s183 = scalar_lea.vmem %s0, %s182
        %s184 = ssub.s32 1, %s17
        %s185 = smul.u32 %s184, %s18
        %s186 = sadd.s32 %s185, %s17
      $region32: #{tpu_custom_call.1} parent=27 // pred_fallthru
        _
    $region28: #{tpu_custom_call.1} parent=5 // pred_fallthru
      _
    %p187 = scmp.le.s32.totalorder 1, %s10
    %p188 = scmp.lt.s32.totalorder %s10, 5
    %p189 = pnand %p187, %p188
    %p190 = pneg %p189
    // Predicated region
    $region33: #{tpu_custom_call.1} parent=5 // pred_check
      _
    $region34: #{tpu_custom_call.1} parent=5 // pred_check_branch
      %192 = sbr.rel (%p189) target = $region36
    $region35: #{tpu_custom_call.1} parent=5 // pred_region
      %s193 = ssub.s32 %s10, 1
      %s194 = ssub.s32 1, %s19
      %s195 = smul.u32 %s194, %s20
      %s196 = sadd.s32 %s195, %s19
      %p197 = scmp.lt.s32.totalorder %s196, 1
      %s198 = scalar_select %p197, %s196, 1
      %s199 = smul.addr %s198, 52
      %s200 = smul.addr %s199, 8
      %s201 = scalar_lea.vmem %s0, %s200
      %p202 = pneg %p54
      %p203 = pneg %p51
      %p204 = pneg %p75
      %p205 = pneg %p72
      %p206 = pneg %p96
      %p207 = pneg %p93
      %p208 = pneg %p117
      %p209 = pneg %p114
      %p210 = pneg %p145
      %p211 = pneg %p142
      %s212 = smul.u32 %s19, %s20
      %p213 = scmp.lt.s32.totalorder %s212, 1
      %s214 = scalar_select %p213, %s212, 1
      %s215 = smul.addr %s214, 110
      %s216 = smul.addr %s215, 8
      %s217 = scalar_lea.vmem %s4, %s216
      %s218 = ssub.s32 1, %s19
      %s219 = smul.u32 %s218, %s20
      %s220 = sadd.s32 %s219, %s19
      %p221 = scmp.lt.s32.totalorder %s220, 1
      %s222 = scalar_select %p221, %s220, 1
      %s223 = smul.addr %s222, 52
      %s224 = smul.addr %s223, 8
      %s225 = scalar_lea.vmem %s0, %s224
      %s226 = ssub.s32 1, %s19
      %s227 = smul.u32 %s226, %s20
      %s228 = sadd.s32 %s227, %s19
      %s229 = smul.u32 %s19, %s20
      %p230 = scmp.lt.s32.totalorder %s229, 1
      %s231 = scalar_select %p230, %s229, 1
      %s232 = smul.addr %s231, 110
      %s233 = smul.addr %s232, 8
      %s234 = scalar_lea.vmem %s4, %s233
      %s235 = smul.u32 %s19, %s20
      %p237 = scmp.eq.s32.totalorder %s19, 0
      // Predicated region
      $region37: #{tpu_custom_call.1} parent=35 // pred_check
        %p238 = pneg %p237
      $region38: #{tpu_custom_call.1} parent=35 // pred_check_branch
        %240 = sbr.rel (%p238) target = $region40
      $region39: #{tpu_custom_call.1} parent=35 // pred_region
        %v241 = vld [vmem:[%s225] sm:$0xff]
        %v242 = vld [vmem:[%s225 + $0x8] sm:$0xff]
        %v243 = vld [vmem:[%s225 + $0x10] sm:$0xff]
        %v244 = vld [vmem:[%s225 + $0x18] sm:$0xff]
        %v245 = vld [vmem:[%s225 + $0x20] sm:$0xff]
        %v246 = vld [vmem:[%s225 + $0x28] sm:$0xff]
        %v247 = vld [vmem:[%s225 + $0x30] sm:$0xff]
        %v248 = vld [vmem:[%s225 + $0x38] sm:$0xff]
        %v249 = vld [vmem:[%s225 + $0x40] sm:$0xff]
        %v250 = vld [vmem:[%s225 + $0x48] sm:$0xff]
        %v251 = vld [vmem:[%s225 + $0x50] sm:$0xff]
        %v252 = vld [vmem:[%s225 + $0x58] sm:$0xff]
        %v253 = vld [vmem:[%s225 + $0x60] sm:$0xff]
        %v254 = vld [vmem:[%s225 + $0x68] sm:$0xff]
        %v255 = vld [vmem:[%s225 + $0x70] sm:$0xff]
        %v256 = vld [vmem:[%s225 + $0x78] sm:$0xff]
        %v257 = vld [vmem:[%s225 + $0x80] sm:$0xff]
        %v258 = vld [vmem:[%s225 + $0x88] sm:$0xff]
        %v259 = vld [vmem:[%s225 + $0x90] sm:$0xff]
        %v260 = vld [vmem:[%s225 + $0x98] sm:$0xff]
        %v261 = vld [vmem:[%s225 + $0xa0] sm:$0xff]
        %v262 = vld [vmem:[%s225 + $0xa8] sm:$0xff]
        %v263 = vld [vmem:[%s225 + $0xb0] sm:$0xff]
        %v264 = vld [vmem:[%s225 + $0xb8] sm:$0xff]
        %v265 = vld [vmem:[%s225 + $0xc0] sm:$0xff]
        %v266 = vld [vmem:[%s225 + $0xc8] sm:$0xff]
        %v267 = vld [vmem:[%s225 + $0xd0] sm:$0xff]
        %v268 = vld [vmem:[%s225 + $0xd8] sm:$0xff]
        %v269 = vld [vmem:[%s225 + $0xe0] sm:$0xff]
        %v270 = vld [vmem:[%s225 + $0xe8] sm:$0xff]
        %v271 = vld [vmem:[%s225 + $0xf0] sm:$0xff]
        %v272 = vld [vmem:[%s225 + $0xf8] sm:$0xff]
        %v273 = vld [vmem:[%s225 + $0x100] sm:$0xff]
        %v274 = vld [vmem:[%s225 + $0x108] sm:$0xff]
        %v275 = vld [vmem:[%s225 + $0x110] sm:$0xff]
        %v276 = vld [vmem:[%s225 + $0x118] sm:$0xff]
        %v277 = vld [vmem:[%s225 + $0x120] sm:$0xff]
        %v278 = vld [vmem:[%s225 + $0x128] sm:$0xff]
        %v279 = vld [vmem:[%s225 + $0x130] sm:$0xff]
        %v280 = vld [vmem:[%s225 + $0x138] sm:$0xff]
        %v281 = vld [vmem:[%s225 + $0x140] sm:$0xff]
        %v282 = vld [vmem:[%s225 + $0x148] sm:$0xff]
        %v283 = vld [vmem:[%s225 + $0x150] sm:$0xff]
        %v284 = vld [vmem:[%s225 + $0x158] sm:$0xff]
        %v285 = vld [vmem:[%s225 + $0x160] sm:$0xff]
        %v286 = vld [vmem:[%s225 + $0x168] sm:$0xff]
        %v287 = vld [vmem:[%s225 + $0x170] sm:$0xff]
        %v288 = vld [vmem:[%s225 + $0x178] sm:$0xff]
        %v289 = vld [vmem:[%s225 + $0x180] sm:$0xff]
        %v290 = vld [vmem:[%s225 + $0x188] sm:$0xff]
        %v291 = vld [vmem:[%s225 + $0x190] sm:$0xff]
        %v292 = vld [vmem:[%s225 + $0x198] sm:$0xff]
        %v293 = vpack.c.bf16 %v243, %v241
        %v294 = vpack.c.bf16 %v244, %v242
        %v295 = vpack.c.bf16 %v247, %v245
        %v296 = vpack.c.bf16 %v248, %v246
        %v297 = vpack.c.bf16 %v251, %v249
        %v298 = vpack.c.bf16 %v252, %v250
        %v299 = vpack.c.bf16 %v255, %v253
        %v300 = vpack.c.bf16 %v256, %v254
        %v301 = vpack.c.bf16 %v259, %v257
        %v302 = vpack.c.bf16 %v260, %v258
        %v303 = vpack.c.bf16 %v263, %v261
        %v304 = vpack.c.bf16 %v264, %v262
        %v305 = vpack.c.bf16 %v267, %v265
        %v306 = vpack.c.bf16 %v268, %v266
        %v307 = vpack.c.bf16 %v271, %v269
        %v308 = vpack.c.bf16 %v272, %v270
        %v309 = vpack.c.bf16 %v275, %v273
        %v310 = vpack.c.bf16 %v276, %v274
        %v311 = vpack.c.bf16 %v279, %v277
        %v312 = vpack.c.bf16 %v280, %v278
        %v313 = vpack.c.bf16 %v283, %v281
        %v314 = vpack.c.bf16 %v284, %v282
        %v315 = vpack.c.bf16 %v287, %v285
        %v316 = vpack.c.bf16 %v288, %v286
        %v317 = vpack.c.bf16 %v291, %v289
        %v318 = vpack.c.bf16 %v292, %v290
        %v319 = vld [vmem:[%s1] sm:$0xff]
        %v320 = vld [vmem:[%s1 + $0x8] sm:$0xff]
        %v321 = vld [vmem:[%s1 + $0x10] sm:$0xff]
        %v322 = vld [vmem:[%s1 + $0x18] sm:$0xff]
        %v323 = vld [vmem:[%s1 + $0x20] sm:$0xff]
        %v324 = vld [vmem:[%s1 + $0x28] sm:$0xff]
        %v325 = vld [vmem:[%s1 + $0x30] sm:$0xff]
        %v326 = vld [vmem:[%s1 + $0x38] sm:$0xff]
        %v327 = vld [vmem:[%s1 + $0x40] sm:$0xff]
        %v328 = vld [vmem:[%s1 + $0x48] sm:$0xff]
        %v329 = vld [vmem:[%s1 + $0x50] sm:$0xff]
        %v330 = vld [vmem:[%s1 + $0x58] sm:$0xff]
        %v331 = vld [vmem:[%s1 + $0x60] sm:$0xff]
        %v332 = vld [vmem:[%s1 + $0x68] sm:$0xff]
        %v333 = vld [vmem:[%s1 + $0x70] sm:$0xff]
        %v334 = vld [vmem:[%s1 + $0x78] sm:$0xff]
        %v335 = vld [vmem:[%s1 + $0x80] sm:$0xff]
        %v336 = vld [vmem:[%s1 + $0x88] sm:$0xff]
        %v337 = vld [vmem:[%s1 + $0x90] sm:$0xff]
        %v338 = vld [vmem:[%s1 + $0x98] sm:$0xff]
        %v339 = vld [vmem:[%s1 + $0xa0] sm:$0xff]
        %v340 = vld [vmem:[%s1 + $0xa8] sm:$0xff]
        %v341 = vld [vmem:[%s1 + $0xb0] sm:$0xff]
        %v342 = vld [vmem:[%s1 + $0xb8] sm:$0xff]
        %v343 = vld [vmem:[%s1 + $0xc0] sm:$0xff]
        %v344 = vld [vmem:[%s1 + $0xc8] sm:$0xff]
        %v345 = vld [vmem:[%s1 + $0xd0] sm:$0xff]
        %v346 = vld [vmem:[%s1 + $0xd8] sm:$0xff]
        %v347 = vld [vmem:[%s1 + $0xe0] sm:$0xff]
        %v348 = vld [vmem:[%s1 + $0xe8] sm:$0xff]
        %v349 = vld [vmem:[%s1 + $0xf0] sm:$0xff]
        %v350 = vld [vmem:[%s1 + $0xf8] sm:$0xff]
        %v351 = vld [vmem:[%s1 + $0x100] sm:$0xff]
        %v352 = vld [vmem:[%s1 + $0x108] sm:$0xff]
        %v353 = vld [vmem:[%s1 + $0x110] sm:$0xff]
        %v354 = vld [vmem:[%s1 + $0x118] sm:$0xff]
        %v355 = vld [vmem:[%s1 + $0x120] sm:$0xff]
        %v356 = vld [vmem:[%s1 + $0x128] sm:$0xff]
        %v357 = vld [vmem:[%s1 + $0x130] sm:$0xff]
        %v358 = vld [vmem:[%s1 + $0x138] sm:$0xff]
        %v359 = vld [vmem:[%s1 + $0x140] sm:$0xff]
        %v360 = vld [vmem:[%s1 + $0x148] sm:$0xff]
        %v361 = vld [vmem:[%s1 + $0x150] sm:$0xff]
        %v362 = vld [vmem:[%s1 + $0x158] sm:$0xff]
        %v363 = vld [vmem:[%s1 + $0x160] sm:$0xff]
        %v364 = vld [vmem:[%s1 + $0x168] sm:$0xff]
        %v365 = vld [vmem:[%s1 + $0x170] sm:$0xff]
        %v366 = vld [vmem:[%s1 + $0x178] sm:$0xff]
        %v367 = vld [vmem:[%s1 + $0x180] sm:$0xff]
        %v368 = vld [vmem:[%s1 + $0x188] sm:$0xff]
        %v369 = vld [vmem:[%s1 + $0x190] sm:$0xff]
        %v370 = vld [vmem:[%s1 + $0x198] sm:$0xff]
        %v371 = vld [vmem:[%s1 + $0x1a0] sm:$0xff]
        %v372 = vld [vmem:[%s1 + $0x1a8] sm:$0xff]
        %v373 = vld [vmem:[%s1 + $0x1b0] sm:$0xff]
        %v374 = vld [vmem:[%s1 + $0x1b8] sm:$0xff]
        %v375 = vld [vmem:[%s1 + $0x1c0] sm:$0xff]
        %v376 = vld [vmem:[%s1 + $0x1c8] sm:$0xff]
        %v377 = vld [vmem:[%s1 + $0x1d0] sm:$0xff]
        %v378 = vld [vmem:[%s1 + $0x1d8] sm:$0xff]
        %v379 = vld [vmem:[%s1 + $0x1e0] sm:$0xff]
        %v380 = vld [vmem:[%s1 + $0x1e8] sm:$0xff]
        %v381 = vld [vmem:[%s1 + $0x1f0] sm:$0xff]
        %v382 = vld [vmem:[%s1 + $0x1f8] sm:$0xff]
        %v383 = vld [vmem:[%s1 + $0x200] sm:$0xff]
        %v384 = vld [vmem:[%s1 + $0x208] sm:$0xff]
        %v385 = vld [vmem:[%s1 + $0x210] sm:$0xff]
        %v386 = vld [vmem:[%s1 + $0x218] sm:$0xff]
        %v387 = vld [vmem:[%s1 + $0x220] sm:$0xff]
        %v388 = vld [vmem:[%s1 + $0x228] sm:$0xff]
        %v389 = vld [vmem:[%s1 + $0x230] sm:$0xff]
        %v390 = vld [vmem:[%s1 + $0x238] sm:$0xff]
        %v391 = vld [vmem:[%s1 + $0x240] sm:$0xff]
        %v392 = vld [vmem:[%s1 + $0x248] sm:$0xff]
        %v393 = vld [vmem:[%s1 + $0x250] sm:$0xff]
        %v394 = vld [vmem:[%s1 + $0x258] sm:$0xff]
        %v395 = vld [vmem:[%s1 + $0x260] sm:$0xff]
        %v396 = vld [vmem:[%s1 + $0x268] sm:$0xff]
        %v397 = vld [vmem:[%s1 + $0x270] sm:$0xff]
        %v398 = vld [vmem:[%s1 + $0x278] sm:$0xff]
        %v399 = vld [vmem:[%s1 + $0x280] sm:$0xff]
        %v400 = vld [vmem:[%s1 + $0x288] sm:$0xff]
        %v401 = vld [vmem:[%s1 + $0x290] sm:$0xff]
        %v402 = vld [vmem:[%s1 + $0x298] sm:$0xff]
        %v403 = vld [vmem:[%s1 + $0x2a0] sm:$0xff]
        %v404 = vld [vmem:[%s1 + $0x2a8] sm:$0xff]
        %v405 = vld [vmem:[%s1 + $0x2b0] sm:$0xff]
        %v406 = vld [vmem:[%s1 + $0x2b8] sm:$0xff]
        %v407 = vld [vmem:[%s1 + $0x2c0] sm:$0xff]
        %v408 = vld [vmem:[%s1 + $0x2c8] sm:$0xff]
        %v409 = vld [vmem:[%s1 + $0x2d0] sm:$0xff]
        %v410 = vld [vmem:[%s1 + $0x2d8] sm:$0xff]
        %v411 = vld [vmem:[%s1 + $0x2e0] sm:$0xff]
        %v412 = vld [vmem:[%s1 + $0x2e8] sm:$0xff]
        %v413 = vld [vmem:[%s1 + $0x2f0] sm:$0xff]
        %v414 = vld [vmem:[%s1 + $0x2f8] sm:$0xff]
        %v415 = vld [vmem:[%s1 + $0x300] sm:$0xff]
        %v416 = vld [vmem:[%s1 + $0x308] sm:$0xff]
        %v417 = vld [vmem:[%s1 + $0x310] sm:$0xff]
        %v418 = vld [vmem:[%s1 + $0x318] sm:$0xff]
        %v419 = vld [vmem:[%s1 + $0x320] sm:$0xff]
        %v420 = vld [vmem:[%s1 + $0x328] sm:$0xff]
        %v421 = vld [vmem:[%s1 + $0x330] sm:$0xff]
        %v422 = vld [vmem:[%s1 + $0x338] sm:$0xff]
        %v423 = vld [vmem:[%s1 + $0x340] sm:$0xff]
        %v424 = vld [vmem:[%s1 + $0x348] sm:$0xff]
        %v425 = vld [vmem:[%s1 + $0x350] sm:$0xff]
        %v426 = vld [vmem:[%s1 + $0x358] sm:$0xff]
        %v427 = vld [vmem:[%s1 + $0x360] sm:$0xff]
        %v428 = vld [vmem:[%s1 + $0x368] sm:$0xff]
        %v429 = vpack.c.bf16 %v321, %v319
        %v430 = vpack.c.bf16 %v322, %v320
        %v431 = vpack.c.bf16 %v325, %v323
        %v432 = vpack.c.bf16 %v326, %v324
        %v433 = vpack.c.bf16 %v329, %v327
        %v434 = vpack.c.bf16 %v330, %v328
        %v435 = vpack.c.bf16 %v333, %v331
        %v436 = vpack.c.bf16 %v334, %v332
        %v437 = vpack.c.bf16 %v337, %v335
        %v438 = vpack.c.bf16 %v338, %v336
        %v439 = vpack.c.bf16 %v341, %v339
        %v440 = vpack.c.bf16 %v342, %v340
        %v441 = vpack.c.bf16 %v345, %v343
        %v442 = vpack.c.bf16 %v346, %v344
        %v443 = vpack.c.bf16 %v349, %v347
        %v444 = vpack.c.bf16 %v350, %v348
        %v445 = vpack.c.bf16 %v353, %v351
        %v446 = vpack.c.bf16 %v354, %v352
        %v447 = vpack.c.bf16 %v357, %v355
        %v448 = vpack.c.bf16 %v358, %v356
        %v449 = vpack.c.bf16 %v361, %v359
        %v450 = vpack.c.bf16 %v362, %v360
        %v451 = vpack.c.bf16 %v365, %v363
        %v452 = vpack.c.bf16 %v366, %v364
        %v453 = vpack.c.bf16 %v369, %v367
        %v454 = vpack.c.bf16 %v370, %v368
        %v455 = vpack.c.bf16 %v373, %v371
        %v456 = vpack.c.bf16 %v374, %v372
        %v457 = vpack.c.bf16 %v377, %v375
        %v458 = vpack.c.bf16 %v378, %v376
        %v459 = vpack.c.bf16 %v381, %v379
        %v460 = vpack.c.bf16 %v382, %v380
        %v461 = vpack.c.bf16 %v385, %v383
        %v462 = vpack.c.bf16 %v386, %v384
        %v463 = vpack.c.bf16 %v389, %v387
        %v464 = vpack.c.bf16 %v390, %v388
        %v465 = vpack.c.bf16 %v393, %v391
        %v466 = vpack.c.bf16 %v394, %v392
        %v467 = vpack.c.bf16 %v397, %v395
        %v468 = vpack.c.bf16 %v398, %v396
        %v469 = vpack.c.bf16 %v401, %v399
        %v470 = vpack.c.bf16 %v402, %v400
        %v471 = vpack.c.bf16 %v405, %v403
        %v472 = vpack.c.bf16 %v406, %v404
        %v473 = vpack.c.bf16 %v409, %v407
        %v474 = vpack.c.bf16 %v410, %v408
        %v475 = vpack.c.bf16 %v413, %v411
        %v476 = vpack.c.bf16 %v414, %v412
        %v477 = vpack.c.bf16 %v417, %v415
        %v478 = vpack.c.bf16 %v418, %v416
        %v479 = vpack.c.bf16 %v421, %v419
        %v480 = vpack.c.bf16 %v422, %v420
        %v481 = vpack.c.bf16 %v425, %v423
        %v482 = vpack.c.bf16 %v426, %v424
        %v483 = vpack.c.bf16 %v427, %v427
        %v484 = vpack.c.bf16 %v428, %v428
        %vm485 = vcmask 654336
        %v487 = vsel %vm485, %v430, 0
        %v490 = vsel %vm485, %v432, 0
        %v493 = vsel %vm485, %v434, 0
        %v496 = vsel %vm485, %v436, 0
        %v499 = vsel %vm485, %v438, 0
        %v502 = vsel %vm485, %v440, 0
        %v505 = vsel %vm485, %v442, 0
        %v508 = vsel %vm485, %v444, 0
        %v511 = vsel %vm485, %v446, 0
        %v514 = vsel %vm485, %v448, 0
        %v517 = vsel %vm485, %v450, 0
        %v520 = vsel %vm485, %v452, 0
        %v523 = vsel %vm485, %v454, 0
        %v526 = vsel %vm485, %v456, 0
        %v529 = vsel %vm485, %v458, 0
        %v532 = vsel %vm485, %v460, 0
        %v535 = vsel %vm485, %v462, 0
        %v538 = vsel %vm485, %v464, 0
        %v541 = vsel %vm485, %v466, 0
        %v544 = vsel %vm485, %v468, 0
        %v547 = vsel %vm485, %v470, 0
        %v550 = vsel %vm485, %v472, 0
        %v553 = vsel %vm485, %v474, 0
        %v556 = vsel %vm485, %v476, 0
        %v559 = vsel %vm485, %v478, 0
        %v562 = vsel %vm485, %v480, 0
        %v565 = vsel %vm485, %v482, 0
        %v568 = vsel %vm485, %v484, 0
        %570 = vmatprep.subr.bf16.mxu0 %v308
        %571 = vmatpush1.bf16.msra.mxu0 %v307
        %572 = vmatprep.subr.bf16.mxu0 %v306
        %573 = vmatpush1.bf16.msra.mxu0 %v305
        %574 = vmatprep.subr.bf16.mxu0 %v304
        %575 = vmatpush1.bf16.msra.mxu0 %v303
        %576 = vmatprep.subr.bf16.mxu0 %v302
        %577 = vmatpush1.bf16.msra.mxu0 %v301
        %578 = vmatprep.subr.bf16.mxu0 %v300
        %579 = vmatpush1.bf16.msra.mxu0 %v299
        %580 = vmatprep.subr.bf16.mxu0 %v298
        %581 = vmatpush1.bf16.msra.mxu0 %v297
        %582 = vmatprep.subr.bf16.mxu0 %v296
        %583 = vmatpush1.bf16.msra.mxu0 %v295
        %584 = vmatprep.subr.bf16.mxu0 %v294
        %585 = vmatpush1.bf16.msra.mxu0 %v293
        %586 = vmatprep.subr.bf16.mxu0 0
        %587 = vmatpush2.bf16.msra.mxu0 0
        %588 = vmatprep.subr.bf16.mxu0 0
        %589 = vmatpush2.bf16.msra.mxu0 0
        %590 = vmatprep.subr.bf16.mxu0 0
        %591 = vmatpush2.bf16.msra.mxu0 0
        %592 = vmatprep.subr.bf16.mxu0 %v318
        %593 = vmatpush2.bf16.msra.mxu0 %v317
        %594 = vmatprep.subr.bf16.mxu0 %v316
        %595 = vmatpush2.bf16.msra.mxu0 %v315
        %596 = vmatprep.subr.bf16.mxu0 %v314
        %597 = vmatpush2.bf16.msra.mxu0 %v313
        %598 = vmatprep.subr.bf16.mxu0 %v312
        %599 = vmatpush2.bf16.msra.mxu0 %v311
        %600 = vmatprep.subr.bf16.mxu0 %v310
        %601 = vmatpush2.bf16.msra.mxu0 %v309
        %602 = vmatprep.mubr.bf16.mxu0 %v487
        %603 = vmatmul.mubr.bf16.gmra.mxu0 %v429
        %v604 = vpop.f32.mrf.mxu0
        %v605 = vadd.f32 0.0, %v604
        %v606 = vpop.f32.mrf.mxu0
        %v607 = vadd.f32 0.0, %v606
        %v608 = vpop.f32.mrf.mxu0
        %v609 = vadd.f32 0.0, %v608
        %v610 = vpop.f32.mrf.mxu0
        %v611 = vadd.f32 0.0, %v610
        %612 = vmatprep.mubr.bf16.mxu0 %v490
        %613 = vmatmul.mubr.bf16.gmra.mxu0 %v431
        %v614 = vpop.f32.mrf.mxu0
        %v615 = vadd.f32 0.0, %v614
        %v616 = vpop.f32.mrf.mxu0
        %v617 = vadd.f32 0.0, %v616
        %v618 = vpop.f32.mrf.mxu0
        %v619 = vadd.f32 0.0, %v618
        %v620 = vpop.f32.mrf.mxu0
        %v621 = vadd.f32 0.0, %v620
        %622 = vmatprep.mubr.bf16.mxu0 %v493
        %623 = vmatmul.mubr.bf16.gmra.mxu0 %v433
        %v624 = vpop.f32.mrf.mxu0
        %v625 = vadd.f32 0.0, %v624
        %v626 = vpop.f32.mrf.mxu0
        %v627 = vadd.f32 0.0, %v626
        %v628 = vpop.f32.mrf.mxu0
        %v629 = vadd.f32 0.0, %v628
        %v630 = vpop.f32.mrf.mxu0
        %v631 = vadd.f32 0.0, %v630
        %632 = vmatprep.mubr.bf16.mxu0 %v496
        %633 = vmatmul.mubr.bf16.gmra.mxu0 %v435
        %v634 = vpop.f32.mrf.mxu0
        %v635 = vadd.f32 0.0, %v634
        %v636 = vpop.f32.mrf.mxu0
        %v637 = vadd.f32 0.0, %v636
        %v638 = vpop.f32.mrf.mxu0
        %v639 = vadd.f32 0.0, %v638
        %v640 = vpop.f32.mrf.mxu0
        %v641 = vadd.f32 0.0, %v640
        %642 = vmatprep.mubr.bf16.mxu0 %v499
        %643 = vmatmul.mubr.bf16.gmra.mxu0 %v437
        %v644 = vpop.f32.mrf.mxu0
        %v645 = vadd.f32 0.0, %v644
        %v646 = vpop.f32.mrf.mxu0
        %v647 = vadd.f32 0.0, %v646
        %v648 = vpop.f32.mrf.mxu0
        %v649 = vadd.f32 0.0, %v648
        %v650 = vpop.f32.mrf.mxu0
        %v651 = vadd.f32 0.0, %v650
        %652 = vmatprep.mubr.bf16.mxu0 %v502
        %653 = vmatmul.mubr.bf16.gmra.mxu0 %v439
        %v654 = vpop.f32.mrf.mxu0
        %v655 = vadd.f32 0.0, %v654
        %v656 = vpop.f32.mrf.mxu0
        %v657 = vadd.f32 0.0, %v656
        %v658 = vpop.f32.mrf.mxu0
        %v659 = vadd.f32 0.0, %v658
        %v660 = vpop.f32.mrf.mxu0
        %v661 = vadd.f32 0.0, %v660
        %662 = vmatprep.mubr.bf16.mxu0 %v505
        %663 = vmatmul.mubr.bf16.gmra.mxu0 %v441
        %v664 = vpop.f32.mrf.mxu0
        %v665 = vadd.f32 0.0, %v664
        %v666 = vpop.f32.mrf.mxu0
        %v667 = vadd.f32 0.0, %v666
        %v668 = vpop.f32.mrf.mxu0
        %v669 = vadd.f32 0.0, %v668
        %v670 = vpop.f32.mrf.mxu0
        %v671 = vadd.f32 0.0, %v670
        %672 = vmatprep.mubr.bf16.mxu0 %v508
        %673 = vmatmul.mubr.bf16.gmra.mxu0 %v443
        %v674 = vpop.f32.mrf.mxu0
        %v675 = vadd.f32 0.0, %v674
        %v676 = vpop.f32.mrf.mxu0
        %v677 = vadd.f32 0.0, %v676
        %v678 = vpop.f32.mrf.mxu0
        %v679 = vadd.f32 0.0, %v678
        %v680 = vpop.f32.mrf.mxu0
        %v681 = vadd.f32 0.0, %v680
        %682 = vmatprep.mubr.bf16.mxu0 %v511
        %683 = vmatmul.mubr.bf16.gmra.mxu0 %v445
        %v684 = vpop.f32.mrf.mxu0
        %v685 = vadd.f32 0.0, %v684
        %v686 = vpop.f32.mrf.mxu0
        %v687 = vadd.f32 0.0, %v686
        %v688 = vpop.f32.mrf.mxu0
        %v689 = vadd.f32 0.0, %v688
        %v690 = vpop.f32.mrf.mxu0
        %v691 = vadd.f32 0.0, %v690
        %692 = vmatprep.mubr.bf16.mxu0 %v514
        %693 = vmatmul.mubr.bf16.gmra.mxu0 %v447
        %v694 = vpop.f32.mrf.mxu0
        %v695 = vadd.f32 0.0, %v694
        %v696 = vpop.f32.mrf.mxu0
        %v697 = vadd.f32 0.0, %v696
        %v698 = vpop.f32.mrf.mxu0
        %v699 = vadd.f32 0.0, %v698
        %v700 = vpop.f32.mrf.mxu0
        %v701 = vadd.f32 0.0, %v700
        %702 = vmatprep.mubr.bf16.mxu0 %v517
        %703 = vmatmul.mubr.bf16.gmra.mxu0 %v449
        %v704 = vpop.f32.mrf.mxu0
        %v705 = vadd.f32 0.0, %v704
        %v706 = vpop.f32.mrf.mxu0
        %v707 = vadd.f32 0.0, %v706
        %v708 = vpop.f32.mrf.mxu0
        %v709 = vadd.f32 0.0, %v708
        %v710 = vpop.f32.mrf.mxu0
        %v711 = vadd.f32 0.0, %v710
        %712 = vmatprep.mubr.bf16.mxu0 %v520
        %713 = vmatmul.mubr.bf16.gmra.mxu0 %v451
        %v714 = vpop.f32.mrf.mxu0
        %v715 = vadd.f32 0.0, %v714
        %v716 = vpop.f32.mrf.mxu0
        %v717 = vadd.f32 0.0, %v716
        %v718 = vpop.f32.mrf.mxu0
        %v719 = vadd.f32 0.0, %v718
        %v720 = vpop.f32.mrf.mxu0
        %v721 = vadd.f32 0.0, %v720
        %722 = vmatprep.mubr.bf16.mxu0 %v523
        %723 = vmatmul.mubr.bf16.gmra.mxu0 %v453
        %v724 = vpop.f32.mrf.mxu0
        %v725 = vadd.f32 0.0, %v724
        %v726 = vpop.f32.mrf.mxu0
        %v727 = vadd.f32 0.0, %v726
        %v728 = vpop.f32.mrf.mxu0
        %v729 = vadd.f32 0.0, %v728
        %v730 = vpop.f32.mrf.mxu0
        %v731 = vadd.f32 0.0, %v730
        %732 = vmatprep.mubr.bf16.mxu0 %v526
        %733 = vmatmul.mubr.bf16.gmra.mxu0 %v455
        %v734 = vpop.f32.mrf.mxu0
        %v735 = vadd.f32 0.0, %v734
        %v736 = vpop.f32.mrf.mxu0
        %v737 = vadd.f32 0.0, %v736
        %v738 = vpop.f32.mrf.mxu0
        %v739 = vadd.f32 0.0, %v738
        %v740 = vpop.f32.mrf.mxu0
        %v741 = vadd.f32 0.0, %v740
        %742 = vmatprep.mubr.bf16.mxu0 %v529
        %743 = vmatmul.mubr.bf16.gmra.mxu0 %v457
        %v744 = vpop.f32.mrf.mxu0
        %v745 = vadd.f32 0.0, %v744
        %v746 = vpop.f32.mrf.mxu0
        %v747 = vadd.f32 0.0, %v746
        %v748 = vpop.f32.mrf.mxu0
        %v749 = vadd.f32 0.0, %v748
        %v750 = vpop.f32.mrf.mxu0
        %v751 = vadd.f32 0.0, %v750
        %752 = vmatprep.mubr.bf16.mxu0 %v532
        %753 = vmatmul.mubr.bf16.gmra.mxu0 %v459
        %v754 = vpop.f32.mrf.mxu0
        %v755 = vadd.f32 0.0, %v754
        %v756 = vpop.f32.mrf.mxu0
        %v757 = vadd.f32 0.0, %v756
        %v758 = vpop.f32.mrf.mxu0
        %v759 = vadd.f32 0.0, %v758
        %v760 = vpop.f32.mrf.mxu0
        %v761 = vadd.f32 0.0, %v760
        %762 = vmatprep.mubr.bf16.mxu0 %v535
        %763 = vmatmul.mubr.bf16.gmra.mxu0 %v461
        %v764 = vpop.f32.mrf.mxu0
        %v765 = vadd.f32 0.0, %v764
        %v766 = vpop.f32.mrf.mxu0
        %v767 = vadd.f32 0.0, %v766
        %v768 = vpop.f32.mrf.mxu0
        %v769 = vadd.f32 0.0, %v768
        %v770 = vpop.f32.mrf.mxu0
        %v771 = vadd.f32 0.0, %v770
        %772 = vmatprep.mubr.bf16.mxu0 %v538
        %773 = vmatmul.mubr.bf16.gmra.mxu0 %v463
        %v774 = vpop.f32.mrf.mxu0
        %v775 = vadd.f32 0.0, %v774
        %v776 = vpop.f32.mrf.mxu0
        %v777 = vadd.f32 0.0, %v776
        %v778 = vpop.f32.mrf.mxu0
        %v779 = vadd.f32 0.0, %v778
        %v780 = vpop.f32.mrf.mxu0
        %v781 = vadd.f32 0.0, %v780
        %782 = vmatprep.mubr.bf16.mxu0 %v541
        %783 = vmatmul.mubr.bf16.gmra.mxu0 %v465
        %v784 = vpop.f32.mrf.mxu0
        %v785 = vadd.f32 0.0, %v784
        %v786 = vpop.f32.mrf.mxu0
        %v787 = vadd.f32 0.0, %v786
        %v788 = vpop.f32.mrf.mxu0
        %v789 = vadd.f32 0.0, %v788
        %v790 = vpop.f32.mrf.mxu0
        %v791 = vadd.f32 0.0, %v790
        %792 = vmatprep.mubr.bf16.mxu0 %v544
        %793 = vmatmul.mubr.bf16.gmra.mxu0 %v467
        %v794 = vpop.f32.mrf.mxu0
        %v795 = vadd.f32 0.0, %v794
        %v796 = vpop.f32.mrf.mxu0
        %v797 = vadd.f32 0.0, %v796
        %v798 = vpop.f32.mrf.mxu0
        %v799 = vadd.f32 0.0, %v798
        %v800 = vpop.f32.mrf.mxu0
        %v801 = vadd.f32 0.0, %v800
        %802 = vmatprep.mubr.bf16.mxu0 %v547
        %803 = vmatmul.mubr.bf16.gmra.mxu0 %v469
        %v804 = vpop.f32.mrf.mxu0
        %v805 = vadd.f32 0.0, %v804
        %v806 = vpop.f32.mrf.mxu0
        %v807 = vadd.f32 0.0, %v806
        %v808 = vpop.f32.mrf.mxu0
        %v809 = vadd.f32 0.0, %v808
        %v810 = vpop.f32.mrf.mxu0
        %v811 = vadd.f32 0.0, %v810
        %812 = vmatprep.mubr.bf16.mxu0 %v550
        %813 = vmatmul.mubr.bf16.gmra.mxu0 %v471
        %v814 = vpop.f32.mrf.mxu0
        %v815 = vadd.f32 0.0, %v814
        %v816 = vpop.f32.mrf.mxu0
        %v817 = vadd.f32 0.0, %v816
        %v818 = vpop.f32.mrf.mxu0
        %v819 = vadd.f32 0.0, %v818
        %v820 = vpop.f32.mrf.mxu0
        %v821 = vadd.f32 0.0, %v820
        %822 = vmatprep.mubr.bf16.mxu0 %v553
        %823 = vmatmul.mubr.bf16.gmra.mxu0 %v473
        %v824 = vpop.f32.mrf.mxu0
        %v825 = vadd.f32 0.0, %v824
        %v826 = vpop.f32.mrf.mxu0
        %v827 = vadd.f32 0.0, %v826
        %v828 = vpop.f32.mrf.mxu0
        %v829 = vadd.f32 0.0, %v828
        %v830 = vpop.f32.mrf.mxu0
        %v831 = vadd.f32 0.0, %v830
        %832 = vmatprep.mubr.bf16.mxu0 %v556
        %833 = vmatmul.mubr.bf16.gmra.mxu0 %v475
        %v834 = vpop.f32.mrf.mxu0
        %v835 = vadd.f32 0.0, %v834
        %v836 = vpop.f32.mrf.mxu0
        %v837 = vadd.f32 0.0, %v836
        %v838 = vpop.f32.mrf.mxu0
        %v839 = vadd.f32 0.0, %v838
        %v840 = vpop.f32.mrf.mxu0
        %v841 = vadd.f32 0.0, %v840
        %842 = vmatprep.mubr.bf16.mxu0 %v559
        %843 = vmatmul.mubr.bf16.gmra.mxu0 %v477
        %v844 = vpop.f32.mrf.mxu0
        %v845 = vadd.f32 0.0, %v844
        %v846 = vpop.f32.mrf.mxu0
        %v847 = vadd.f32 0.0, %v846
        %v848 = vpop.f32.mrf.mxu0
        %v849 = vadd.f32 0.0, %v848
        %v850 = vpop.f32.mrf.mxu0
        %v851 = vadd.f32 0.0, %v850
        %852 = vmatprep.mubr.bf16.mxu0 %v562
        %853 = vmatmul.mubr.bf16.gmra.mxu0 %v479
        %v854 = vpop.f32.mrf.mxu0
        %v855 = vadd.f32 0.0, %v854
        %v856 = vpop.f32.mrf.mxu0
        %v857 = vadd.f32 0.0, %v856
        %v858 = vpop.f32.mrf.mxu0
        %v859 = vadd.f32 0.0, %v858
        %v860 = vpop.f32.mrf.mxu0
        %v861 = vadd.f32 0.0, %v860
        %862 = vmatprep.mubr.bf16.mxu0 %v565
        %863 = vmatmul.mubr.bf16.gmra.mxu0 %v481
        %v864 = vpop.f32.mrf.mxu0
        %v865 = vadd.f32 0.0, %v864
        %v866 = vpop.f32.mrf.mxu0
        %v867 = vadd.f32 0.0, %v866
        %v868 = vpop.f32.mrf.mxu0
        %v869 = vadd.f32 0.0, %v868
        %v870 = vpop.f32.mrf.mxu0
        %v871 = vadd.f32 0.0, %v870
        %872 = vmatprep.mubr.bf16.mxu0 %v568
        %873 = vmatmul.mubr.bf16.gmra.mxu0 %v483
        %v874 = vpop.f32.mrf.mxu0
        %v875 = vadd.f32 0.0, %v874
        %v876 = vpop.f32.mrf.mxu0
        %v877 = vadd.f32 0.0, %v876
        %v878 = vpop.f32.mrf.mxu0
        %v879 = vpop.f32.mrf.mxu0
        %880 = vdwg.mxu0
        %s881 = smul.u32 %s20, 110
        %s882 = smul.addr %s881, 8
        %s883 = scalar_lea.vmem [#allocation2], %s882
        %884 = vst [vmem:[%s883] sm:$0xff] %v605
        %vm885 = vcmask 556032
        %886 = vst.msk [vmem:[%s883 + $0x8] sm:$0xff] %vm885, %v607
        %887 = vst [vmem:[%s883 + $0x10] sm:$0xff] %v609
        %888 = vst.msk [vmem:[%s883 + $0x18] sm:$0xff] %vm885, %v611
        %889 = vst [vmem:[%s883 + $0x20] sm:$0xff] %v615
        %890 = vst.msk [vmem:[%s883 + $0x28] sm:$0xff] %vm885, %v617
        %891 = vst [vmem:[%s883 + $0x30] sm:$0xff] %v619
        %892 = vst.msk [vmem:[%s883 + $0x38] sm:$0xff] %vm885, %v621
        %893 = vst [vmem:[%s883 + $0x40] sm:$0xff] %v625
        %894 = vst.msk [vmem:[%s883 + $0x48] sm:$0xff] %vm885, %v627
        %895 = vst [vmem:[%s883 + $0x50] sm:$0xff] %v629
        %896 = vst.msk [vmem:[%s883 + $0x58] sm:$0xff] %vm885, %v631
        %897 = vst [vmem:[%s883 + $0x60] sm:$0xff] %v635
        %898 = vst.msk [vmem:[%s883 + $0x68] sm:$0xff] %vm885, %v637
        %899 = vst [vmem:[%s883 + $0x70] sm:$0xff] %v639
        %900 = vst.msk [vmem:[%s883 + $0x78] sm:$0xff] %vm885, %v641
        %901 = vst [vmem:[%s883 + $0x80] sm:$0xff] %v645
        %902 = vst.msk [vmem:[%s883 + $0x88] sm:$0xff] %vm885, %v647
        %903 = vst [vmem:[%s883 + $0x90] sm:$0xff] %v649
        %904 = vst.msk [vmem:[%s883 + $0x98] sm:$0xff] %vm885, %v651
        %905 = vst [vmem:[%s883 + $0xa0] sm:$0xff] %v655
        %906 = vst.msk [vmem:[%s883 + $0xa8] sm:$0xff] %vm885, %v657
        %907 = vst [vmem:[%s883 + $0xb0] sm:$0xff] %v659
        %908 = vst.msk [vmem:[%s883 + $0xb8] sm:$0xff] %vm885, %v661
        %909 = vst [vmem:[%s883 + $0xc0] sm:$0xff] %v665
        %910 = vst.msk [vmem:[%s883 + $0xc8] sm:$0xff] %vm885, %v667
        %911 = vst [vmem:[%s883 + $0xd0] sm:$0xff] %v669
        %912 = vst.msk [vmem:[%s883 + $0xd8] sm:$0xff] %vm885, %v671
        %913 = vst [vmem:[%s883 + $0xe0] sm:$0xff] %v675
        %914 = vst.msk [vmem:[%s883 + $0xe8] sm:$0xff] %vm885, %v677
        %915 = vst [vmem:[%s883 + $0xf0] sm:$0xff] %v679
        %916 = vst.msk [vmem:[%s883 + $0xf8] sm:$0xff] %vm885, %v681
        %917 = vst [vmem:[%s883 + $0x100] sm:$0xff] %v685
        %918 = vst.msk [vmem:[%s883 + $0x108] sm:$0xff] %vm885, %v687
        %919 = vst [vmem:[%s883 + $0x110] sm:$0xff] %v689
        %920 = vst.msk [vmem:[%s883 + $0x118] sm:$0xff] %vm885, %v691
        %921 = vst [vmem:[%s883 + $0x120] sm:$0xff] %v695
        %922 = vst.msk [vmem:[%s883 + $0x128] sm:$0xff] %vm885, %v697
        %923 = vst [vmem:[%s883 + $0x130] sm:$0xff] %v699
        %924 = vst.msk [vmem:[%s883 + $0x138] sm:$0xff] %vm885, %v701
        %925 = vst [vmem:[%s883 + $0x140] sm:$0xff] %v705
        %926 = vst.msk [vmem:[%s883 + $0x148] sm:$0xff] %vm885, %v707
        %927 = vst [vmem:[%s883 + $0x150] sm:$0xff] %v709
        %928 = vst.msk [vmem:[%s883 + $0x158] sm:$0xff] %vm885, %v711
        %929 = vst [vmem:[%s883 + $0x160] sm:$0xff] %v715
        %930 = vst.msk [vmem:[%s883 + $0x168] sm:$0xff] %vm885, %v717
        %931 = vst [vmem:[%s883 + $0x170] sm:$0xff] %v719
        %932 = vst.msk [vmem:[%s883 + $0x178] sm:$0xff] %vm885, %v721
        %933 = vst [vmem:[%s883 + $0x180] sm:$0xff] %v725
        %934 = vst.msk [vmem:[%s883 + $0x188] sm:$0xff] %vm885, %v727
        %935 = vst [vmem:[%s883 + $0x190] sm:$0xff] %v729
        %936 = vst.msk [vmem:[%s883 + $0x198] sm:$0xff] %vm885, %v731
        %937 = vst [vmem:[%s883 + $0x1a0] sm:$0xff] %v735
        %938 = vst.msk [vmem:[%s883 + $0x1a8] sm:$0xff] %vm885, %v737
        %939 = vst [vmem:[%s883 + $0x1b0] sm:$0xff] %v739
        %940 = vst.msk [vmem:[%s883 + $0x1b8] sm:$0xff] %vm885, %v741
        %941 = vst [vmem:[%s883 + $0x1c0] sm:$0xff] %v745
        %942 = vst.msk [vmem:[%s883 + $0x1c8] sm:$0xff] %vm885, %v747
        %943 = vst [vmem:[%s883 + $0x1d0] sm:$0xff] %v749
        %944 = vst.msk [vmem:[%s883 + $0x1d8] sm:$0xff] %vm885, %v751
        %945 = vst [vmem:[%s883 + $0x1e0] sm:$0xff] %v755
        %946 = vst.msk [vmem:[%s883 + $0x1e8] sm:$0xff] %vm885, %v757
        %947 = vst [vmem:[%s883 + $0x1f0] sm:$0xff] %v759
        %948 = vst.msk [vmem:[%s883 + $0x1f8] sm:$0xff] %vm885, %v761
        %949 = vst [vmem:[%s883 + $0x200] sm:$0xff] %v765
        %950 = vst.msk [vmem:[%s883 + $0x208] sm:$0xff] %vm885, %v767
        %951 = vst [vmem:[%s883 + $0x210] sm:$0xff] %v769
        %952 = vst.msk [vmem:[%s883 + $0x218] sm:$0xff] %vm885, %v771
        %953 = vst [vmem:[%s883 + $0x220] sm:$0xff] %v775
        %954 = vst.msk [vmem:[%s883 + $0x228] sm:$0xff] %vm885, %v777
        %955 = vst [vmem:[%s883 + $0x230] sm:$0xff] %v779
        %956 = vst.msk [vmem:[%s883 + $0x238] sm:$0xff] %vm885, %v781
        %957 = vst [vmem:[%s883 + $0x240] sm:$0xff] %v785
        %958 = vst.msk [vmem:[%s883 + $0x248] sm:$0xff] %vm885, %v787
        %959 = vst [vmem:[%s883 + $0x250] sm:$0xff] %v789
        %960 = vst.msk [vmem:[%s883 + $0x258] sm:$0xff] %vm885, %v791
        %961 = vst [vmem:[%s883 + $0x260] sm:$0xff] %v795
        %962 = vst.msk [vmem:[%s883 + $0x268] sm:$0xff] %vm885, %v797
        %963 = vst [vmem:[%s883 + $0x270] sm:$0xff] %v799
        %964 = vst.msk [vmem:[%s883 + $0x278] sm:$0xff] %vm885, %v801
        %965 = vst [vmem:[%s883 + $0x280] sm:$0xff] %v805
        %966 = vst.msk [vmem:[%s883 + $0x288] sm:$0xff] %vm885, %v807
        %967 = vst [vmem:[%s883 + $0x290] sm:$0xff] %v809
        %968 = vst.msk [vmem:[%s883 + $0x298] sm:$0xff] %vm885, %v811
        %969 = vst [vmem:[%s883 + $0x2a0] sm:$0xff] %v815
        %970 = vst.msk [vmem:[%s883 + $0x2a8] sm:$0xff] %vm885, %v817
        %971 = vst [vmem:[%s883 + $0x2b0] sm:$0xff] %v819
        %972 = vst.msk [vmem:[%s883 + $0x2b8] sm:$0xff] %vm885, %v821
        %973 = vst [vmem:[%s883 + $0x2c0] sm:$0xff] %v825
        %974 = vst.msk [vmem:[%s883 + $0x2c8] sm:$0xff] %vm885, %v827
        %975 = vst [vmem:[%s883 + $0x2d0] sm:$0xff] %v829
        %976 = vst.msk [vmem:[%s883 + $0x2d8] sm:$0xff] %vm885, %v831
        %977 = vst [vmem:[%s883 + $0x2e0] sm:$0xff] %v835
        %978 = vst.msk [vmem:[%s883 + $0x2e8] sm:$0xff] %vm885, %v837
        %979 = vst [vmem:[%s883 + $0x2f0] sm:$0xff] %v839
        %980 = vst.msk [vmem:[%s883 + $0x2f8] sm:$0xff] %vm885, %v841
        %981 = vst [vmem:[%s883 + $0x300] sm:$0xff] %v845
        %982 = vst.msk [vmem:[%s883 + $0x308] sm:$0xff] %vm885, %v847
        %983 = vst [vmem:[%s883 + $0x310] sm:$0xff] %v849
        %984 = vst.msk [vmem:[%s883 + $0x318] sm:$0xff] %vm885, %v851
        %985 = vst [vmem:[%s883 + $0x320] sm:$0xff] %v855
        %986 = vst.msk [vmem:[%s883 + $0x328] sm:$0xff] %vm885, %v857
        %987 = vst [vmem:[%s883 + $0x330] sm:$0xff] %v859
        %988 = vst.msk [vmem:[%s883 + $0x338] sm:$0xff] %vm885, %v861
        %989 = vst [vmem:[%s883 + $0x340] sm:$0xff] %v865
        %990 = vst.msk [vmem:[%s883 + $0x348] sm:$0xff] %vm885, %v867
        %991 = vst [vmem:[%s883 + $0x350] sm:$0xff] %v869
        %992 = vst.msk [vmem:[%s883 + $0x358] sm:$0xff] %vm885, %v871
        %993 = vst [vmem:[%s883 + $0x360] sm:$0xff] %v875
        %994 = vst.msk [vmem:[%s883 + $0x368] sm:$0xff] %vm885, %v877
      $region40: #{tpu_custom_call.1} parent=35 // pred_fallthru
        _
      %p995 = scmp.eq.s32.totalorder %s19, 1
      %p996 = scmp.eq.s32.totalorder %s20, 0
      %p997 = pnand %p995, %p996
      %p998 = pneg %p997
      // Predicated region
      $region41: #{tpu_custom_call.1} parent=35 // pred_check
        _
      $region42: #{tpu_custom_call.1} parent=35 // pred_check_branch
        %1000 = sbr.rel (%p997) target = $region44
      $region43: #{tpu_custom_call.1} parent=35 // pred_region
        %v1001 = vld [vmem:[#allocation2] sm:$0xff]
        %v1002 = vld [vmem:[#allocation2 + $0x8] sm:$0xff]
        %v1003 = vld [vmem:[#allocation2 + $0x10] sm:$0xff]
        %v1004 = vld [vmem:[#allocation2 + $0x18] sm:$0xff]
        %v1005 = vld [vmem:[#allocation2 + $0x20] sm:$0xff]
        %v1006 = vld [vmem:[#allocation2 + $0x28] sm:$0xff]
        %v1007 = vld [vmem:[#allocation2 + $0x30] sm:$0xff]
        %v1008 = vld [vmem:[#allocation2 + $0x38] sm:$0xff]
        %v1009 = vld [vmem:[#allocation2 + $0x40] sm:$0xff]
        %v1010 = vld [vmem:[#allocation2 + $0x48] sm:$0xff]
        %v1011 = vld [vmem:[#allocation2 + $0x50] sm:$0xff]
        %v1012 = vld [vmem:[#allocation2 + $0x58] sm:$0xff]
        %v1013 = vld [vmem:[#allocation2 + $0x60] sm:$0xff]
        %v1014 = vld [vmem:[#allocation2 + $0x68] sm:$0xff]
        %v1015 = vld [vmem:[#allocation2 + $0x70] sm:$0xff]
        %v1016 = vld [vmem:[#allocation2 + $0x78] sm:$0xff]
        %v1017 = vld [vmem:[#allocation2 + $0x80] sm:$0xff]
        %v1018 = vld [vmem:[#allocation2 + $0x88] sm:$0xff]
        %v1019 = vld [vmem:[#allocation2 + $0x90] sm:$0xff]
        %v1020 = vld [vmem:[#allocation2 + $0x98] sm:$0xff]
        %v1021 = vld [vmem:[#allocation2 + $0xa0] sm:$0xff]
        %v1022 = vld [vmem:[#allocation2 + $0xa8] sm:$0xff]
        %v1023 = vld [vmem:[#allocation2 + $0xb0] sm:$0xff]
        %v1024 = vld [vmem:[#allocation2 + $0xb8] sm:$0xff]
        %v1025 = vld [vmem:[#allocation2 + $0xc0] sm:$0xff]
        %v1026 = vld [vmem:[#allocation2 + $0xc8] sm:$0xff]
        %v1027 = vld [vmem:[#allocation2 + $0xd0] sm:$0xff]
        %v1028 = vld [vmem:[#allocation2 + $0xd8] sm:$0xff]
        %v1029 = vld [vmem:[#allocation2 + $0xe0] sm:$0xff]
        %v1030 = vld [vmem:[#allocation2 + $0xe8] sm:$0xff]
        %v1031 = vld [vmem:[#allocation2 + $0xf0] sm:$0xff]
        %v1032 = vld [vmem:[#allocation2 + $0xf8] sm:$0xff]
        %v1033 = vld [vmem:[#allocation2 + $0x100] sm:$0xff]
        %v1034 = vld [vmem:[#allocation2 + $0x108] sm:$0xff]
        %v1035 = vld [vmem:[#allocation2 + $0x110] sm:$0xff]
        %v1036 = vld [vmem:[#allocation2 + $0x118] sm:$0xff]
        %v1037 = vld [vmem:[#allocation2 + $0x120] sm:$0xff]
        %v1038 = vld [vmem:[#allocation2 + $0x128] sm:$0xff]
        %v1039 = vld [vmem:[#allocation2 + $0x130] sm:$0xff]
        %v1040 = vld [vmem:[#allocation2 + $0x138] sm:$0xff]
        %v1041 = vld [vmem:[#allocation2 + $0x140] sm:$0xff]
        %v1042 = vld [vmem:[#allocation2 + $0x148] sm:$0xff]
        %v1043 = vld [vmem:[#allocation2 + $0x150] sm:$0xff]
        %v1044 = vld [vmem:[#allocation2 + $0x158] sm:$0xff]
        %v1045 = vld [vmem:[#allocation2 + $0x160] sm:$0xff]
        %v1046 = vld [vmem:[#allocation2 + $0x168] sm:$0xff]
        %v1047 = vld [vmem:[#allocation2 + $0x170] sm:$0xff]
        %v1048 = vld [vmem:[#allocation2 + $0x178] sm:$0xff]
        %v1049 = vld [vmem:[#allocation2 + $0x180] sm:$0xff]
        %v1050 = vld [vmem:[#allocation2 + $0x188] sm:$0xff]
        %v1051 = vld [vmem:[#allocation2 + $0x190] sm:$0xff]
        %v1052 = vld [vmem:[#allocation2 + $0x198] sm:$0xff]
        %v1053 = vld [vmem:[#allocation2 + $0x1a0] sm:$0xff]
        %v1054 = vld [vmem:[#allocation2 + $0x1a8] sm:$0xff]
        %v1055 = vld [vmem:[#allocation2 + $0x1b0] sm:$0xff]
        %v1056 = vld [vmem:[#allocation2 + $0x1b8] sm:$0xff]
        %v1057 = vld [vmem:[#allocation2 + $0x1c0] sm:$0xff]
        %v1058 = vld [vmem:[#allocation2 + $0x1c8] sm:$0xff]
        %v1059 = vld [vmem:[#allocation2 + $0x1d0] sm:$0xff]
        %v1060 = vld [vmem:[#allocation2 + $0x1d8] sm:$0xff]
        %v1061 = vld [vmem:[#allocation2 + $0x1e0] sm:$0xff]
        %v1062 = vld [vmem:[#allocation2 + $0x1e8] sm:$0xff]
        %v1063 = vld [vmem:[#allocation2 + $0x1f0] sm:$0xff]
        %v1064 = vld [vmem:[#allocation2 + $0x1f8] sm:$0xff]
        %v1065 = vld [vmem:[#allocation2 + $0x200] sm:$0xff]
        %v1066 = vld [vmem:[#allocation2 + $0x208] sm:$0xff]
        %v1067 = vld [vmem:[#allocation2 + $0x210] sm:$0xff]
        %v1068 = vld [vmem:[#allocation2 + $0x218] sm:$0xff]
        %v1069 = vld [vmem:[#allocation2 + $0x220] sm:$0xff]
        %v1070 = vld [vmem:[#allocation2 + $0x228] sm:$0xff]
        %v1071 = vld [vmem:[#allocation2 + $0x230] sm:$0xff]
        %v1072 = vld [vmem:[#allocation2 + $0x238] sm:$0xff]
        %v1073 = vld [vmem:[#allocation2 + $0x240] sm:$0xff]
        %v1074 = vld [vmem:[#allocation2 + $0x248] sm:$0xff]
        %v1075 = vld [vmem:[#allocation2 + $0x250] sm:$0xff]
        %v1076 = vld [vmem:[#allocation2 + $0x258] sm:$0xff]
        %v1077 = vld [vmem:[#allocation2 + $0x260] sm:$0xff]
        %v1078 = vld [vmem:[#allocation2 + $0x268] sm:$0xff]
        %v1079 = vld [vmem:[#allocation2 + $0x270] sm:$0xff]
        %v1080 = vld [vmem:[#allocation2 + $0x278] sm:$0xff]
        %v1081 = vld [vmem:[#allocation2 + $0x280] sm:$0xff]
        %v1082 = vld [vmem:[#allocation2 + $0x288] sm:$0xff]
        %v1083 = vld [vmem:[#allocation2 + $0x290] sm:$0xff]
        %v1084 = vld [vmem:[#allocation2 + $0x298] sm:$0xff]
        %v1085 = vld [vmem:[#allocation2 + $0x2a0] sm:$0xff]
        %v1086 = vld [vmem:[#allocation2 + $0x2a8] sm:$0xff]
        %v1087 = vld [vmem:[#allocation2 + $0x2b0] sm:$0xff]
        %v1088 = vld [vmem:[#allocation2 + $0x2b8] sm:$0xff]
        %v1089 = vld [vmem:[#allocation2 + $0x2c0] sm:$0xff]
        %v1090 = vld [vmem:[#allocation2 + $0x2c8] sm:$0xff]
        %v1091 = vld [vmem:[#allocation2 + $0x2d0] sm:$0xff]
        %v1092 = vld [vmem:[#allocation2 + $0x2d8] sm:$0xff]
        %v1093 = vld [vmem:[#allocation2 + $0x2e0] sm:$0xff]
        %v1094 = vld [vmem:[#allocation2 + $0x2e8] sm:$0xff]
        %v1095 = vld [vmem:[#allocation2 + $0x2f0] sm:$0xff]
        %v1096 = vld [vmem:[#allocation2 + $0x2f8] sm:$0xff]
        %v1097 = vld [vmem:[#allocation2 + $0x300] sm:$0xff]
        %v1098 = vld [vmem:[#allocation2 + $0x308] sm:$0xff]
        %v1099 = vld [vmem:[#allocation2 + $0x310] sm:$0xff]
        %v1100 = vld [vmem:[#allocation2 + $0x318] sm:$0xff]
        %v1101 = vld [vmem:[#allocation2 + $0x320] sm:$0xff]
        %v1102 = vld [vmem:[#allocation2 + $0x328] sm:$0xff]
        %v1103 = vld [vmem:[#allocation2 + $0x330] sm:$0xff]
        %v1104 = vld [vmem:[#allocation2 + $0x338] sm:$0xff]
        %v1105 = vld [vmem:[#allocation2 + $0x340] sm:$0xff]
        %v1106 = vld [vmem:[#allocation2 + $0x348] sm:$0xff]
        %v1107 = vld [vmem:[#allocation2 + $0x350] sm:$0xff]
        %v1108 = vld [vmem:[#allocation2 + $0x358] sm:$0xff]
        %v1109 = vld [vmem:[#allocation2 + $0x360] sm:$0xff]
        %v1110 = vld [vmem:[#allocation2 + $0x368] sm:$0xff]
        %vm1111 = vcmask 556032
        %v1112 = vsel %vm1111, %v1002, 0.0
        %v1113 = vadd.f32 %v1001, %v1112
        %1114 = vadd.xlane.f32.xlu0 %v1113
        %v1115 = vpop.xlane.xlu0 %1114
        %v1116 = vsel %vm1111, %v1004, 0.0
        %v1117 = vadd.f32 %v1003, %v1116
        %1118 = vadd.xlane.f32.xlu0 %v1117
        %v1119 = vpop.xlane.xlu0 %1118
        %v1120 = vsel %vm1111, %v1006, 0.0
        %v1121 = vadd.f32 %v1005, %v1120
        %1122 = vadd.xlane.f32.xlu0 %v1121
        %v1123 = vpop.xlane.xlu0 %1122
        %v1124 = vsel %vm1111, %v1008, 0.0
        %v1125 = vadd.f32 %v1007, %v1124
        %1126 = vadd.xlane.f32.xlu0 %v1125
        %v1127 = vpop.xlane.xlu0 %1126
        %v1128 = vsel %vm1111, %v1010, 0.0
        %v1129 = vadd.f32 %v1009, %v1128
        %1130 = vadd.xlane.f32.xlu0 %v1129
        %v1131 = vpop.xlane.xlu0 %1130
        %v1132 = vsel %vm1111, %v1012, 0.0
        %v1133 = vadd.f32 %v1011, %v1132
        %1134 = vadd.xlane.f32.xlu0 %v1133
        %v1135 = vpop.xlane.xlu0 %1134
        %v1136 = vsel %vm1111, %v1014, 0.0
        %v1137 = vadd.f32 %v1013, %v1136
        %1138 = vadd.xlane.f32.xlu0 %v1137
        %v1139 = vpop.xlane.xlu0 %1138
        %v1140 = vsel %vm1111, %v1016, 0.0
        %v1141 = vadd.f32 %v1015, %v1140
        %1142 = vadd.xlane.f32.xlu0 %v1141
        %v1143 = vpop.xlane.xlu0 %1142
        %v1144 = vsel %vm1111, %v1018, 0.0
        %v1145 = vadd.f32 %v1017, %v1144
        %1146 = vadd.xlane.f32.xlu0 %v1145
        %v1147 = vpop.xlane.xlu0 %1146
        %v1148 = vsel %vm1111, %v1020, 0.0
        %v1149 = vadd.f32 %v1019, %v1148
        %1150 = vadd.xlane.f32.xlu0 %v1149
        %v1151 = vpop.xlane.xlu0 %1150
        %v1152 = vsel %vm1111, %v1022, 0.0
        %v1153 = vadd.f32 %v1021, %v1152
        %1154 = vadd.xlane.f32.xlu0 %v1153
        %v1155 = vpop.xlane.xlu0 %1154
        %v1156 = vsel %vm1111, %v1024, 0.0
        %v1157 = vadd.f32 %v1023, %v1156
        %1158 = vadd.xlane.f32.xlu0 %v1157
        %v1159 = vpop.xlane.xlu0 %1158
        %v1160 = vsel %vm1111, %v1026, 0.0
        %v1161 = vadd.f32 %v1025, %v1160
        %1162 = vadd.xlane.f32.xlu0 %v1161
        %v1163 = vpop.xlane.xlu0 %1162
        %v1164 = vsel %vm1111, %v1028, 0.0
        %v1165 = vadd.f32 %v1027, %v1164
        %1166 = vadd.xlane.f32.xlu0 %v1165
        %v1167 = vpop.xlane.xlu0 %1166
        %v1168 = vsel %vm1111, %v1030, 0.0
        %v1169 = vadd.f32 %v1029, %v1168
        %1170 = vadd.xlane.f32.xlu0 %v1169
        %v1171 = vpop.xlane.xlu0 %1170
        %v1172 = vsel %vm1111, %v1032, 0.0
        %v1173 = vadd.f32 %v1031, %v1172
        %1174 = vadd.xlane.f32.xlu0 %v1173
        %v1175 = vpop.xlane.xlu0 %1174
        %v1176 = vsel %vm1111, %v1034, 0.0
        %v1177 = vadd.f32 %v1033, %v1176
        %1178 = vadd.xlane.f32.xlu0 %v1177
        %v1179 = vpop.xlane.xlu0 %1178
        %v1180 = vsel %vm1111, %v1036, 0.0
        %v1181 = vadd.f32 %v1035, %v1180
        %1182 = vadd.xlane.f32.xlu0 %v1181
        %v1183 = vpop.xlane.xlu0 %1182
        %v1184 = vsel %vm1111, %v1038, 0.0
        %v1185 = vadd.f32 %v1037, %v1184
        %1186 = vadd.xlane.f32.xlu0 %v1185
        %v1187 = vpop.xlane.xlu0 %1186
        %v1188 = vsel %vm1111, %v1040, 0.0
        %v1189 = vadd.f32 %v1039, %v1188
        %1190 = vadd.xlane.f32.xlu0 %v1189
        %v1191 = vpop.xlane.xlu0 %1190
        %v1192 = vsel %vm1111, %v1042, 0.0
        %v1193 = vadd.f32 %v1041, %v1192
        %1194 = vadd.xlane.f32.xlu0 %v1193
        %v1195 = vpop.xlane.xlu0 %1194
        %v1196 = vsel %vm1111, %v1044, 0.0
        %v1197 = vadd.f32 %v1043, %v1196
        %1198 = vadd.xlane.f32.xlu0 %v1197
        %v1199 = vpop.xlane.xlu0 %1198
        %v1200 = vsel %vm1111, %v1046, 0.0
        %v1201 = vadd.f32 %v1045, %v1200
        %1202 = vadd.xlane.f32.xlu0 %v1201
        %v1203 = vpop.xlane.xlu0 %1202
        %v1204 = vsel %vm1111, %v1048, 0.0
        %v1205 = vadd.f32 %v1047, %v1204
        %1206 = vadd.xlane.f32.xlu0 %v1205
        %v1207 = vpop.xlane.xlu0 %1206
        %v1208 = vsel %vm1111, %v1050, 0.0
        %v1209 = vadd.f32 %v1049, %v1208
        %1210 = vadd.xlane.f32.xlu0 %v1209
        %v1211 = vpop.xlane.xlu0 %1210
        %v1212 = vsel %vm1111, %v1052, 0.0
        %v1213 = vadd.f32 %v1051, %v1212
        %1214 = vadd.xlane.f32.xlu0 %v1213
        %v1215 = vpop.xlane.xlu0 %1214
        %v1216 = vsel %vm1111, %v1054, 0.0
        %v1217 = vadd.f32 %v1053, %v1216
        %1218 = vadd.xlane.f32.xlu0 %v1217
        %v1219 = vpop.xlane.xlu0 %1218
        %v1220 = vsel %vm1111, %v1056, 0.0
        %v1221 = vadd.f32 %v1055, %v1220
        %1222 = vadd.xlane.f32.xlu0 %v1221
        %v1223 = vpop.xlane.xlu0 %1222
        %v1224 = vsel %vm1111, %v1058, 0.0
        %v1225 = vadd.f32 %v1057, %v1224
        %1226 = vadd.xlane.f32.xlu0 %v1225
        %v1227 = vpop.xlane.xlu0 %1226
        %v1228 = vsel %vm1111, %v1060, 0.0
        %v1229 = vadd.f32 %v1059, %v1228
        %1230 = vadd.xlane.f32.xlu0 %v1229
        %v1231 = vpop.xlane.xlu0 %1230
        %v1232 = vsel %vm1111, %v1062, 0.0
        %v1233 = vadd.f32 %v1061, %v1232
        %1234 = vadd.xlane.f32.xlu0 %v1233
        %v1235 = vpop.xlane.xlu0 %1234
        %v1236 = vsel %vm1111, %v1064, 0.0
        %v1237 = vadd.f32 %v1063, %v1236
        %1238 = vadd.xlane.f32.xlu0 %v1237
        %v1239 = vpop.xlane.xlu0 %1238
        %v1240 = vsel %vm1111, %v1066, 0.0
        %v1241 = vadd.f32 %v1065, %v1240
        %1242 = vadd.xlane.f32.xlu0 %v1241
        %v1243 = vpop.xlane.xlu0 %1242
        %v1244 = vsel %vm1111, %v1068, 0.0
        %v1245 = vadd.f32 %v1067, %v1244
        %1246 = vadd.xlane.f32.xlu0 %v1245
        %v1247 = vpop.xlane.xlu0 %1246
        %v1248 = vsel %vm1111, %v1070, 0.0
        %v1249 = vadd.f32 %v1069, %v1248
        %1250 = vadd.xlane.f32.xlu0 %v1249
        %v1251 = vpop.xlane.xlu0 %1250
        %v1252 = vsel %vm1111, %v1072, 0.0
        %v1253 = vadd.f32 %v1071, %v1252
        %1254 = vadd.xlane.f32.xlu0 %v1253
        %v1255 = vpop.xlane.xlu0 %1254
        %v1256 = vsel %vm1111, %v1074, 0.0
        %v1257 = vadd.f32 %v1073, %v1256
        %1258 = vadd.xlane.f32.xlu0 %v1257
        %v1259 = vpop.xlane.xlu0 %1258
        %v1260 = vsel %vm1111, %v1076, 0.0
        %v1261 = vadd.f32 %v1075, %v1260
        %1262 = vadd.xlane.f32.xlu0 %v1261
        %v1263 = vpop.xlane.xlu0 %1262
        %v1264 = vsel %vm1111, %v1078, 0.0
        %v1265 = vadd.f32 %v1077, %v1264
        %1266 = vadd.xlane.f32.xlu0 %v1265
        %v1267 = vpop.xlane.xlu0 %1266
        %v1268 = vsel %vm1111, %v1080, 0.0
        %v1269 = vadd.f32 %v1079, %v1268
        %1270 = vadd.xlane.f32.xlu0 %v1269
        %v1271 = vpop.xlane.xlu0 %1270
        %v1272 = vsel %vm1111, %v1082, 0.0
        %v1273 = vadd.f32 %v1081, %v1272
        %1274 = vadd.xlane.f32.xlu0 %v1273
        %v1275 = vpop.xlane.xlu0 %1274
        %v1276 = vsel %vm1111, %v1084, 0.0
        %v1277 = vadd.f32 %v1083, %v1276
        %1278 = vadd.xlane.f32.xlu0 %v1277
        %v1279 = vpop.xlane.xlu0 %1278
        %v1280 = vsel %vm1111, %v1086, 0.0
        %v1281 = vadd.f32 %v1085, %v1280
        %1282 = vadd.xlane.f32.xlu0 %v1281
        %v1283 = vpop.xlane.xlu0 %1282
        %v1284 = vsel %vm1111, %v1088, 0.0
        %v1285 = vadd.f32 %v1087, %v1284
        %1286 = vadd.xlane.f32.xlu0 %v1285
        %v1287 = vpop.xlane.xlu0 %1286
        %v1288 = vsel %vm1111, %v1090, 0.0
        %v1289 = vadd.f32 %v1089, %v1288
        %1290 = vadd.xlane.f32.xlu0 %v1289
        %v1291 = vpop.xlane.xlu0 %1290
        %v1292 = vsel %vm1111, %v1092, 0.0
        %v1293 = vadd.f32 %v1091, %v1292
        %1294 = vadd.xlane.f32.xlu0 %v1293
        %v1295 = vpop.xlane.xlu0 %1294
        %v1296 = vsel %vm1111, %v1094, 0.0
        %v1297 = vadd.f32 %v1093, %v1296
        %1298 = vadd.xlane.f32.xlu0 %v1297
        %v1299 = vpop.xlane.xlu0 %1298
        %v1300 = vsel %vm1111, %v1096, 0.0
        %v1301 = vadd.f32 %v1095, %v1300
        %1302 = vadd.xlane.f32.xlu0 %v1301
        %v1303 = vpop.xlane.xlu0 %1302
        %v1304 = vsel %vm1111, %v1098, 0.0
        %v1305 = vadd.f32 %v1097, %v1304
        %1306 = vadd.xlane.f32.xlu0 %v1305
        %v1307 = vpop.xlane.xlu0 %1306
        %v1308 = vsel %vm1111, %v1100, 0.0
        %v1309 = vadd.f32 %v1099, %v1308
        %1310 = vadd.xlane.f32.xlu0 %v1309
        %v1311 = vpop.xlane.xlu0 %1310
        %v1312 = vsel %vm1111, %v1102, 0.0
        %v1313 = vadd.f32 %v1101, %v1312
        %1314 = vadd.xlane.f32.xlu0 %v1313
        %v1315 = vpop.xlane.xlu0 %1314
        %v1316 = vsel %vm1111, %v1104, 0.0
        %v1317 = vadd.f32 %v1103, %v1316
        %1318 = vadd.xlane.f32.xlu0 %v1317
        %v1319 = vpop.xlane.xlu0 %1318
        %v1320 = vsel %vm1111, %v1106, 0.0
        %v1321 = vadd.f32 %v1105, %v1320
        %1322 = vadd.xlane.f32.xlu0 %v1321
        %v1323 = vpop.xlane.xlu0 %1322
        %v1324 = vsel %vm1111, %v1108, 0.0
        %v1325 = vadd.f32 %v1107, %v1324
        %1326 = vadd.xlane.f32.xlu0 %v1325
        %v1327 = vpop.xlane.xlu0 %1326
        %v1328 = vsel %vm1111, %v1110, 0.0
        %v1329 = vadd.f32 %v1109, %v1328
        %1330 = vadd.xlane.f32.xlu0 %v1329
        %v1331 = vpop.xlane.xlu0 %1330
        %s1332 = scalar_lea.vmem [#allocation2], 880
        %v1333 = vld [vmem:[%s1332] sm:$0xff]
        %v1334 = vld [vmem:[%s1332 + $0x8] sm:$0xff]
        %v1335 = vld [vmem:[%s1332 + $0x10] sm:$0xff]
        %v1336 = vld [vmem:[%s1332 + $0x18] sm:$0xff]
        %v1337 = vld [vmem:[%s1332 + $0x20] sm:$0xff]
        %v1338 = vld [vmem:[%s1332 + $0x28] sm:$0xff]
        %v1339 = vld [vmem:[%s1332 + $0x30] sm:$0xff]
        %v1340 = vld [vmem:[%s1332 + $0x38] sm:$0xff]
        %v1341 = vld [vmem:[%s1332 + $0x40] sm:$0xff]
        %v1342 = vld [vmem:[%s1332 + $0x48] sm:$0xff]
        %v1343 = vld [vmem:[%s1332 + $0x50] sm:$0xff]
        %v1344 = vld [vmem:[%s1332 + $0x58] sm:$0xff]
        %v1345 = vld [vmem:[%s1332 + $0x60] sm:$0xff]
        %v1346 = vld [vmem:[%s1332 + $0x68] sm:$0xff]
        %v1347 = vld [vmem:[%s1332 + $0x70] sm:$0xff]
        %v1348 = vld [vmem:[%s1332 + $0x78] sm:$0xff]
        %v1349 = vld [vmem:[%s1332 + $0x80] sm:$0xff]
        %v1350 = vld [vmem:[%s1332 + $0x88] sm:$0xff]
        %v1351 = vld [vmem:[%s1332 + $0x90] sm:$0xff]
        %v1352 = vld [vmem:[%s1332 + $0x98] sm:$0xff]
        %v1353 = vld [vmem:[%s1332 + $0xa0] sm:$0xff]
        %v1354 = vld [vmem:[%s1332 + $0xa8] sm:$0xff]
        %v1355 = vld [vmem:[%s1332 + $0xb0] sm:$0xff]
        %v1356 = vld [vmem:[%s1332 + $0xb8] sm:$0xff]
        %v1357 = vld [vmem:[%s1332 + $0xc0] sm:$0xff]
        %v1358 = vld [vmem:[%s1332 + $0xc8] sm:$0xff]
        %v1359 = vld [vmem:[%s1332 + $0xd0] sm:$0xff]
        %v1360 = vld [vmem:[%s1332 + $0xd8] sm:$0xff]
        %v1361 = vld [vmem:[%s1332 + $0xe0] sm:$0xff]
        %v1362 = vld [vmem:[%s1332 + $0xe8] sm:$0xff]
        %v1363 = vld [vmem:[%s1332 + $0xf0] sm:$0xff]
        %v1364 = vld [vmem:[%s1332 + $0xf8] sm:$0xff]
        %v1365 = vld [vmem:[%s1332 + $0x100] sm:$0xff]
        %v1366 = vld [vmem:[%s1332 + $0x108] sm:$0xff]
        %v1367 = vld [vmem:[%s1332 + $0x110] sm:$0xff]
        %v1368 = vld [vmem:[%s1332 + $0x118] sm:$0xff]
        %v1369 = vld [vmem:[%s1332 + $0x120] sm:$0xff]
        %v1370 = vld [vmem:[%s1332 + $0x128] sm:$0xff]
        %v1371 = vld [vmem:[%s1332 + $0x130] sm:$0xff]
        %v1372 = vld [vmem:[%s1332 + $0x138] sm:$0xff]
        %v1373 = vld [vmem:[%s1332 + $0x140] sm:$0xff]
        %v1374 = vld [vmem:[%s1332 + $0x148] sm:$0xff]
        %v1375 = vld [vmem:[%s1332 + $0x150] sm:$0xff]
        %v1376 = vld [vmem:[%s1332 + $0x158] sm:$0xff]
        %v1377 = vld [vmem:[%s1332 + $0x160] sm:$0xff]
        %v1378 = vld [vmem:[%s1332 + $0x168] sm:$0xff]
        %v1379 = vld [vmem:[%s1332 + $0x170] sm:$0xff]
        %v1380 = vld [vmem:[%s1332 + $0x178] sm:$0xff]
        %v1381 = vld [vmem:[%s1332 + $0x180] sm:$0xff]
        %v1382 = vld [vmem:[%s1332 + $0x188] sm:$0xff]
        %v1383 = vld [vmem:[%s1332 + $0x190] sm:$0xff]
        %v1384 = vld [vmem:[%s1332 + $0x198] sm:$0xff]
        %v1385 = vld [vmem:[%s1332 + $0x1a0] sm:$0xff]
        %v1386 = vld [vmem:[%s1332 + $0x1a8] sm:$0xff]
        %v1387 = vld [vmem:[%s1332 + $0x1b0] sm:$0xff]
        %v1388 = vld [vmem:[%s1332 + $0x1b8] sm:$0xff]
        %v1389 = vld [vmem:[%s1332 + $0x1c0] sm:$0xff]
        %v1390 = vld [vmem:[%s1332 + $0x1c8] sm:$0xff]
        %v1391 = vld [vmem:[%s1332 + $0x1d0] sm:$0xff]
        %v1392 = vld [vmem:[%s1332 + $0x1d8] sm:$0xff]
        %v1393 = vld [vmem:[%s1332 + $0x1e0] sm:$0xff]
        %v1394 = vld [vmem:[%s1332 + $0x1e8] sm:$0xff]
        %v1395 = vld [vmem:[%s1332 + $0x1f0] sm:$0xff]
        %v1396 = vld [vmem:[%s1332 + $0x1f8] sm:$0xff]
        %v1397 = vld [vmem:[%s1332 + $0x200] sm:$0xff]
        %v1398 = vld [vmem:[%s1332 + $0x208] sm:$0xff]
        %v1399 = vld [vmem:[%s1332 + $0x210] sm:$0xff]
        %v1400 = vld [vmem:[%s1332 + $0x218] sm:$0xff]
        %v1401 = vld [vmem:[%s1332 + $0x220] sm:$0xff]
        %v1402 = vld [vmem:[%s1332 + $0x228] sm:$0xff]
        %v1403 = vld [vmem:[%s1332 + $0x230] sm:$0xff]
        %v1404 = vld [vmem:[%s1332 + $0x238] sm:$0xff]
        %v1405 = vld [vmem:[%s1332 + $0x240] sm:$0xff]
        %v1406 = vld [vmem:[%s1332 + $0x248] sm:$0xff]
        %v1407 = vld [vmem:[%s1332 + $0x250] sm:$0xff]
        %v1408 = vld [vmem:[%s1332 + $0x258] sm:$0xff]
        %v1409 = vld [vmem:[%s1332 + $0x260] sm:$0xff]
        %v1410 = vld [vmem:[%s1332 + $0x268] sm:$0xff]
        %v1411 = vld [vmem:[%s1332 + $0x270] sm:$0xff]
        %v1412 = vld [vmem:[%s1332 + $0x278] sm:$0xff]
        %v1413 = vld [vmem:[%s1332 + $0x280] sm:$0xff]
        %v1414 = vld [vmem:[%s1332 + $0x288] sm:$0xff]
        %v1415 = vld [vmem:[%s1332 + $0x290] sm:$0xff]
        %v1416 = vld [vmem:[%s1332 + $0x298] sm:$0xff]
        %v1417 = vld [vmem:[%s1332 + $0x2a0] sm:$0xff]
        %v1418 = vld [vmem:[%s1332 + $0x2a8] sm:$0xff]
        %v1419 = vld [vmem:[%s1332 + $0x2b0] sm:$0xff]
        %v1420 = vld [vmem:[%s1332 + $0x2b8] sm:$0xff]
        %v1421 = vld [vmem:[%s1332 + $0x2c0] sm:$0xff]
        %v1422 = vld [vmem:[%s1332 + $0x2c8] sm:$0xff]
        %v1423 = vld [vmem:[%s1332 + $0x2d0] sm:$0xff]
        %v1424 = vld [vmem:[%s1332 + $0x2d8] sm:$0xff]
        %v1425 = vld [vmem:[%s1332 + $0x2e0] sm:$0xff]
        %v1426 = vld [vmem:[%s1332 + $0x2e8] sm:$0xff]
        %v1427 = vld [vmem:[%s1332 + $0x2f0] sm:$0xff]
        %v1428 = vld [vmem:[%s1332 + $0x2f8] sm:$0xff]
        %v1429 = vld [vmem:[%s1332 + $0x300] sm:$0xff]
        %v1430 = vld [vmem:[%s1332 + $0x308] sm:$0xff]
        %v1431 = vld [vmem:[%s1332 + $0x310] sm:$0xff]
        %v1432 = vld [vmem:[%s1332 + $0x318] sm:$0xff]
        %v1433 = vld [vmem:[%s1332 + $0x320] sm:$0xff]
        %v1434 = vld [vmem:[%s1332 + $0x328] sm:$0xff]
        %v1435 = vld [vmem:[%s1332 + $0x330] sm:$0xff]
        %v1436 = vld [vmem:[%s1332 + $0x338] sm:$0xff]
        %v1437 = vld [vmem:[%s1332 + $0x340] sm:$0xff]
        %v1438 = vld [vmem:[%s1332 + $0x348] sm:$0xff]
        %v1439 = vld [vmem:[%s1332 + $0x350] sm:$0xff]
        %v1440 = vld [vmem:[%s1332 + $0x358] sm:$0xff]
        %v1441 = vld [vmem:[%s1332 + $0x360] sm:$0xff]
        %v1442 = vld [vmem:[%s1332 + $0x368] sm:$0xff]
        %v1443 = vsel %vm1111, %v1334, 0.0
        %v1444 = vadd.f32 %v1333, %v1443
        %1445 = vadd.xlane.f32.xlu0 %v1444
        %v1446 = vpop.xlane.xlu0 %1445
        %v1447 = vsel %vm1111, %v1336, 0.0
        %v1448 = vadd.f32 %v1335, %v1447
        %1449 = vadd.xlane.f32.xlu0 %v1448
        %v1450 = vpop.xlane.xlu0 %1449
        %v1451 = vsel %vm1111, %v1338, 0.0
        %v1452 = vadd.f32 %v1337, %v1451
        %1453 = vadd.xlane.f32.xlu0 %v1452
        %v1454 = vpop.xlane.xlu0 %1453
        %v1455 = vsel %vm1111, %v1340, 0.0
        %v1456 = vadd.f32 %v1339, %v1455
        %1457 = vadd.xlane.f32.xlu0 %v1456
        %v1458 = vpop.xlane.xlu0 %1457
        %v1459 = vsel %vm1111, %v1342, 0.0
        %v1460 = vadd.f32 %v1341, %v1459
        %1461 = vadd.xlane.f32.xlu0 %v1460
        %v1462 = vpop.xlane.xlu0 %1461
        %v1463 = vsel %vm1111, %v1344, 0.0
        %v1464 = vadd.f32 %v1343, %v1463
        %1465 = vadd.xlane.f32.xlu0 %v1464
        %v1466 = vpop.xlane.xlu0 %1465
        %v1467 = vsel %vm1111, %v1346, 0.0
        %v1468 = vadd.f32 %v1345, %v1467
        %1469 = vadd.xlane.f32.xlu0 %v1468
        %v1470 = vpop.xlane.xlu0 %1469
        %v1471 = vsel %vm1111, %v1348, 0.0
        %v1472 = vadd.f32 %v1347, %v1471
        %1473 = vadd.xlane.f32.xlu0 %v1472
        %v1474 = vpop.xlane.xlu0 %1473
        %v1475 = vsel %vm1111, %v1350, 0.0
        %v1476 = vadd.f32 %v1349, %v1475
        %1477 = vadd.xlane.f32.xlu0 %v1476
        %v1478 = vpop.xlane.xlu0 %1477
        %v1479 = vsel %vm1111, %v1352, 0.0
        %v1480 = vadd.f32 %v1351, %v1479
        %1481 = vadd.xlane.f32.xlu0 %v1480
        %v1482 = vpop.xlane.xlu0 %1481
        %v1483 = vsel %vm1111, %v1354, 0.0
        %v1484 = vadd.f32 %v1353, %v1483
        %1485 = vadd.xlane.f32.xlu0 %v1484
        %v1486 = vpop.xlane.xlu0 %1485
        %v1487 = vsel %vm1111, %v1356, 0.0
        %v1488 = vadd.f32 %v1355, %v1487
        %1489 = vadd.xlane.f32.xlu0 %v1488
        %v1490 = vpop.xlane.xlu0 %1489
        %v1491 = vsel %vm1111, %v1358, 0.0
        %v1492 = vadd.f32 %v1357, %v1491
        %1493 = vadd.xlane.f32.xlu0 %v1492
        %v1494 = vpop.xlane.xlu0 %1493
        %v1495 = vsel %vm1111, %v1360, 0.0
        %v1496 = vadd.f32 %v1359, %v1495
        %1497 = vadd.xlane.f32.xlu0 %v1496
        %v1498 = vpop.xlane.xlu0 %1497
        %v1499 = vsel %vm1111, %v1362, 0.0
        %v1500 = vadd.f32 %v1361, %v1499
        %1501 = vadd.xlane.f32.xlu0 %v1500
        %v1502 = vpop.xlane.xlu0 %1501
        %v1503 = vsel %vm1111, %v1364, 0.0
        %v1504 = vadd.f32 %v1363, %v1503
        %1505 = vadd.xlane.f32.xlu0 %v1504
        %v1506 = vpop.xlane.xlu0 %1505
        %v1507 = vsel %vm1111, %v1366, 0.0
        %v1508 = vadd.f32 %v1365, %v1507
        %1509 = vadd.xlane.f32.xlu0 %v1508
        %v1510 = vpop.xlane.xlu0 %1509
        %v1511 = vsel %vm1111, %v1368, 0.0
        %v1512 = vadd.f32 %v1367, %v1511
        %1513 = vadd.xlane.f32.xlu0 %v1512
        %v1514 = vpop.xlane.xlu0 %1513
        %v1515 = vsel %vm1111, %v1370, 0.0
        %v1516 = vadd.f32 %v1369, %v1515
        %1517 = vadd.xlane.f32.xlu0 %v1516
        %v1518 = vpop.xlane.xlu0 %1517
        %v1519 = vsel %vm1111, %v1372, 0.0
        %v1520 = vadd.f32 %v1371, %v1519
        %1521 = vadd.xlane.f32.xlu0 %v1520
        %v1522 = vpop.xlane.xlu0 %1521
        %v1523 = vsel %vm1111, %v1374, 0.0
        %v1524 = vadd.f32 %v1373, %v1523
        %1525 = vadd.xlane.f32.xlu0 %v1524
        %v1526 = vpop.xlane.xlu0 %1525
        %v1527 = vsel %vm1111, %v1376, 0.0
        %v1528 = vadd.f32 %v1375, %v1527
        %1529 = vadd.xlane.f32.xlu0 %v1528
        %v1530 = vpop.xlane.xlu0 %1529
        %v1531 = vsel %vm1111, %v1378, 0.0
        %v1532 = vadd.f32 %v1377, %v1531
        %1533 = vadd.xlane.f32.xlu0 %v1532
        %v1534 = vpop.xlane.xlu0 %1533
        %v1535 = vsel %vm1111, %v1380, 0.0
        %v1536 = vadd.f32 %v1379, %v1535
        %1537 = vadd.xlane.f32.xlu0 %v1536
        %v1538 = vpop.xlane.xlu0 %1537
        %v1539 = vsel %vm1111, %v1382, 0.0
        %v1540 = vadd.f32 %v1381, %v1539
        %1541 = vadd.xlane.f32.xlu0 %v1540
        %v1542 = vpop.xlane.xlu0 %1541
        %v1543 = vsel %vm1111, %v1384, 0.0
        %v1544 = vadd.f32 %v1383, %v1543
        %1545 = vadd.xlane.f32.xlu0 %v1544
        %v1546 = vpop.xlane.xlu0 %1545
        %v1547 = vsel %vm1111, %v1386, 0.0
        %v1548 = vadd.f32 %v1385, %v1547
        %1549 = vadd.xlane.f32.xlu0 %v1548
        %v1550 = vpop.xlane.xlu0 %1549
        %v1551 = vsel %vm1111, %v1388, 0.0
        %v1552 = vadd.f32 %v1387, %v1551
        %1553 = vadd.xlane.f32.xlu0 %v1552
        %v1554 = vpop.xlane.xlu0 %1553
        %v1555 = vsel %vm1111, %v1390, 0.0
        %v1556 = vadd.f32 %v1389, %v1555
        %1557 = vadd.xlane.f32.xlu0 %v1556
        %v1558 = vpop.xlane.xlu0 %1557
        %v1559 = vsel %vm1111, %v1392, 0.0
        %v1560 = vadd.f32 %v1391, %v1559
        %1561 = vadd.xlane.f32.xlu0 %v1560
        %v1562 = vpop.xlane.xlu0 %1561
        %v1563 = vsel %vm1111, %v1394, 0.0
        %v1564 = vadd.f32 %v1393, %v1563
        %1565 = vadd.xlane.f32.xlu0 %v1564
        %v1566 = vpop.xlane.xlu0 %1565
        %v1567 = vsel %vm1111, %v1396, 0.0
        %v1568 = vadd.f32 %v1395, %v1567
        %1569 = vadd.xlane.f32.xlu0 %v1568
        %v1570 = vpop.xlane.xlu0 %1569
        %v1571 = vsel %vm1111, %v1398, 0.0
        %v1572 = vadd.f32 %v1397, %v1571
        %1573 = vadd.xlane.f32.xlu0 %v1572
        %v1574 = vpop.xlane.xlu0 %1573
        %v1575 = vsel %vm1111, %v1400, 0.0
        %v1576 = vadd.f32 %v1399, %v1575
        %1577 = vadd.xlane.f32.xlu0 %v1576
        %v1578 = vpop.xlane.xlu0 %1577
        %v1579 = vsel %vm1111, %v1402, 0.0
        %v1580 = vadd.f32 %v1401, %v1579
        %1581 = vadd.xlane.f32.xlu0 %v1580
        %v1582 = vpop.xlane.xlu0 %1581
        %v1583 = vsel %vm1111, %v1404, 0.0
        %v1584 = vadd.f32 %v1403, %v1583
        %1585 = vadd.xlane.f32.xlu0 %v1584
        %v1586 = vpop.xlane.xlu0 %1585
        %v1587 = vsel %vm1111, %v1406, 0.0
        %v1588 = vadd.f32 %v1405, %v1587
        %1589 = vadd.xlane.f32.xlu0 %v1588
        %v1590 = vpop.xlane.xlu0 %1589
        %v1591 = vsel %vm1111, %v1408, 0.0
        %v1592 = vadd.f32 %v1407, %v1591
        %1593 = vadd.xlane.f32.xlu0 %v1592
        %v1594 = vpop.xlane.xlu0 %1593
        %v1595 = vsel %vm1111, %v1410, 0.0
        %v1596 = vadd.f32 %v1409, %v1595
        %1597 = vadd.xlane.f32.xlu0 %v1596
        %v1598 = vpop.xlane.xlu0 %1597
        %v1599 = vsel %vm1111, %v1412, 0.0
        %v1600 = vadd.f32 %v1411, %v1599
        %1601 = vadd.xlane.f32.xlu0 %v1600
        %v1602 = vpop.xlane.xlu0 %1601
        %v1603 = vsel %vm1111, %v1414, 0.0
        %v1604 = vadd.f32 %v1413, %v1603
        %1605 = vadd.xlane.f32.xlu0 %v1604
        %v1606 = vpop.xlane.xlu0 %1605
        %v1607 = vsel %vm1111, %v1416, 0.0
        %v1608 = vadd.f32 %v1415, %v1607
        %1609 = vadd.xlane.f32.xlu0 %v1608
        %v1610 = vpop.xlane.xlu0 %1609
        %v1611 = vsel %vm1111, %v1418, 0.0
        %v1612 = vadd.f32 %v1417, %v1611
        %1613 = vadd.xlane.f32.xlu0 %v1612
        %v1614 = vpop.xlane.xlu0 %1613
        %v1615 = vsel %vm1111, %v1420, 0.0
        %v1616 = vadd.f32 %v1419, %v1615
        %1617 = vadd.xlane.f32.xlu0 %v1616
        %v1618 = vpop.xlane.xlu0 %1617
        %v1619 = vsel %vm1111, %v1422, 0.0
        %v1620 = vadd.f32 %v1421, %v1619
        %1621 = vadd.xlane.f32.xlu0 %v1620
        %v1622 = vpop.xlane.xlu0 %1621
        %v1623 = vsel %vm1111, %v1424, 0.0
        %v1624 = vadd.f32 %v1423, %v1623
        %1625 = vadd.xlane.f32.xlu0 %v1624
        %v1626 = vpop.xlane.xlu0 %1625
        %v1627 = vsel %vm1111, %v1426, 0.0
        %v1628 = vadd.f32 %v1425, %v1627
        %1629 = vadd.xlane.f32.xlu0 %v1628
        %v1630 = vpop.xlane.xlu0 %1629
        %v1631 = vsel %vm1111, %v1428, 0.0
        %v1632 = vadd.f32 %v1427, %v1631
        %1633 = vadd.xlane.f32.xlu0 %v1632
        %v1634 = vpop.xlane.xlu0 %1633
        %v1635 = vsel %vm1111, %v1430, 0.0
        %v1636 = vadd.f32 %v1429, %v1635
        %1637 = vadd.xlane.f32.xlu0 %v1636
        %v1638 = vpop.xlane.xlu0 %1637
        %v1639 = vsel %vm1111, %v1432, 0.0
        %v1640 = vadd.f32 %v1431, %v1639
        %1641 = vadd.xlane.f32.xlu0 %v1640
        %v1642 = vpop.xlane.xlu0 %1641
        %v1643 = vsel %vm1111, %v1434, 0.0
        %v1644 = vadd.f32 %v1433, %v1643
        %1645 = vadd.xlane.f32.xlu0 %v1644
        %v1646 = vpop.xlane.xlu0 %1645
        %v1647 = vsel %vm1111, %v1436, 0.0
        %v1648 = vadd.f32 %v1435, %v1647
        %1649 = vadd.xlane.f32.xlu0 %v1648
        %v1650 = vpop.xlane.xlu0 %1649
        %v1651 = vsel %vm1111, %v1438, 0.0
        %v1652 = vadd.f32 %v1437, %v1651
        %1653 = vadd.xlane.f32.xlu0 %v1652
        %v1654 = vpop.xlane.xlu0 %1653
        %v1655 = vsel %vm1111, %v1440, 0.0
        %v1656 = vadd.f32 %v1439, %v1655
        %1657 = vadd.xlane.f32.xlu0 %v1656
        %v1658 = vpop.xlane.xlu0 %1657
        %v1659 = vsel %vm1111, %v1442, 0.0
        %v1660 = vadd.f32 %v1441, %v1659
        %1661 = vadd.xlane.f32.xlu0 %v1660
        %v1662 = vpop.xlane.xlu0 %1661
        %v1663 = vadd.f32 %v1115, %v1446
        %v1664 = vadd.f32 %v1119, %v1450
        %v1665 = vadd.f32 %v1123, %v1454
        %v1666 = vadd.f32 %v1127, %v1458
        %v1667 = vadd.f32 %v1131, %v1462
        %v1668 = vadd.f32 %v1135, %v1466
        %v1669 = vadd.f32 %v1139, %v1470
        %v1670 = vadd.f32 %v1143, %v1474
        %v1671 = vadd.f32 %v1147, %v1478
        %v1672 = vadd.f32 %v1151, %v1482
        %v1673 = vadd.f32 %v1155, %v1486
        %v1674 = vadd.f32 %v1159, %v1490
        %v1675 = vadd.f32 %v1163, %v1494
        %v1676 = vadd.f32 %v1167, %v1498
        %v1677 = vadd.f32 %v1171, %v1502
        %v1678 = vadd.f32 %v1175, %v1506
        %v1679 = vadd.f32 %v1179, %v1510
        %v1680 = vadd.f32 %v1183, %v1514
        %v1681 = vadd.f32 %v1187, %v1518
        %v1682 = vadd.f32 %v1191, %v1522
        %v1683 = vadd.f32 %v1195, %v1526
        %v1684 = vadd.f32 %v1199, %v1530
        %v1685 = vadd.f32 %v1203, %v1534
        %v1686 = vadd.f32 %v1207, %v1538
        %v1687 = vadd.f32 %v1211, %v1542
        %v1688 = vadd.f32 %v1215, %v1546
        %v1689 = vadd.f32 %v1219, %v1550
        %v1690 = vadd.f32 %v1223, %v1554
        %v1691 = vadd.f32 %v1227, %v1558
        %v1692 = vadd.f32 %v1231, %v1562
        %v1693 = vadd.f32 %v1235, %v1566
        %v1694 = vadd.f32 %v1239, %v1570
        %v1695 = vadd.f32 %v1243, %v1574
        %v1696 = vadd.f32 %v1247, %v1578
        %v1697 = vadd.f32 %v1251, %v1582
        %v1698 = vadd.f32 %v1255, %v1586
        %v1699 = vadd.f32 %v1259, %v1590
        %v1700 = vadd.f32 %v1263, %v1594
        %v1701 = vadd.f32 %v1267, %v1598
        %v1702 = vadd.f32 %v1271, %v1602
        %v1703 = vadd.f32 %v1275, %v1606
        %v1704 = vadd.f32 %v1279, %v1610
        %v1705 = vadd.f32 %v1283, %v1614
        %v1706 = vadd.f32 %v1287, %v1618
        %v1707 = vadd.f32 %v1291, %v1622
        %v1708 = vadd.f32 %v1295, %v1626
        %v1709 = vadd.f32 %v1299, %v1630
        %v1710 = vadd.f32 %v1303, %v1634
        %v1711 = vadd.f32 %v1307, %v1638
        %v1712 = vadd.f32 %v1311, %v1642
        %v1713 = vadd.f32 %v1315, %v1646
        %v1714 = vadd.f32 %v1319, %v1650
        %v1715 = vadd.f32 %v1323, %v1654
        %v1716 = vadd.f32 %v1327, %v1658
        %v1717 = vadd.f32 %v1331, %v1662
        %v1718 = vmul.f32 %v1663, 0.0025510204
        %v1719 = vmul.f32 %v1664, 0.0025510204
        %v1720 = vmul.f32 %v1665, 0.0025510204
        %v1721 = vmul.f32 %v1666, 0.0025510204
        %v1722 = vmul.f32 %v1667, 0.0025510204
        %v1723 = vmul.f32 %v1668, 0.0025510204
        %v1724 = vmul.f32 %v1669, 0.0025510204
        %v1725 = vmul.f32 %v1670, 0.0025510204
        %v1726 = vmul.f32 %v1671, 0.0025510204
        %v1727 = vmul.f32 %v1672, 0.0025510204
        %v1728 = vmul.f32 %v1673, 0.0025510204
        %v1729 = vmul.f32 %v1674, 0.0025510204
        %v1730 = vmul.f32 %v1675, 0.0025510204
        %v1731 = vmul.f32 %v1676, 0.0025510204
        %v1732 = vmul.f32 %v1677, 0.0025510204
        %v1733 = vmul.f32 %v1678, 0.0025510204
        %v1734 = vmul.f32 %v1679, 0.0025510204
        %v1735 = vmul.f32 %v1680, 0.0025510204
        %v1736 = vmul.f32 %v1681, 0.0025510204
        %v1737 = vmul.f32 %v1682, 0.0025510204
        %v1738 = vmul.f32 %v1683, 0.0025510204
        %v1739 = vmul.f32 %v1684, 0.0025510204
        %v1740 = vmul.f32 %v1685, 0.0025510204
        %v1741 = vmul.f32 %v1686, 0.0025510204
        %v1742 = vmul.f32 %v1687, 0.0025510204
        %v1743 = vmul.f32 %v1688, 0.0025510204
        %v1744 = vmul.f32 %v1689, 0.0025510204
        %v1745 = vmul.f32 %v1690, 0.0025510204
        %v1746 = vmul.f32 %v1691, 0.0025510204
        %v1747 = vmul.f32 %v1692, 0.0025510204
        %v1748 = vmul.f32 %v1693, 0.0025510204
        %v1749 = vmul.f32 %v1694, 0.0025510204
        %v1750 = vmul.f32 %v1695, 0.0025510204
        %v1751 = vmul.f32 %v1696, 0.0025510204
        %v1752 = vmul.f32 %v1697, 0.0025510204
        %v1753 = vmul.f32 %v1698, 0.0025510204
        %v1754 = vmul.f32 %v1699, 0.0025510204
        %v1755 = vmul.f32 %v1700, 0.0025510204
        %v1756 = vmul.f32 %v1701, 0.0025510204
        %v1757 = vmul.f32 %v1702, 0.0025510204
        %v1758 = vmul.f32 %v1703, 0.0025510204
        %v1759 = vmul.f32 %v1704, 0.0025510204
        %v1760 = vmul.f32 %v1705, 0.0025510204
        %v1761 = vmul.f32 %v1706, 0.0025510204
        %v1762 = vmul.f32 %v1707, 0.0025510204
        %v1763 = vmul.f32 %v1708, 0.0025510204
        %v1764 = vmul.f32 %v1709, 0.0025510204
        %v1765 = vmul.f32 %v1710, 0.0025510204
        %v1766 = vmul.f32 %v1711, 0.0025510204
        %v1767 = vmul.f32 %v1712, 0.0025510204
        %v1768 = vmul.f32 %v1713, 0.0025510204
        %v1769 = vmul.f32 %v1714, 0.0025510204
        %v1770 = vmul.f32 %v1715, 0.0025510204
        %v1771 = vmul.f32 %v1716, 0.0025510204
        %v1772 = vmul.f32 %v1717, 0.0025510204
        %v1773 = vsub.f32 %v1001, %v1718
        %v1774 = vsub.f32 %v1002, %v1718
        %v1775 = vsub.f32 %v1003, %v1719
        %v1776 = vsub.f32 %v1004, %v1719
        %v1777 = vsub.f32 %v1005, %v1720
        %v1778 = vsub.f32 %v1006, %v1720
        %v1779 = vsub.f32 %v1007, %v1721
        %v1780 = vsub.f32 %v1008, %v1721
        %v1781 = vsub.f32 %v1009, %v1722
        %v1782 = vsub.f32 %v1010, %v1722
        %v1783 = vsub.f32 %v1011, %v1723
        %v1784 = vsub.f32 %v1012, %v1723
        %v1785 = vsub.f32 %v1013, %v1724
        %v1786 = vsub.f32 %v1014, %v1724
        %v1787 = vsub.f32 %v1015, %v1725
        %v1788 = vsub.f32 %v1016, %v1725
        %v1789 = vsub.f32 %v1017, %v1726
        %v1790 = vsub.f32 %v1018, %v1726
        %v1791 = vsub.f32 %v1019, %v1727
        %v1792 = vsub.f32 %v1020, %v1727
        %v1793 = vsub.f32 %v1021, %v1728
        %v1794 = vsub.f32 %v1022, %v1728
        %v1795 = vsub.f32 %v1023, %v1729
        %v1796 = vsub.f32 %v1024, %v1729
        %v1797 = vsub.f32 %v1025, %v1730
        %v1798 = vsub.f32 %v1026, %v1730
        %v1799 = vsub.f32 %v1027, %v1731
        %v1800 = vsub.f32 %v1028, %v1731
        %v1801 = vsub.f32 %v1029, %v1732
        %v1802 = vsub.f32 %v1030, %v1732
        %v1803 = vsub.f32 %v1031, %v1733
        %v1804 = vsub.f32 %v1032, %v1733
        %v1805 = vsub.f32 %v1033, %v1734
        %v1806 = vsub.f32 %v1034, %v1734
        %v1807 = vsub.f32 %v1035, %v1735
        %v1808 = vsub.f32 %v1036, %v1735
        %v1809 = vsub.f32 %v1037, %v1736
        %v1810 = vsub.f32 %v1038, %v1736
        %v1811 = vsub.f32 %v1039, %v1737
        %v1812 = vsub.f32 %v1040, %v1737
        %v1813 = vsub.f32 %v1041, %v1738
        %v1814 = vsub.f32 %v1042, %v1738
        %v1815 = vsub.f32 %v1043, %v1739
        %v1816 = vsub.f32 %v1044, %v1739
        %v1817 = vsub.f32 %v1045, %v1740
        %v1818 = vsub.f32 %v1046, %v1740
        %v1819 = vsub.f32 %v1047, %v1741
        %v1820 = vsub.f32 %v1048, %v1741
        %v1821 = vsub.f32 %v1049, %v1742
        %v1822 = vsub.f32 %v1050, %v1742
        %v1823 = vsub.f32 %v1051, %v1743
        %v1824 = vsub.f32 %v1052, %v1743
        %v1825 = vsub.f32 %v1053, %v1744
        %v1826 = vsub.f32 %v1054, %v1744
        %v1827 = vsub.f32 %v1055, %v1745
        %v1828 = vsub.f32 %v1056, %v1745
        %v1829 = vsub.f32 %v1057, %v1746
        %v1830 = vsub.f32 %v1058, %v1746
        %v1831 = vsub.f32 %v1059, %v1747
        %v1832 = vsub.f32 %v1060, %v1747
        %v1833 = vsub.f32 %v1061, %v1748
        %v1834 = vsub.f32 %v1062, %v1748
        %v1835 = vsub.f32 %v1063, %v1749
        %v1836 = vsub.f32 %v1064, %v1749
        %v1837 = vsub.f32 %v1065, %v1750
        %v1838 = vsub.f32 %v1066, %v1750
        %v1839 = vsub.f32 %v1067, %v1751
        %v1840 = vsub.f32 %v1068, %v1751
        %v1841 = vsub.f32 %v1069, %v1752
        %v1842 = vsub.f32 %v1070, %v1752
        %v1843 = vsub.f32 %v1071, %v1753
        %v1844 = vsub.f32 %v1072, %v1753
        %v1845 = vsub.f32 %v1073, %v1754
        %v1846 = vsub.f32 %v1074, %v1754
        %v1847 = vsub.f32 %v1075, %v1755
        %v1848 = vsub.f32 %v1076, %v1755
        %v1849 = vsub.f32 %v1077, %v1756
        %v1850 = vsub.f32 %v1078, %v1756
        %v1851 = vsub.f32 %v1079, %v1757
        %v1852 = vsub.f32 %v1080, %v1757
        %v1853 = vsub.f32 %v1081, %v1758
        %v1854 = vsub.f32 %v1082, %v1758
        %v1855 = vsub.f32 %v1083, %v1759
        %v1856 = vsub.f32 %v1084, %v1759
        %v1857 = vsub.f32 %v1085, %v1760
        %v1858 = vsub.f32 %v1086, %v1760
        %v1859 = vsub.f32 %v1087, %v1761
        %v1860 = vsub.f32 %v1088, %v1761
        %v1861 = vsub.f32 %v1089, %v1762
        %v1862 = vsub.f32 %v1090, %v1762
        %v1863 = vsub.f32 %v1091, %v1763
        %v1864 = vsub.f32 %v1092, %v1763
        %v1865 = vsub.f32 %v1093, %v1764
        %v1866 = vsub.f32 %v1094, %v1764
        %v1867 = vsub.f32 %v1095, %v1765
        %v1868 = vsub.f32 %v1096, %v1765
        %v1869 = vsub.f32 %v1097, %v1766
        %v1870 = vsub.f32 %v1098, %v1766
        %v1871 = vsub.f32 %v1099, %v1767
        %v1872 = vsub.f32 %v1100, %v1767
        %v1873 = vsub.f32 %v1101, %v1768
        %v1874 = vsub.f32 %v1102, %v1768
        %v1875 = vsub.f32 %v1103, %v1769
        %v1876 = vsub.f32 %v1104, %v1769
        %v1877 = vsub.f32 %v1105, %v1770
        %v1878 = vsub.f32 %v1106, %v1770
        %v1879 = vsub.f32 %v1107, %v1771
        %v1880 = vsub.f32 %v1108, %v1771
        %v1881 = vsub.f32 %v1109, %v1772
        %v1882 = vsub.f32 %v1110, %v1772
        %v1883 = vmul.f32 %v1773, %v1773
        %v1884 = vmul.f32 %v1774, %v1774
        %v1885 = vmul.f32 %v1775, %v1775
        %v1886 = vmul.f32 %v1776, %v1776
        %v1887 = vmul.f32 %v1777, %v1777
        %v1888 = vmul.f32 %v1778, %v1778
        %v1889 = vmul.f32 %v1779, %v1779
        %v1890 = vmul.f32 %v1780, %v1780
        %v1891 = vmul.f32 %v1781, %v1781
        %v1892 = vmul.f32 %v1782, %v1782
        %v1893 = vmul.f32 %v1783, %v1783
        %v1894 = vmul.f32 %v1784, %v1784
        %v1895 = vmul.f32 %v1785, %v1785
        %v1896 = vmul.f32 %v1786, %v1786
        %v1897 = vmul.f32 %v1787, %v1787
        %v1898 = vmul.f32 %v1788, %v1788
        %v1899 = vmul.f32 %v1789, %v1789
        %v1900 = vmul.f32 %v1790, %v1790
        %v1901 = vmul.f32 %v1791, %v1791
        %v1902 = vmul.f32 %v1792, %v1792
        %v1903 = vmul.f32 %v1793, %v1793
        %v1904 = vmul.f32 %v1794, %v1794
        %v1905 = vmul.f32 %v1795, %v1795
        %v1906 = vmul.f32 %v1796, %v1796
        %v1907 = vmul.f32 %v1797, %v1797
        %v1908 = vmul.f32 %v1798, %v1798
        %v1909 = vmul.f32 %v1799, %v1799
        %v1910 = vmul.f32 %v1800, %v1800
        %v1911 = vmul.f32 %v1801, %v1801
        %v1912 = vmul.f32 %v1802, %v1802
        %v1913 = vmul.f32 %v1803, %v1803
        %v1914 = vmul.f32 %v1804, %v1804
        %v1915 = vmul.f32 %v1805, %v1805
        %v1916 = vmul.f32 %v1806, %v1806
        %v1917 = vmul.f32 %v1807, %v1807
        %v1918 = vmul.f32 %v1808, %v1808
        %v1919 = vmul.f32 %v1809, %v1809
        %v1920 = vmul.f32 %v1810, %v1810
        %v1921 = vmul.f32 %v1811, %v1811
        %v1922 = vmul.f32 %v1812, %v1812
        %v1923 = vmul.f32 %v1813, %v1813
        %v1924 = vmul.f32 %v1814, %v1814
        %v1925 = vmul.f32 %v1815, %v1815
        %v1926 = vmul.f32 %v1816, %v1816
        %v1927 = vmul.f32 %v1817, %v1817
        %v1928 = vmul.f32 %v1818, %v1818
        %v1929 = vmul.f32 %v1819, %v1819
        %v1930 = vmul.f32 %v1820, %v1820
        %v1931 = vmul.f32 %v1821, %v1821
        %v1932 = vmul.f32 %v1822, %v1822
        %v1933 = vmul.f32 %v1823, %v1823
        %v1934 = vmul.f32 %v1824, %v1824
        %v1935 = vmul.f32 %v1825, %v1825
        %v1936 = vmul.f32 %v1826, %v1826
        %v1937 = vmul.f32 %v1827, %v1827
        %v1938 = vmul.f32 %v1828, %v1828
        %v1939 = vmul.f32 %v1829, %v1829
        %v1940 = vmul.f32 %v1830, %v1830
        %v1941 = vmul.f32 %v1831, %v1831
        %v1942 = vmul.f32 %v1832, %v1832
        %v1943 = vmul.f32 %v1833, %v1833
        %v1944 = vmul.f32 %v1834, %v1834
        %v1945 = vmul.f32 %v1835, %v1835
        %v1946 = vmul.f32 %v1836, %v1836
        %v1947 = vmul.f32 %v1837, %v1837
        %v1948 = vmul.f32 %v1838, %v1838
        %v1949 = vmul.f32 %v1839, %v1839
        %v1950 = vmul.f32 %v1840, %v1840
        %v1951 = vmul.f32 %v1841, %v1841
        %v1952 = vmul.f32 %v1842, %v1842
        %v1953 = vmul.f32 %v1843, %v1843
        %v1954 = vmul.f32 %v1844, %v1844
        %v1955 = vmul.f32 %v1845, %v1845
        %v1956 = vmul.f32 %v1846, %v1846
        %v1957 = vmul.f32 %v1847, %v1847
        %v1958 = vmul.f32 %v1848, %v1848
        %v1959 = vmul.f32 %v1849, %v1849
        %v1960 = vmul.f32 %v1850, %v1850
        %v1961 = vmul.f32 %v1851, %v1851
        %v1962 = vmul.f32 %v1852, %v1852
        %v1963 = vmul.f32 %v1853, %v1853
        %v1964 = vmul.f32 %v1854, %v1854
        %v1965 = vmul.f32 %v1855, %v1855
        %v1966 = vmul.f32 %v1856, %v1856
        %v1967 = vmul.f32 %v1857, %v1857
        %v1968 = vmul.f32 %v1858, %v1858
        %v1969 = vmul.f32 %v1859, %v1859
        %v1970 = vmul.f32 %v1860, %v1860
        %v1971 = vmul.f32 %v1861, %v1861
        %v1972 = vmul.f32 %v1862, %v1862
        %v1973 = vmul.f32 %v1863, %v1863
        %v1974 = vmul.f32 %v1864, %v1864
        %v1975 = vmul.f32 %v1865, %v1865
        %v1976 = vmul.f32 %v1866, %v1866
        %v1977 = vmul.f32 %v1867, %v1867
        %v1978 = vmul.f32 %v1868, %v1868
        %v1979 = vmul.f32 %v1869, %v1869
        %v1980 = vmul.f32 %v1870, %v1870
        %v1981 = vmul.f32 %v1871, %v1871
        %v1982 = vmul.f32 %v1872, %v1872
        %v1983 = vmul.f32 %v1873, %v1873
        %v1984 = vmul.f32 %v1874, %v1874
        %v1985 = vmul.f32 %v1875, %v1875
        %v1986 = vmul.f32 %v1876, %v1876
        %v1987 = vmul.f32 %v1877, %v1877
        %v1988 = vmul.f32 %v1878, %v1878
        %v1989 = vmul.f32 %v1879, %v1879
        %v1990 = vmul.f32 %v1880, %v1880
        %v1991 = vmul.f32 %v1881, %v1881
        %v1992 = vmul.f32 %v1882, %v1882
        %v1993 = vsel %vm1111, %v1884, 0.0
        %v1994 = vadd.f32 %v1883, %v1993
        %1995 = vadd.xlane.f32.xlu0 %v1994
        %v1996 = vpop.xlane.xlu0 %1995
        %v1997 = vsel %vm1111, %v1886, 0.0
        %v1998 = vadd.f32 %v1885, %v1997
        %1999 = vadd.xlane.f32.xlu0 %v1998
        %v2000 = vpop.xlane.xlu0 %1999
        %v2001 = vsel %vm1111, %v1888, 0.0
        %v2002 = vadd.f32 %v1887, %v2001
        %2003 = vadd.xlane.f32.xlu0 %v2002
        %v2004 = vpop.xlane.xlu0 %2003
        %v2005 = vsel %vm1111, %v1890, 0.0
        %v2006 = vadd.f32 %v1889, %v2005
        %2007 = vadd.xlane.f32.xlu0 %v2006
        %v2008 = vpop.xlane.xlu0 %2007
        %v2009 = vsel %vm1111, %v1892, 0.0
        %v2010 = vadd.f32 %v1891, %v2009
        %2011 = vadd.xlane.f32.xlu0 %v2010
        %v2012 = vpop.xlane.xlu0 %2011
        %v2013 = vsel %vm1111, %v1894, 0.0
        %v2014 = vadd.f32 %v1893, %v2013
        %2015 = vadd.xlane.f32.xlu0 %v2014
        %v2016 = vpop.xlane.xlu0 %2015
        %v2017 = vsel %vm1111, %v1896, 0.0
        %v2018 = vadd.f32 %v1895, %v2017
        %2019 = vadd.xlane.f32.xlu0 %v2018
        %v2020 = vpop.xlane.xlu0 %2019
        %v2021 = vsel %vm1111, %v1898, 0.0
        %v2022 = vadd.f32 %v1897, %v2021
        %2023 = vadd.xlane.f32.xlu0 %v2022
        %v2024 = vpop.xlane.xlu0 %2023
        %v2025 = vsel %vm1111, %v1900, 0.0
        %v2026 = vadd.f32 %v1899, %v2025
        %2027 = vadd.xlane.f32.xlu0 %v2026
        %v2028 = vpop.xlane.xlu0 %2027
        %v2029 = vsel %vm1111, %v1902, 0.0
        %v2030 = vadd.f32 %v1901, %v2029
        %2031 = vadd.xlane.f32.xlu0 %v2030
        %v2032 = vpop.xlane.xlu0 %2031
        %v2033 = vsel %vm1111, %v1904, 0.0
        %v2034 = vadd.f32 %v1903, %v2033
        %2035 = vadd.xlane.f32.xlu0 %v2034
        %v2036 = vpop.xlane.xlu0 %2035
        %v2037 = vsel %vm1111, %v1906, 0.0
        %v2038 = vadd.f32 %v1905, %v2037
        %2039 = vadd.xlane.f32.xlu0 %v2038
        %v2040 = vpop.xlane.xlu0 %2039
        %v2041 = vsel %vm1111, %v1908, 0.0
        %v2042 = vadd.f32 %v1907, %v2041
        %2043 = vadd.xlane.f32.xlu0 %v2042
        %v2044 = vpop.xlane.xlu0 %2043
        %v2045 = vsel %vm1111, %v1910, 0.0
        %v2046 = vadd.f32 %v1909, %v2045
        %2047 = vadd.xlane.f32.xlu0 %v2046
        %v2048 = vpop.xlane.xlu0 %2047
        %v2049 = vsel %vm1111, %v1912, 0.0
        %v2050 = vadd.f32 %v1911, %v2049
        %2051 = vadd.xlane.f32.xlu0 %v2050
        %v2052 = vpop.xlane.xlu0 %2051
        %v2053 = vsel %vm1111, %v1914, 0.0
        %v2054 = vadd.f32 %v1913, %v2053
        %2055 = vadd.xlane.f32.xlu0 %v2054
        %v2056 = vpop.xlane.xlu0 %2055
        %v2057 = vsel %vm1111, %v1916, 0.0
        %v2058 = vadd.f32 %v1915, %v2057
        %2059 = vadd.xlane.f32.xlu0 %v2058
        %v2060 = vpop.xlane.xlu0 %2059
        %v2061 = vsel %vm1111, %v1918, 0.0
        %v2062 = vadd.f32 %v1917, %v2061
        %2063 = vadd.xlane.f32.xlu0 %v2062
        %v2064 = vpop.xlane.xlu0 %2063
        %v2065 = vsel %vm1111, %v1920, 0.0
        %v2066 = vadd.f32 %v1919, %v2065
        %2067 = vadd.xlane.f32.xlu0 %v2066
        %v2068 = vpop.xlane.xlu0 %2067
        %v2069 = vsel %vm1111, %v1922, 0.0
        %v2070 = vadd.f32 %v1921, %v2069
        %2071 = vadd.xlane.f32.xlu0 %v2070
        %v2072 = vpop.xlane.xlu0 %2071
        %v2073 = vsel %vm1111, %v1924, 0.0
        %v2074 = vadd.f32 %v1923, %v2073
        %2075 = vadd.xlane.f32.xlu0 %v2074
        %v2076 = vpop.xlane.xlu0 %2075
        %v2077 = vsel %vm1111, %v1926, 0.0
        %v2078 = vadd.f32 %v1925, %v2077
        %2079 = vadd.xlane.f32.xlu0 %v2078
        %v2080 = vpop.xlane.xlu0 %2079
        %v2081 = vsel %vm1111, %v1928, 0.0
        %v2082 = vadd.f32 %v1927, %v2081
        %2083 = vadd.xlane.f32.xlu0 %v2082
        %v2084 = vpop.xlane.xlu0 %2083
        %v2085 = vsel %vm1111, %v1930, 0.0
        %v2086 = vadd.f32 %v1929, %v2085
        %2087 = vadd.xlane.f32.xlu0 %v2086
        %v2088 = vpop.xlane.xlu0 %2087
        %v2089 = vsel %vm1111, %v1932, 0.0
        %v2090 = vadd.f32 %v1931, %v2089
        %2091 = vadd.xlane.f32.xlu0 %v2090
        %v2092 = vpop.xlane.xlu0 %2091
        %v2093 = vsel %vm1111, %v1934, 0.0
        %v2094 = vadd.f32 %v1933, %v2093
        %2095 = vadd.xlane.f32.xlu0 %v2094
        %v2096 = vpop.xlane.xlu0 %2095
        %v2097 = vsel %vm1111, %v1936, 0.0
        %v2098 = vadd.f32 %v1935, %v2097
        %2099 = vadd.xlane.f32.xlu0 %v2098
        %v2100 = vpop.xlane.xlu0 %2099
        %v2101 = vsel %vm1111, %v1938, 0.0
        %v2102 = vadd.f32 %v1937, %v2101
        %2103 = vadd.xlane.f32.xlu0 %v2102
        %v2104 = vpop.xlane.xlu0 %2103
        %v2105 = vsel %vm1111, %v1940, 0.0
        %v2106 = vadd.f32 %v1939, %v2105
        %2107 = vadd.xlane.f32.xlu0 %v2106
        %v2108 = vpop.xlane.xlu0 %2107
        %v2109 = vsel %vm1111, %v1942, 0.0
        %v2110 = vadd.f32 %v1941, %v2109
        %2111 = vadd.xlane.f32.xlu0 %v2110
        %v2112 = vpop.xlane.xlu0 %2111
        %v2113 = vsel %vm1111, %v1944, 0.0
        %v2114 = vadd.f32 %v1943, %v2113
        %2115 = vadd.xlane.f32.xlu0 %v2114
        %v2116 = vpop.xlane.xlu0 %2115
        %v2117 = vsel %vm1111, %v1946, 0.0
        %v2118 = vadd.f32 %v1945, %v2117
        %2119 = vadd.xlane.f32.xlu0 %v2118
        %v2120 = vpop.xlane.xlu0 %2119
        %v2121 = vsel %vm1111, %v1948, 0.0
        %v2122 = vadd.f32 %v1947, %v2121
        %2123 = vadd.xlane.f32.xlu0 %v2122
        %v2124 = vpop.xlane.xlu0 %2123
        %v2125 = vsel %vm1111, %v1950, 0.0
        %v2126 = vadd.f32 %v1949, %v2125
        %2127 = vadd.xlane.f32.xlu0 %v2126
        %v2128 = vpop.xlane.xlu0 %2127
        %v2129 = vsel %vm1111, %v1952, 0.0
        %v2130 = vadd.f32 %v1951, %v2129
        %2131 = vadd.xlane.f32.xlu0 %v2130
        %v2132 = vpop.xlane.xlu0 %2131
        %v2133 = vsel %vm1111, %v1954, 0.0
        %v2134 = vadd.f32 %v1953, %v2133
        %2135 = vadd.xlane.f32.xlu0 %v2134
        %v2136 = vpop.xlane.xlu0 %2135
        %v2137 = vsel %vm1111, %v1956, 0.0
        %v2138 = vadd.f32 %v1955, %v2137
        %2139 = vadd.xlane.f32.xlu0 %v2138
        %v2140 = vpop.xlane.xlu0 %2139
        %v2141 = vsel %vm1111, %v1958, 0.0
        %v2142 = vadd.f32 %v1957, %v2141
        %2143 = vadd.xlane.f32.xlu0 %v2142
        %v2144 = vpop.xlane.xlu0 %2143
        %v2145 = vsel %vm1111, %v1960, 0.0
        %v2146 = vadd.f32 %v1959, %v2145
        %2147 = vadd.xlane.f32.xlu0 %v2146
        %v2148 = vpop.xlane.xlu0 %2147
        %v2149 = vsel %vm1111, %v1962, 0.0
        %v2150 = vadd.f32 %v1961, %v2149
        %2151 = vadd.xlane.f32.xlu0 %v2150
        %v2152 = vpop.xlane.xlu0 %2151
        %v2153 = vsel %vm1111, %v1964, 0.0
        %v2154 = vadd.f32 %v1963, %v2153
        %2155 = vadd.xlane.f32.xlu0 %v2154
        %v2156 = vpop.xlane.xlu0 %2155
        %v2157 = vsel %vm1111, %v1966, 0.0
        %v2158 = vadd.f32 %v1965, %v2157
        %2159 = vadd.xlane.f32.xlu0 %v2158
        %v2160 = vpop.xlane.xlu0 %2159
        %v2161 = vsel %vm1111, %v1968, 0.0
        %v2162 = vadd.f32 %v1967, %v2161
        %2163 = vadd.xlane.f32.xlu0 %v2162
        %v2164 = vpop.xlane.xlu0 %2163
        %v2165 = vsel %vm1111, %v1970, 0.0
        %v2166 = vadd.f32 %v1969, %v2165
        %2167 = vadd.xlane.f32.xlu0 %v2166
        %v2168 = vpop.xlane.xlu0 %2167
        %v2169 = vsel %vm1111, %v1972, 0.0
        %v2170 = vadd.f32 %v1971, %v2169
        %2171 = vadd.xlane.f32.xlu0 %v2170
        %v2172 = vpop.xlane.xlu0 %2171
        %v2173 = vsel %vm1111, %v1974, 0.0
        %v2174 = vadd.f32 %v1973, %v2173
        %2175 = vadd.xlane.f32.xlu0 %v2174
        %v2176 = vpop.xlane.xlu0 %2175
        %v2177 = vsel %vm1111, %v1976, 0.0
        %v2178 = vadd.f32 %v1975, %v2177
        %2179 = vadd.xlane.f32.xlu0 %v2178
        %v2180 = vpop.xlane.xlu0 %2179
        %v2181 = vsel %vm1111, %v1978, 0.0
        %v2182 = vadd.f32 %v1977, %v2181
        %2183 = vadd.xlane.f32.xlu0 %v2182
        %v2184 = vpop.xlane.xlu0 %2183
        %v2185 = vsel %vm1111, %v1980, 0.0
        %v2186 = vadd.f32 %v1979, %v2185
        %2187 = vadd.xlane.f32.xlu0 %v2186
        %v2188 = vpop.xlane.xlu0 %2187
        %v2189 = vsel %vm1111, %v1982, 0.0
        %v2190 = vadd.f32 %v1981, %v2189
        %2191 = vadd.xlane.f32.xlu0 %v2190
        %v2192 = vpop.xlane.xlu0 %2191
        %v2193 = vsel %vm1111, %v1984, 0.0
        %v2194 = vadd.f32 %v1983, %v2193
        %2195 = vadd.xlane.f32.xlu0 %v2194
        %v2196 = vpop.xlane.xlu0 %2195
        %v2197 = vsel %vm1111, %v1986, 0.0
        %v2198 = vadd.f32 %v1985, %v2197
        %2199 = vadd.xlane.f32.xlu0 %v2198
        %v2200 = vpop.xlane.xlu0 %2199
        %v2201 = vsel %vm1111, %v1988, 0.0
        %v2202 = vadd.f32 %v1987, %v2201
        %2203 = vadd.xlane.f32.xlu0 %v2202
        %v2204 = vpop.xlane.xlu0 %2203
        %v2205 = vsel %vm1111, %v1990, 0.0
        %v2206 = vadd.f32 %v1989, %v2205
        %2207 = vadd.xlane.f32.xlu0 %v2206
        %v2208 = vpop.xlane.xlu0 %2207
        %v2209 = vsel %vm1111, %v1992, 0.0
        %v2210 = vadd.f32 %v1991, %v2209
        %2211 = vadd.xlane.f32.xlu0 %v2210
        %v2212 = vpop.xlane.xlu0 %2211
        %v2213 = vsub.f32 %v1333, %v1718
        %v2214 = vsub.f32 %v1334, %v1718
        %v2215 = vsub.f32 %v1335, %v1719
        %v2216 = vsub.f32 %v1336, %v1719
        %v2217 = vsub.f32 %v1337, %v1720
        %v2218 = vsub.f32 %v1338, %v1720
        %v2219 = vsub.f32 %v1339, %v1721
        %v2220 = vsub.f32 %v1340, %v1721
        %v2221 = vsub.f32 %v1341, %v1722
        %v2222 = vsub.f32 %v1342, %v1722
        %v2223 = vsub.f32 %v1343, %v1723
        %v2224 = vsub.f32 %v1344, %v1723
        %v2225 = vsub.f32 %v1345, %v1724
        %v2226 = vsub.f32 %v1346, %v1724
        %v2227 = vsub.f32 %v1347, %v1725
        %v2228 = vsub.f32 %v1348, %v1725
        %v2229 = vsub.f32 %v1349, %v1726
        %v2230 = vsub.f32 %v1350, %v1726
        %v2231 = vsub.f32 %v1351, %v1727
        %v2232 = vsub.f32 %v1352, %v1727
        %v2233 = vsub.f32 %v1353, %v1728
        %v2234 = vsub.f32 %v1354, %v1728
        %v2235 = vsub.f32 %v1355, %v1729
        %v2236 = vsub.f32 %v1356, %v1729
        %v2237 = vsub.f32 %v1357, %v1730
        %v2238 = vsub.f32 %v1358, %v1730
        %v2239 = vsub.f32 %v1359, %v1731
        %v2240 = vsub.f32 %v1360, %v1731
        %v2241 = vsub.f32 %v1361, %v1732
        %v2242 = vsub.f32 %v1362, %v1732
        %v2243 = vsub.f32 %v1363, %v1733
        %v2244 = vsub.f32 %v1364, %v1733
        %v2245 = vsub.f32 %v1365, %v1734
        %v2246 = vsub.f32 %v1366, %v1734
        %v2247 = vsub.f32 %v1367, %v1735
        %v2248 = vsub.f32 %v1368, %v1735
        %v2249 = vsub.f32 %v1369, %v1736
        %v2250 = vsub.f32 %v1370, %v1736
        %v2251 = vsub.f32 %v1371, %v1737
        %v2252 = vsub.f32 %v1372, %v1737
        %v2253 = vsub.f32 %v1373, %v1738
        %v2254 = vsub.f32 %v1374, %v1738
        %v2255 = vsub.f32 %v1375, %v1739
        %v2256 = vsub.f32 %v1376, %v1739
        %v2257 = vsub.f32 %v1377, %v1740
        %v2258 = vsub.f32 %v1378, %v1740
        %v2259 = vsub.f32 %v1379, %v1741
        %v2260 = vsub.f32 %v1380, %v1741
        %v2261 = vsub.f32 %v1381, %v1742
        %v2262 = vsub.f32 %v1382, %v1742
        %v2263 = vsub.f32 %v1383, %v1743
        %v2264 = vsub.f32 %v1384, %v1743
        %v2265 = vsub.f32 %v1385, %v1744
        %v2266 = vsub.f32 %v1386, %v1744
        %v2267 = vsub.f32 %v1387, %v1745
        %v2268 = vsub.f32 %v1388, %v1745
        %v2269 = vsub.f32 %v1389, %v1746
        %v2270 = vsub.f32 %v1390, %v1746
        %v2271 = vsub.f32 %v1391, %v1747
        %v2272 = vsub.f32 %v1392, %v1747
        %v2273 = vsub.f32 %v1393, %v1748
        %v2274 = vsub.f32 %v1394, %v1748
        %v2275 = vsub.f32 %v1395, %v1749
        %v2276 = vsub.f32 %v1396, %v1749
        %v2277 = vsub.f32 %v1397, %v1750
        %v2278 = vsub.f32 %v1398, %v1750
        %v2279 = vsub.f32 %v1399, %v1751
        %v2280 = vsub.f32 %v1400, %v1751
        %v2281 = vsub.f32 %v1401, %v1752
        %v2282 = vsub.f32 %v1402, %v1752
        %v2283 = vsub.f32 %v1403, %v1753
        %v2284 = vsub.f32 %v1404, %v1753
        %v2285 = vsub.f32 %v1405, %v1754
        %v2286 = vsub.f32 %v1406, %v1754
        %v2287 = vsub.f32 %v1407, %v1755
        %v2288 = vsub.f32 %v1408, %v1755
        %v2289 = vsub.f32 %v1409, %v1756
        %v2290 = vsub.f32 %v1410, %v1756
        %v2291 = vsub.f32 %v1411, %v1757
        %v2292 = vsub.f32 %v1412, %v1757
        %v2293 = vsub.f32 %v1413, %v1758
        %v2294 = vsub.f32 %v1414, %v1758
        %v2295 = vsub.f32 %v1415, %v1759
        %v2296 = vsub.f32 %v1416, %v1759
        %v2297 = vsub.f32 %v1417, %v1760
        %v2298 = vsub.f32 %v1418, %v1760
        %v2299 = vsub.f32 %v1419, %v1761
        %v2300 = vsub.f32 %v1420, %v1761
        %v2301 = vsub.f32 %v1421, %v1762
        %v2302 = vsub.f32 %v1422, %v1762
        %v2303 = vsub.f32 %v1423, %v1763
        %v2304 = vsub.f32 %v1424, %v1763
        %v2305 = vsub.f32 %v1425, %v1764
        %v2306 = vsub.f32 %v1426, %v1764
        %v2307 = vsub.f32 %v1427, %v1765
        %v2308 = vsub.f32 %v1428, %v1765
        %v2309 = vsub.f32 %v1429, %v1766
        %v2310 = vsub.f32 %v1430, %v1766
        %v2311 = vsub.f32 %v1431, %v1767
        %v2312 = vsub.f32 %v1432, %v1767
        %v2313 = vsub.f32 %v1433, %v1768
        %v2314 = vsub.f32 %v1434, %v1768
        %v2315 = vsub.f32 %v1435, %v1769
        %v2316 = vsub.f32 %v1436, %v1769
        %v2317 = vsub.f32 %v1437, %v1770
        %v2318 = vsub.f32 %v1438, %v1770
        %v2319 = vsub.f32 %v1439, %v1771
        %v2320 = vsub.f32 %v1440, %v1771
        %v2321 = vsub.f32 %v1441, %v1772
        %v2322 = vsub.f32 %v1442, %v1772
        %v2323 = vmul.f32 %v2213, %v2213
        %v2324 = vmul.f32 %v2214, %v2214
        %v2325 = vmul.f32 %v2215, %v2215
        %v2326 = vmul.f32 %v2216, %v2216
        %v2327 = vmul.f32 %v2217, %v2217
        %v2328 = vmul.f32 %v2218, %v2218
        %v2329 = vmul.f32 %v2219, %v2219
        %v2330 = vmul.f32 %v2220, %v2220
        %v2331 = vmul.f32 %v2221, %v2221
        %v2332 = vmul.f32 %v2222, %v2222
        %v2333 = vmul.f32 %v2223, %v2223
        %v2334 = vmul.f32 %v2224, %v2224
        %v2335 = vmul.f32 %v2225, %v2225
        %v2336 = vmul.f32 %v2226, %v2226
        %v2337 = vmul.f32 %v2227, %v2227
        %v2338 = vmul.f32 %v2228, %v2228
        %v2339 = vmul.f32 %v2229, %v2229
        %v2340 = vmul.f32 %v2230, %v2230
        %v2341 = vmul.f32 %v2231, %v2231
        %v2342 = vmul.f32 %v2232, %v2232
        %v2343 = vmul.f32 %v2233, %v2233
        %v2344 = vmul.f32 %v2234, %v2234
        %v2345 = vmul.f32 %v2235, %v2235
        %v2346 = vmul.f32 %v2236, %v2236
        %v2347 = vmul.f32 %v2237, %v2237
        %v2348 = vmul.f32 %v2238, %v2238
        %v2349 = vmul.f32 %v2239, %v2239
        %v2350 = vmul.f32 %v2240, %v2240
        %v2351 = vmul.f32 %v2241, %v2241
        %v2352 = vmul.f32 %v2242, %v2242
        %v2353 = vmul.f32 %v2243, %v2243
        %v2354 = vmul.f32 %v2244, %v2244
        %v2355 = vmul.f32 %v2245, %v2245
        %v2356 = vmul.f32 %v2246, %v2246
        %v2357 = vmul.f32 %v2247, %v2247
        %v2358 = vmul.f32 %v2248, %v2248
        %v2359 = vmul.f32 %v2249, %v2249
        %v2360 = vmul.f32 %v2250, %v2250
        %v2361 = vmul.f32 %v2251, %v2251
        %v2362 = vmul.f32 %v2252, %v2252
        %v2363 = vmul.f32 %v2253, %v2253
        %v2364 = vmul.f32 %v2254, %v2254
        %v2365 = vmul.f32 %v2255, %v2255
        %v2366 = vmul.f32 %v2256, %v2256
        %v2367 = vmul.f32 %v2257, %v2257
        %v2368 = vmul.f32 %v2258, %v2258
        %v2369 = vmul.f32 %v2259, %v2259
        %v2370 = vmul.f32 %v2260, %v2260
        %v2371 = vmul.f32 %v2261, %v2261
        %v2372 = vmul.f32 %v2262, %v2262
        %v2373 = vmul.f32 %v2263, %v2263
        %v2374 = vmul.f32 %v2264, %v2264
        %v2375 = vmul.f32 %v2265, %v2265
        %v2376 = vmul.f32 %v2266, %v2266
        %v2377 = vmul.f32 %v2267, %v2267
        %v2378 = vmul.f32 %v2268, %v2268
        %v2379 = vmul.f32 %v2269, %v2269
        %v2380 = vmul.f32 %v2270, %v2270
        %v2381 = vmul.f32 %v2271, %v2271
        %v2382 = vmul.f32 %v2272, %v2272
        %v2383 = vmul.f32 %v2273, %v2273
        %v2384 = vmul.f32 %v2274, %v2274
        %v2385 = vmul.f32 %v2275, %v2275
        %v2386 = vmul.f32 %v2276, %v2276
        %v2387 = vmul.f32 %v2277, %v2277
        %v2388 = vmul.f32 %v2278, %v2278
        %v2389 = vmul.f32 %v2279, %v2279
        %v2390 = vmul.f32 %v2280, %v2280
        %v2391 = vmul.f32 %v2281, %v2281
        %v2392 = vmul.f32 %v2282, %v2282
        %v2393 = vmul.f32 %v2283, %v2283
        %v2394 = vmul.f32 %v2284, %v2284
        %v2395 = vmul.f32 %v2285, %v2285
        %v2396 = vmul.f32 %v2286, %v2286
        %v2397 = vmul.f32 %v2287, %v2287
        %v2398 = vmul.f32 %v2288, %v2288
        %v2399 = vmul.f32 %v2289, %v2289
        %v2400 = vmul.f32 %v2290, %v2290
        %v2401 = vmul.f32 %v2291, %v2291
        %v2402 = vmul.f32 %v2292, %v2292
        %v2403 = vmul.f32 %v2293, %v2293
        %v2404 = vmul.f32 %v2294, %v2294
        %v2405 = vmul.f32 %v2295, %v2295
        %v2406 = vmul.f32 %v2296, %v2296
        %v2407 = vmul.f32 %v2297, %v2297
        %v2408 = vmul.f32 %v2298, %v2298
        %v2409 = vmul.f32 %v2299, %v2299
        %v2410 = vmul.f32 %v2300, %v2300
        %v2411 = vmul.f32 %v2301, %v2301
        %v2412 = vmul.f32 %v2302, %v2302
        %v2413 = vmul.f32 %v2303, %v2303
        %v2414 = vmul.f32 %v2304, %v2304
        %v2415 = vmul.f32 %v2305, %v2305
        %v2416 = vmul.f32 %v2306, %v2306
        %v2417 = vmul.f32 %v2307, %v2307
        %v2418 = vmul.f32 %v2308, %v2308
        %v2419 = vmul.f32 %v2309, %v2309
        %v2420 = vmul.f32 %v2310, %v2310
        %v2421 = vmul.f32 %v2311, %v2311
        %v2422 = vmul.f32 %v2312, %v2312
        %v2423 = vmul.f32 %v2313, %v2313
        %v2424 = vmul.f32 %v2314, %v2314
        %v2425 = vmul.f32 %v2315, %v2315
        %v2426 = vmul.f32 %v2316, %v2316
        %v2427 = vmul.f32 %v2317, %v2317
        %v2428 = vmul.f32 %v2318, %v2318
        %v2429 = vmul.f32 %v2319, %v2319
        %v2430 = vmul.f32 %v2320, %v2320
        %v2431 = vmul.f32 %v2321, %v2321
        %v2432 = vmul.f32 %v2322, %v2322
        %v2433 = vsel %vm1111, %v2324, 0.0
        %v2434 = vadd.f32 %v2323, %v2433
        %2435 = vadd.xlane.f32.xlu0 %v2434
        %v2436 = vpop.xlane.xlu0 %2435
        %v2437 = vsel %vm1111, %v2326, 0.0
        %v2438 = vadd.f32 %v2325, %v2437
        %2439 = vadd.xlane.f32.xlu0 %v2438
        %v2440 = vpop.xlane.xlu0 %2439
        %v2441 = vsel %vm1111, %v2328, 0.0
        %v2442 = vadd.f32 %v2327, %v2441
        %2443 = vadd.xlane.f32.xlu0 %v2442
        %v2444 = vpop.xlane.xlu0 %2443
        %v2445 = vsel %vm1111, %v2330, 0.0
        %v2446 = vadd.f32 %v2329, %v2445
        %2447 = vadd.xlane.f32.xlu0 %v2446
        %v2448 = vpop.xlane.xlu0 %2447
        %v2449 = vsel %vm1111, %v2332, 0.0
        %v2450 = vadd.f32 %v2331, %v2449
        %2451 = vadd.xlane.f32.xlu0 %v2450
        %v2452 = vpop.xlane.xlu0 %2451
        %v2453 = vsel %vm1111, %v2334, 0.0
        %v2454 = vadd.f32 %v2333, %v2453
        %2455 = vadd.xlane.f32.xlu0 %v2454
        %v2456 = vpop.xlane.xlu0 %2455
        %v2457 = vsel %vm1111, %v2336, 0.0
        %v2458 = vadd.f32 %v2335, %v2457
        %2459 = vadd.xlane.f32.xlu0 %v2458
        %v2460 = vpop.xlane.xlu0 %2459
        %v2461 = vsel %vm1111, %v2338, 0.0
        %v2462 = vadd.f32 %v2337, %v2461
        %2463 = vadd.xlane.f32.xlu0 %v2462
        %v2464 = vpop.xlane.xlu0 %2463
        %v2465 = vsel %vm1111, %v2340, 0.0
        %v2466 = vadd.f32 %v2339, %v2465
        %2467 = vadd.xlane.f32.xlu0 %v2466
        %v2468 = vpop.xlane.xlu0 %2467
        %v2469 = vsel %vm1111, %v2342, 0.0
        %v2470 = vadd.f32 %v2341, %v2469
        %2471 = vadd.xlane.f32.xlu0 %v2470
        %v2472 = vpop.xlane.xlu0 %2471
        %v2473 = vsel %vm1111, %v2344, 0.0
        %v2474 = vadd.f32 %v2343, %v2473
        %2475 = vadd.xlane.f32.xlu0 %v2474
        %v2476 = vpop.xlane.xlu0 %2475
        %v2477 = vsel %vm1111, %v2346, 0.0
        %v2478 = vadd.f32 %v2345, %v2477
        %2479 = vadd.xlane.f32.xlu0 %v2478
        %v2480 = vpop.xlane.xlu0 %2479
        %v2481 = vsel %vm1111, %v2348, 0.0
        %v2482 = vadd.f32 %v2347, %v2481
        %2483 = vadd.xlane.f32.xlu0 %v2482
        %v2484 = vpop.xlane.xlu0 %2483
        %v2485 = vsel %vm1111, %v2350, 0.0
        %v2486 = vadd.f32 %v2349, %v2485
        %2487 = vadd.xlane.f32.xlu0 %v2486
        %v2488 = vpop.xlane.xlu0 %2487
        %v2489 = vsel %vm1111, %v2352, 0.0
        %v2490 = vadd.f32 %v2351, %v2489
        %2491 = vadd.xlane.f32.xlu0 %v2490
        %v2492 = vpop.xlane.xlu0 %2491
        %v2493 = vsel %vm1111, %v2354, 0.0
        %v2494 = vadd.f32 %v2353, %v2493
        %2495 = vadd.xlane.f32.xlu0 %v2494
        %v2496 = vpop.xlane.xlu0 %2495
        %v2497 = vsel %vm1111, %v2356, 0.0
        %v2498 = vadd.f32 %v2355, %v2497
        %2499 = vadd.xlane.f32.xlu0 %v2498
        %v2500 = vpop.xlane.xlu0 %2499
        %v2501 = vsel %vm1111, %v2358, 0.0
        %v2502 = vadd.f32 %v2357, %v2501
        %2503 = vadd.xlane.f32.xlu0 %v2502
        %v2504 = vpop.xlane.xlu0 %2503
        %v2505 = vsel %vm1111, %v2360, 0.0
        %v2506 = vadd.f32 %v2359, %v2505
        %2507 = vadd.xlane.f32.xlu0 %v2506
        %v2508 = vpop.xlane.xlu0 %2507
        %v2509 = vsel %vm1111, %v2362, 0.0
        %v2510 = vadd.f32 %v2361, %v2509
        %2511 = vadd.xlane.f32.xlu0 %v2510
        %v2512 = vpop.xlane.xlu0 %2511
        %v2513 = vsel %vm1111, %v2364, 0.0
        %v2514 = vadd.f32 %v2363, %v2513
        %2515 = vadd.xlane.f32.xlu0 %v2514
        %v2516 = vpop.xlane.xlu0 %2515
        %v2517 = vsel %vm1111, %v2366, 0.0
        %v2518 = vadd.f32 %v2365, %v2517
        %2519 = vadd.xlane.f32.xlu0 %v2518
        %v2520 = vpop.xlane.xlu0 %2519
        %v2521 = vsel %vm1111, %v2368, 0.0
        %v2522 = vadd.f32 %v2367, %v2521
        %2523 = vadd.xlane.f32.xlu0 %v2522
        %v2524 = vpop.xlane.xlu0 %2523
        %v2525 = vsel %vm1111, %v2370, 0.0
        %v2526 = vadd.f32 %v2369, %v2525
        %2527 = vadd.xlane.f32.xlu0 %v2526
        %v2528 = vpop.xlane.xlu0 %2527
        %v2529 = vsel %vm1111, %v2372, 0.0
        %v2530 = vadd.f32 %v2371, %v2529
        %2531 = vadd.xlane.f32.xlu0 %v2530
        %v2532 = vpop.xlane.xlu0 %2531
        %v2533 = vsel %vm1111, %v2374, 0.0
        %v2534 = vadd.f32 %v2373, %v2533
        %2535 = vadd.xlane.f32.xlu0 %v2534
        %v2536 = vpop.xlane.xlu0 %2535
        %v2537 = vsel %vm1111, %v2376, 0.0
        %v2538 = vadd.f32 %v2375, %v2537
        %2539 = vadd.xlane.f32.xlu0 %v2538
        %v2540 = vpop.xlane.xlu0 %2539
        %v2541 = vsel %vm1111, %v2378, 0.0
        %v2542 = vadd.f32 %v2377, %v2541
        %2543 = vadd.xlane.f32.xlu0 %v2542
        %v2544 = vpop.xlane.xlu0 %2543
        %v2545 = vsel %vm1111, %v2380, 0.0
        %v2546 = vadd.f32 %v2379, %v2545
        %2547 = vadd.xlane.f32.xlu0 %v2546
        %v2548 = vpop.xlane.xlu0 %2547
        %v2549 = vsel %vm1111, %v2382, 0.0
        %v2550 = vadd.f32 %v2381, %v2549
        %2551 = vadd.xlane.f32.xlu0 %v2550
        %v2552 = vpop.xlane.xlu0 %2551
        %v2553 = vsel %vm1111, %v2384, 0.0
        %v2554 = vadd.f32 %v2383, %v2553
        %2555 = vadd.xlane.f32.xlu0 %v2554
        %v2556 = vpop.xlane.xlu0 %2555
        %v2557 = vsel %vm1111, %v2386, 0.0
        %v2558 = vadd.f32 %v2385, %v2557
        %2559 = vadd.xlane.f32.xlu0 %v2558
        %v2560 = vpop.xlane.xlu0 %2559
        %v2561 = vsel %vm1111, %v2388, 0.0
        %v2562 = vadd.f32 %v2387, %v2561
        %2563 = vadd.xlane.f32.xlu0 %v2562
        %v2564 = vpop.xlane.xlu0 %2563
        %v2565 = vsel %vm1111, %v2390, 0.0
        %v2566 = vadd.f32 %v2389, %v2565
        %2567 = vadd.xlane.f32.xlu0 %v2566
        %v2568 = vpop.xlane.xlu0 %2567
        %v2569 = vsel %vm1111, %v2392, 0.0
        %v2570 = vadd.f32 %v2391, %v2569
        %2571 = vadd.xlane.f32.xlu0 %v2570
        %v2572 = vpop.xlane.xlu0 %2571
        %v2573 = vsel %vm1111, %v2394, 0.0
        %v2574 = vadd.f32 %v2393, %v2573
        %2575 = vadd.xlane.f32.xlu0 %v2574
        %v2576 = vpop.xlane.xlu0 %2575
        %v2577 = vsel %vm1111, %v2396, 0.0
        %v2578 = vadd.f32 %v2395, %v2577
        %2579 = vadd.xlane.f32.xlu0 %v2578
        %v2580 = vpop.xlane.xlu0 %2579
        %v2581 = vsel %vm1111, %v2398, 0.0
        %v2582 = vadd.f32 %v2397, %v2581
        %2583 = vadd.xlane.f32.xlu0 %v2582
        %v2584 = vpop.xlane.xlu0 %2583
        %v2585 = vsel %vm1111, %v2400, 0.0
        %v2586 = vadd.f32 %v2399, %v2585
        %2587 = vadd.xlane.f32.xlu0 %v2586
        %v2588 = vpop.xlane.xlu0 %2587
        %v2589 = vsel %vm1111, %v2402, 0.0
        %v2590 = vadd.f32 %v2401, %v2589
        %2591 = vadd.xlane.f32.xlu0 %v2590
        %v2592 = vpop.xlane.xlu0 %2591
        %v2593 = vsel %vm1111, %v2404, 0.0
        %v2594 = vadd.f32 %v2403, %v2593
        %2595 = vadd.xlane.f32.xlu0 %v2594
        %v2596 = vpop.xlane.xlu0 %2595
        %v2597 = vsel %vm1111, %v2406, 0.0
        %v2598 = vadd.f32 %v2405, %v2597
        %2599 = vadd.xlane.f32.xlu0 %v2598
        %v2600 = vpop.xlane.xlu0 %2599
        %v2601 = vsel %vm1111, %v2408, 0.0
        %v2602 = vadd.f32 %v2407, %v2601
        %2603 = vadd.xlane.f32.xlu0 %v2602
        %v2604 = vpop.xlane.xlu0 %2603
        %v2605 = vsel %vm1111, %v2410, 0.0
        %v2606 = vadd.f32 %v2409, %v2605
        %2607 = vadd.xlane.f32.xlu0 %v2606
        %v2608 = vpop.xlane.xlu0 %2607
        %v2609 = vsel %vm1111, %v2412, 0.0
        %v2610 = vadd.f32 %v2411, %v2609
        %2611 = vadd.xlane.f32.xlu0 %v2610
        %v2612 = vpop.xlane.xlu0 %2611
        %v2613 = vsel %vm1111, %v2414, 0.0
        %v2614 = vadd.f32 %v2413, %v2613
        %2615 = vadd.xlane.f32.xlu0 %v2614
        %v2616 = vpop.xlane.xlu0 %2615
        %v2617 = vsel %vm1111, %v2416, 0.0
        %v2618 = vadd.f32 %v2415, %v2617
        %2619 = vadd.xlane.f32.xlu0 %v2618
        %v2620 = vpop.xlane.xlu0 %2619
        %v2621 = vsel %vm1111, %v2418, 0.0
        %v2622 = vadd.f32 %v2417, %v2621
        %2623 = vadd.xlane.f32.xlu0 %v2622
        %v2624 = vpop.xlane.xlu0 %2623
        %v2625 = vsel %vm1111, %v2420, 0.0
        %v2626 = vadd.f32 %v2419, %v2625
        %2627 = vadd.xlane.f32.xlu0 %v2626
        %v2628 = vpop.xlane.xlu0 %2627
        %v2629 = vsel %vm1111, %v2422, 0.0
        %v2630 = vadd.f32 %v2421, %v2629
        %2631 = vadd.xlane.f32.xlu0 %v2630
        %v2632 = vpop.xlane.xlu0 %2631
        %v2633 = vsel %vm1111, %v2424, 0.0
        %v2634 = vadd.f32 %v2423, %v2633
        %2635 = vadd.xlane.f32.xlu0 %v2634
        %v2636 = vpop.xlane.xlu0 %2635
        %v2637 = vsel %vm1111, %v2426, 0.0
        %v2638 = vadd.f32 %v2425, %v2637
        %2639 = vadd.xlane.f32.xlu0 %v2638
        %v2640 = vpop.xlane.xlu0 %2639
        %v2641 = vsel %vm1111, %v2428, 0.0
        %v2642 = vadd.f32 %v2427, %v2641
        %2643 = vadd.xlane.f32.xlu0 %v2642
        %v2644 = vpop.xlane.xlu0 %2643
        %v2645 = vsel %vm1111, %v2430, 0.0
        %v2646 = vadd.f32 %v2429, %v2645
        %2647 = vadd.xlane.f32.xlu0 %v2646
        %v2648 = vpop.xlane.xlu0 %2647
        %v2649 = vsel %vm1111, %v2432, 0.0
        %v2650 = vadd.f32 %v2431, %v2649
        %2651 = vadd.xlane.f32.xlu0 %v2650
        %v2652 = vpop.xlane.xlu0 %2651
        %v2653 = vadd.f32 %v1996, %v2436
        %v2654 = vadd.f32 %v2000, %v2440
        %v2655 = vadd.f32 %v2004, %v2444
        %v2656 = vadd.f32 %v2008, %v2448
        %v2657 = vadd.f32 %v2012, %v2452
        %v2658 = vadd.f32 %v2016, %v2456
        %v2659 = vadd.f32 %v2020, %v2460
        %v2660 = vadd.f32 %v2024, %v2464
        %v2661 = vadd.f32 %v2028, %v2468
        %v2662 = vadd.f32 %v2032, %v2472
        %v2663 = vadd.f32 %v2036, %v2476
        %v2664 = vadd.f32 %v2040, %v2480
        %v2665 = vadd.f32 %v2044, %v2484
        %v2666 = vadd.f32 %v2048, %v2488
        %v2667 = vadd.f32 %v2052, %v2492
        %v2668 = vadd.f32 %v2056, %v2496
        %v2669 = vadd.f32 %v2060, %v2500
        %v2670 = vadd.f32 %v2064, %v2504
        %v2671 = vadd.f32 %v2068, %v2508
        %v2672 = vadd.f32 %v2072, %v2512
        %v2673 = vadd.f32 %v2076, %v2516
        %v2674 = vadd.f32 %v2080, %v2520
        %v2675 = vadd.f32 %v2084, %v2524
        %v2676 = vadd.f32 %v2088, %v2528
        %v2677 = vadd.f32 %v2092, %v2532
        %v2678 = vadd.f32 %v2096, %v2536
        %v2679 = vadd.f32 %v2100, %v2540
        %v2680 = vadd.f32 %v2104, %v2544
        %v2681 = vadd.f32 %v2108, %v2548
        %v2682 = vadd.f32 %v2112, %v2552
        %v2683 = vadd.f32 %v2116, %v2556
        %v2684 = vadd.f32 %v2120, %v2560
        %v2685 = vadd.f32 %v2124, %v2564
        %v2686 = vadd.f32 %v2128, %v2568
        %v2687 = vadd.f32 %v2132, %v2572
        %v2688 = vadd.f32 %v2136, %v2576
        %v2689 = vadd.f32 %v2140, %v2580
        %v2690 = vadd.f32 %v2144, %v2584
        %v2691 = vadd.f32 %v2148, %v2588
        %v2692 = vadd.f32 %v2152, %v2592
        %v2693 = vadd.f32 %v2156, %v2596
        %v2694 = vadd.f32 %v2160, %v2600
        %v2695 = vadd.f32 %v2164, %v2604
        %v2696 = vadd.f32 %v2168, %v2608
        %v2697 = vadd.f32 %v2172, %v2612
        %v2698 = vadd.f32 %v2176, %v2616
        %v2699 = vadd.f32 %v2180, %v2620
        %v2700 = vadd.f32 %v2184, %v2624
        %v2701 = vadd.f32 %v2188, %v2628
        %v2702 = vadd.f32 %v2192, %v2632
        %v2703 = vadd.f32 %v2196, %v2636
        %v2704 = vadd.f32 %v2200, %v2640
        %v2705 = vadd.f32 %v2204, %v2644
        %v2706 = vadd.f32 %v2208, %v2648
        %v2707 = vadd.f32 %v2212, %v2652
        %v2708 = vmul.f32 %v2653, 0.0025510204
        %v2709 = vmul.f32 %v2654, 0.0025510204
        %v2710 = vmul.f32 %v2655, 0.0025510204
        %v2711 = vmul.f32 %v2656, 0.0025510204
        %v2712 = vmul.f32 %v2657, 0.0025510204
        %v2713 = vmul.f32 %v2658, 0.0025510204
        %v2714 = vmul.f32 %v2659, 0.0025510204
        %v2715 = vmul.f32 %v2660, 0.0025510204
        %v2716 = vmul.f32 %v2661, 0.0025510204
        %v2717 = vmul.f32 %v2662, 0.0025510204
        %v2718 = vmul.f32 %v2663, 0.0025510204
        %v2719 = vmul.f32 %v2664, 0.0025510204
        %v2720 = vmul.f32 %v2665, 0.0025510204
        %v2721 = vmul.f32 %v2666, 0.0025510204
        %v2722 = vmul.f32 %v2667, 0.0025510204
        %v2723 = vmul.f32 %v2668, 0.0025510204
        %v2724 = vmul.f32 %v2669, 0.0025510204
        %v2725 = vmul.f32 %v2670, 0.0025510204
        %v2726 = vmul.f32 %v2671, 0.0025510204
        %v2727 = vmul.f32 %v2672, 0.0025510204
        %v2728 = vmul.f32 %v2673, 0.0025510204
        %v2729 = vmul.f32 %v2674, 0.0025510204
        %v2730 = vmul.f32 %v2675, 0.0025510204
        %v2731 = vmul.f32 %v2676, 0.0025510204
        %v2732 = vmul.f32 %v2677, 0.0025510204
        %v2733 = vmul.f32 %v2678, 0.0025510204
        %v2734 = vmul.f32 %v2679, 0.0025510204
        %v2735 = vmul.f32 %v2680, 0.0025510204
        %v2736 = vmul.f32 %v2681, 0.0025510204
        %v2737 = vmul.f32 %v2682, 0.0025510204
        %v2738 = vmul.f32 %v2683, 0.0025510204
        %v2739 = vmul.f32 %v2684, 0.0025510204
        %v2740 = vmul.f32 %v2685, 0.0025510204
        %v2741 = vmul.f32 %v2686, 0.0025510204
        %v2742 = vmul.f32 %v2687, 0.0025510204
        %v2743 = vmul.f32 %v2688, 0.0025510204
        %v2744 = vmul.f32 %v2689, 0.0025510204
        %v2745 = vmul.f32 %v2690, 0.0025510204
        %v2746 = vmul.f32 %v2691, 0.0025510204
        %v2747 = vmul.f32 %v2692, 0.0025510204
        %v2748 = vmul.f32 %v2693, 0.0025510204
        %v2749 = vmul.f32 %v2694, 0.0025510204
        %v2750 = vmul.f32 %v2695, 0.0025510204
        %v2751 = vmul.f32 %v2696, 0.0025510204
        %v2752 = vmul.f32 %v2697, 0.0025510204
        %v2753 = vmul.f32 %v2698, 0.0025510204
        %v2754 = vmul.f32 %v2699, 0.0025510204
        %v2755 = vmul.f32 %v2700, 0.0025510204
        %v2756 = vmul.f32 %v2701, 0.0025510204
        %v2757 = vmul.f32 %v2702, 0.0025510204
        %v2758 = vmul.f32 %v2703, 0.0025510204
        %v2759 = vmul.f32 %v2704, 0.0025510204
        %v2760 = vmul.f32 %v2705, 0.0025510204
        %v2761 = vmul.f32 %v2706, 0.0025510204
        %v2762 = vmul.f32 %v2707, 0.0025510204
        %v2763 = vld [vmem:[%s2] sm:$0xff]
        %v2764 = vld [vmem:[%s2 + $0x8] sm:$0xff]
        %v2765 = vld [vmem:[%s2 + $0x10] sm:$0xff]
        %v2766 = vld [vmem:[%s2 + $0x18] sm:$0xff]
        %v2767 = vld [vmem:[%s2 + $0x20] sm:$0xff]
        %v2768 = vld [vmem:[%s2 + $0x28] sm:$0xff]
        %v2769 = vld [vmem:[%s2 + $0x30] sm:$0xff]
        %v2770 = vld [vmem:[%s2 + $0x38] sm:$0xff]
        %v2771 = vld [vmem:[%s2 + $0x40] sm:$0xff]
        %v2772 = vld [vmem:[%s2 + $0x48] sm:$0xff]
        %v2773 = vld [vmem:[%s2 + $0x50] sm:$0xff]
        %v2774 = vld [vmem:[%s2 + $0x58] sm:$0xff]
        %v2775 = vld [vmem:[%s2 + $0x60] sm:$0xff]
        %v2776 = vld [vmem:[%s2 + $0x68] sm:$0xff]
        %v2777 = vld [vmem:[%s2 + $0x70] sm:$0xff]
        %v2778 = vld [vmem:[%s2 + $0x78] sm:$0xff]
        %v2779 = vld [vmem:[%s2 + $0x80] sm:$0xff]
        %v2780 = vld [vmem:[%s2 + $0x88] sm:$0xff]
        %v2781 = vld [vmem:[%s2 + $0x90] sm:$0xff]
        %v2782 = vld [vmem:[%s2 + $0x98] sm:$0xff]
        %v2783 = vld [vmem:[%s2 + $0xa0] sm:$0xff]
        %v2784 = vld [vmem:[%s2 + $0xa8] sm:$0xff]
        %v2785 = vld [vmem:[%s2 + $0xb0] sm:$0xff]
        %v2786 = vld [vmem:[%s2 + $0xb8] sm:$0xff]
        %v2787 = vld [vmem:[%s2 + $0xc0] sm:$0xff]
        %v2788 = vld [vmem:[%s2 + $0xc8] sm:$0xff]
        %v2789 = vld [vmem:[%s2 + $0xd0] sm:$0xff]
        %v2790 = vld [vmem:[%s2 + $0xd8] sm:$0xff]
        %v2791 = vld [vmem:[%s2 + $0xe0] sm:$0xff]
        %v2792 = vld [vmem:[%s2 + $0xe8] sm:$0xff]
        %v2793 = vld [vmem:[%s2 + $0xf0] sm:$0xff]
        %v2794 = vld [vmem:[%s2 + $0xf8] sm:$0xff]
        %v2795 = vld [vmem:[%s2 + $0x100] sm:$0xff]
        %v2796 = vld [vmem:[%s2 + $0x108] sm:$0xff]
        %v2797 = vld [vmem:[%s2 + $0x110] sm:$0xff]
        %v2798 = vld [vmem:[%s2 + $0x118] sm:$0xff]
        %v2799 = vld [vmem:[%s2 + $0x120] sm:$0xff]
        %v2800 = vld [vmem:[%s2 + $0x128] sm:$0xff]
        %v2801 = vld [vmem:[%s2 + $0x130] sm:$0xff]
        %v2802 = vld [vmem:[%s2 + $0x138] sm:$0xff]
        %v2803 = vld [vmem:[%s2 + $0x140] sm:$0xff]
        %v2804 = vld [vmem:[%s2 + $0x148] sm:$0xff]
        %v2805 = vld [vmem:[%s2 + $0x150] sm:$0xff]
        %v2806 = vld [vmem:[%s2 + $0x158] sm:$0xff]
        %v2807 = vld [vmem:[%s2 + $0x160] sm:$0xff]
        %v2808 = vld [vmem:[%s2 + $0x168] sm:$0xff]
        %v2809 = vld [vmem:[%s2 + $0x170] sm:$0xff]
        %v2810 = vld [vmem:[%s2 + $0x178] sm:$0xff]
        %v2811 = vld [vmem:[%s2 + $0x180] sm:$0xff]
        %v2812 = vld [vmem:[%s2 + $0x188] sm:$0xff]
        %v2813 = vld [vmem:[%s2 + $0x190] sm:$0xff]
        %v2814 = vld [vmem:[%s2 + $0x198] sm:$0xff]
        %v2815 = vld [vmem:[%s2 + $0x1a0] sm:$0xff]
        %v2816 = vld [vmem:[%s2 + $0x1a8] sm:$0xff]
        %v2817 = vld [vmem:[%s2 + $0x1b0] sm:$0xff]
        %v2818 = vadd.f32 %v2708, 1e-05
        %v2819 = vadd.f32 %v2709, 1e-05
        %v2820 = vadd.f32 %v2710, 1e-05
        %v2821 = vadd.f32 %v2711, 1e-05
        %v2822 = vadd.f32 %v2712, 1e-05
        %v2823 = vadd.f32 %v2713, 1e-05
        %v2824 = vadd.f32 %v2714, 1e-05
        %v2825 = vadd.f32 %v2715, 1e-05
        %v2826 = vadd.f32 %v2716, 1e-05
        %v2827 = vadd.f32 %v2717, 1e-05
        %v2828 = vadd.f32 %v2718, 1e-05
        %v2829 = vadd.f32 %v2719, 1e-05
        %v2830 = vadd.f32 %v2720, 1e-05
        %v2831 = vadd.f32 %v2721, 1e-05
        %v2832 = vadd.f32 %v2722, 1e-05
        %v2833 = vadd.f32 %v2723, 1e-05
        %v2834 = vadd.f32 %v2724, 1e-05
        %v2835 = vadd.f32 %v2725, 1e-05
        %v2836 = vadd.f32 %v2726, 1e-05
        %v2837 = vadd.f32 %v2727, 1e-05
        %v2838 = vadd.f32 %v2728, 1e-05
        %v2839 = vadd.f32 %v2729, 1e-05
        %v2840 = vadd.f32 %v2730, 1e-05
        %v2841 = vadd.f32 %v2731, 1e-05
        %v2842 = vadd.f32 %v2732, 1e-05
        %v2843 = vadd.f32 %v2733, 1e-05
        %v2844 = vadd.f32 %v2734, 1e-05
        %v2845 = vadd.f32 %v2735, 1e-05
        %v2846 = vadd.f32 %v2736, 1e-05
        %v2847 = vadd.f32 %v2737, 1e-05
        %v2848 = vadd.f32 %v2738, 1e-05
        %v2849 = vadd.f32 %v2739, 1e-05
        %v2850 = vadd.f32 %v2740, 1e-05
        %v2851 = vadd.f32 %v2741, 1e-05
        %v2852 = vadd.f32 %v2742, 1e-05
        %v2853 = vadd.f32 %v2743, 1e-05
        %v2854 = vadd.f32 %v2744, 1e-05
        %v2855 = vadd.f32 %v2745, 1e-05
        %v2856 = vadd.f32 %v2746, 1e-05
        %v2857 = vadd.f32 %v2747, 1e-05
        %v2858 = vadd.f32 %v2748, 1e-05
        %v2859 = vadd.f32 %v2749, 1e-05
        %v2860 = vadd.f32 %v2750, 1e-05
        %v2861 = vadd.f32 %v2751, 1e-05
        %v2862 = vadd.f32 %v2752, 1e-05
        %v2863 = vadd.f32 %v2753, 1e-05
        %v2864 = vadd.f32 %v2754, 1e-05
        %v2865 = vadd.f32 %v2755, 1e-05
        %v2866 = vadd.f32 %v2756, 1e-05
        %v2867 = vadd.f32 %v2757, 1e-05
        %v2868 = vadd.f32 %v2758, 1e-05
        %v2869 = vadd.f32 %v2759, 1e-05
        %v2870 = vadd.f32 %v2760, 1e-05
        %v2871 = vadd.f32 %v2761, 1e-05
        %v2872 = vadd.f32 %v2762, 1e-05
        %v2873 = vrsqrt.pop %v2818
        %v2874 = vrsqrt.pop %v2819
        %v2875 = vrsqrt.pop %v2820
        %v2876 = vrsqrt.pop %v2821
        %v2877 = vrsqrt.pop %v2822
        %v2878 = vrsqrt.pop %v2823
        %v2879 = vrsqrt.pop %v2824
        %v2880 = vrsqrt.pop %v2825
        %v2881 = vrsqrt.pop %v2826
        %v2882 = vrsqrt.pop %v2827
        %v2883 = vrsqrt.pop %v2828
        %v2884 = vrsqrt.pop %v2829
        %v2885 = vrsqrt.pop %v2830
        %v2886 = vrsqrt.pop %v2831
        %v2887 = vrsqrt.pop %v2832
        %v2888 = vrsqrt.pop %v2833
        %v2889 = vrsqrt.pop %v2834
        %v2890 = vrsqrt.pop %v2835
        %v2891 = vrsqrt.pop %v2836
        %v2892 = vrsqrt.pop %v2837
        %v2893 = vrsqrt.pop %v2838
        %v2894 = vrsqrt.pop %v2839
        %v2895 = vrsqrt.pop %v2840
        %v2896 = vrsqrt.pop %v2841
        %v2897 = vrsqrt.pop %v2842
        %v2898 = vrsqrt.pop %v2843
        %v2899 = vrsqrt.pop %v2844
        %v2900 = vrsqrt.pop %v2845
        %v2901 = vrsqrt.pop %v2846
        %v2902 = vrsqrt.pop %v2847
        %v2903 = vrsqrt.pop %v2848
        %v2904 = vrsqrt.pop %v2849
        %v2905 = vrsqrt.pop %v2850
        %v2906 = vrsqrt.pop %v2851
        %v2907 = vrsqrt.pop %v2852
        %v2908 = vrsqrt.pop %v2853
        %v2909 = vrsqrt.pop %v2854
        %v2910 = vrsqrt.pop %v2855
        %v2911 = vrsqrt.pop %v2856
        %v2912 = vrsqrt.pop %v2857
        %v2913 = vrsqrt.pop %v2858
        %v2914 = vrsqrt.pop %v2859
        %v2915 = vrsqrt.pop %v2860
        %v2916 = vrsqrt.pop %v2861
        %v2917 = vrsqrt.pop %v2862
        %v2918 = vrsqrt.pop %v2863
        %v2919 = vrsqrt.pop %v2864
        %v2920 = vrsqrt.pop %v2865
        %v2921 = vrsqrt.pop %v2866
        %v2922 = vrsqrt.pop %v2867
        %v2923 = vrsqrt.pop %v2868
        %v2924 = vrsqrt.pop %v2869
        %v2925 = vrsqrt.pop %v2870
        %v2926 = vrsqrt.pop %v2871
        %v2927 = vrsqrt.pop %v2872
        %v2928 = vmul.f32 %v2763, %v2873
        %v2929 = vmul.f32 %v2764, %v2874
        %v2930 = vmul.f32 %v2765, %v2875
        %v2931 = vmul.f32 %v2766, %v2876
        %v2932 = vmul.f32 %v2767, %v2877
        %v2933 = vmul.f32 %v2768, %v2878
        %v2934 = vmul.f32 %v2769, %v2879
        %v2935 = vmul.f32 %v2770, %v2880
        %v2936 = vmul.f32 %v2771, %v2881
        %v2937 = vmul.f32 %v2772, %v2882
        %v2938 = vmul.f32 %v2773, %v2883
        %v2939 = vmul.f32 %v2774, %v2884
        %v2940 = vmul.f32 %v2775, %v2885
        %v2941 = vmul.f32 %v2776, %v2886
        %v2942 = vmul.f32 %v2777, %v2887
        %v2943 = vmul.f32 %v2778, %v2888
        %v2944 = vmul.f32 %v2779, %v2889
        %v2945 = vmul.f32 %v2780, %v2890
        %v2946 = vmul.f32 %v2781, %v2891
        %v2947 = vmul.f32 %v2782, %v2892
        %v2948 = vmul.f32 %v2783, %v2893
        %v2949 = vmul.f32 %v2784, %v2894
        %v2950 = vmul.f32 %v2785, %v2895
        %v2951 = vmul.f32 %v2786, %v2896
        %v2952 = vmul.f32 %v2787, %v2897
        %v2953 = vmul.f32 %v2788, %v2898
        %v2954 = vmul.f32 %v2789, %v2899
        %v2955 = vmul.f32 %v2790, %v2900
        %v2956 = vmul.f32 %v2791, %v2901
        %v2957 = vmul.f32 %v2792, %v2902
        %v2958 = vmul.f32 %v2793, %v2903
        %v2959 = vmul.f32 %v2794, %v2904
        %v2960 = vmul.f32 %v2795, %v2905
        %v2961 = vmul.f32 %v2796, %v2906
        %v2962 = vmul.f32 %v2797, %v2907
        %v2963 = vmul.f32 %v2798, %v2908
        %v2964 = vmul.f32 %v2799, %v2909
        %v2965 = vmul.f32 %v2800, %v2910
        %v2966 = vmul.f32 %v2801, %v2911
        %v2967 = vmul.f32 %v2802, %v2912
        %v2968 = vmul.f32 %v2803, %v2913
        %v2969 = vmul.f32 %v2804, %v2914
        %v2970 = vmul.f32 %v2805, %v2915
        %v2971 = vmul.f32 %v2806, %v2916
        %v2972 = vmul.f32 %v2807, %v2917
        %v2973 = vmul.f32 %v2808, %v2918
        %v2974 = vmul.f32 %v2809, %v2919
        %v2975 = vmul.f32 %v2810, %v2920
        %v2976 = vmul.f32 %v2811, %v2921
        %v2977 = vmul.f32 %v2812, %v2922
        %v2978 = vmul.f32 %v2813, %v2923
        %v2979 = vmul.f32 %v2814, %v2924
        %v2980 = vmul.f32 %v2815, %v2925
        %v2981 = vmul.f32 %v2816, %v2926
        %v2982 = vmul.f32 %v2817, %v2927
        %vm2983 = vcmask 7168
        %2984 = vst.msk [vmem:[#allocation3] sm:$0xff] %vm2983, %v2928
        %2985 = vst.msk [vmem:[#allocation3 + $0x8] sm:$0xff] %vm2983, %v2929
        %2986 = vst.msk [vmem:[#allocation3 + $0x10] sm:$0xff] %vm2983, %v2930
        %2987 = vst.msk [vmem:[#allocation3 + $0x18] sm:$0xff] %vm2983, %v2931
        %2988 = vst.msk [vmem:[#allocation3 + $0x20] sm:$0xff] %vm2983, %v2932
        %2989 = vst.msk [vmem:[#allocation3 + $0x28] sm:$0xff] %vm2983, %v2933
        %2990 = vst.msk [vmem:[#allocation3 + $0x30] sm:$0xff] %vm2983, %v2934
        %2991 = vst.msk [vmem:[#allocation3 + $0x38] sm:$0xff] %vm2983, %v2935
        %2992 = vst.msk [vmem:[#allocation3 + $0x40] sm:$0xff] %vm2983, %v2936
        %2993 = vst.msk [vmem:[#allocation3 + $0x48] sm:$0xff] %vm2983, %v2937
        %2994 = vst.msk [vmem:[#allocation3 + $0x50] sm:$0xff] %vm2983, %v2938
        %2995 = vst.msk [vmem:[#allocation3 + $0x58] sm:$0xff] %vm2983, %v2939
        %2996 = vst.msk [vmem:[#allocation3 + $0x60] sm:$0xff] %vm2983, %v2940
        %2997 = vst.msk [vmem:[#allocation3 + $0x68] sm:$0xff] %vm2983, %v2941
        %2998 = vst.msk [vmem:[#allocation3 + $0x70] sm:$0xff] %vm2983, %v2942
        %2999 = vst.msk [vmem:[#allocation3 + $0x78] sm:$0xff] %vm2983, %v2943
        %3000 = vst.msk [vmem:[#allocation3 + $0x80] sm:$0xff] %vm2983, %v2944
        %3001 = vst.msk [vmem:[#allocation3 + $0x88] sm:$0xff] %vm2983, %v2945
        %3002 = vst.msk [vmem:[#allocation3 + $0x90] sm:$0xff] %vm2983, %v2946
        %3003 = vst.msk [vmem:[#allocation3 + $0x98] sm:$0xff] %vm2983, %v2947
        %3004 = vst.msk [vmem:[#allocation3 + $0xa0] sm:$0xff] %vm2983, %v2948
        %3005 = vst.msk [vmem:[#allocation3 + $0xa8] sm:$0xff] %vm2983, %v2949
        %3006 = vst.msk [vmem:[#allocation3 + $0xb0] sm:$0xff] %vm2983, %v2950
        %3007 = vst.msk [vmem:[#allocation3 + $0xb8] sm:$0xff] %vm2983, %v2951
        %3008 = vst.msk [vmem:[#allocation3 + $0xc0] sm:$0xff] %vm2983, %v2952
        %3009 = vst.msk [vmem:[#allocation3 + $0xc8] sm:$0xff] %vm2983, %v2953
        %3010 = vst.msk [vmem:[#allocation3 + $0xd0] sm:$0xff] %vm2983, %v2954
        %3011 = vst.msk [vmem:[#allocation3 + $0xd8] sm:$0xff] %vm2983, %v2955
        %3012 = vst.msk [vmem:[#allocation3 + $0xe0] sm:$0xff] %vm2983, %v2956
        %3013 = vst.msk [vmem:[#allocation3 + $0xe8] sm:$0xff] %vm2983, %v2957
        %3014 = vst.msk [vmem:[#allocation3 + $0xf0] sm:$0xff] %vm2983, %v2958
        %3015 = vst.msk [vmem:[#allocation3 + $0xf8] sm:$0xff] %vm2983, %v2959
        %3016 = vst.msk [vmem:[#allocation3 + $0x100] sm:$0xff] %vm2983, %v2960
        %3017 = vst.msk [vmem:[#allocation3 + $0x108] sm:$0xff] %vm2983, %v2961
        %3018 = vst.msk [vmem:[#allocation3 + $0x110] sm:$0xff] %vm2983, %v2962
        %3019 = vst.msk [vmem:[#allocation3 + $0x118] sm:$0xff] %vm2983, %v2963
        %3020 = vst.msk [vmem:[#allocation3 + $0x120] sm:$0xff] %vm2983, %v2964
        %3021 = vst.msk [vmem:[#allocation3 + $0x128] sm:$0xff] %vm2983, %v2965
        %3022 = vst.msk [vmem:[#allocation3 + $0x130] sm:$0xff] %vm2983, %v2966
        %3023 = vst.msk [vmem:[#allocation3 + $0x138] sm:$0xff] %vm2983, %v2967
        %3024 = vst.msk [vmem:[#allocation3 + $0x140] sm:$0xff] %vm2983, %v2968
        %3025 = vst.msk [vmem:[#allocation3 + $0x148] sm:$0xff] %vm2983, %v2969
        %3026 = vst.msk [vmem:[#allocation3 + $0x150] sm:$0xff] %vm2983, %v2970
        %3027 = vst.msk [vmem:[#allocation3 + $0x158] sm:$0xff] %vm2983, %v2971
        %3028 = vst.msk [vmem:[#allocation3 + $0x160] sm:$0xff] %vm2983, %v2972
        %3029 = vst.msk [vmem:[#allocation3 + $0x168] sm:$0xff] %vm2983, %v2973
        %3030 = vst.msk [vmem:[#allocation3 + $0x170] sm:$0xff] %vm2983, %v2974
        %3031 = vst.msk [vmem:[#allocation3 + $0x178] sm:$0xff] %vm2983, %v2975
        %3032 = vst.msk [vmem:[#allocation3 + $0x180] sm:$0xff] %vm2983, %v2976
        %3033 = vst.msk [vmem:[#allocation3 + $0x188] sm:$0xff] %vm2983, %v2977
        %3034 = vst.msk [vmem:[#allocation3 + $0x190] sm:$0xff] %vm2983, %v2978
        %3035 = vst.msk [vmem:[#allocation3 + $0x198] sm:$0xff] %vm2983, %v2979
        %3036 = vst.msk [vmem:[#allocation3 + $0x1a0] sm:$0xff] %vm2983, %v2980
        %3037 = vst.msk [vmem:[#allocation3 + $0x1a8] sm:$0xff] %vm2983, %v2981
        %3038 = vst.msk [vmem:[#allocation3 + $0x1b0] sm:$0xff] %vm2983, %v2982
        %v3039 = vld [vmem:[%s3] sm:$0xff]
        %v3040 = vld [vmem:[%s3 + $0x8] sm:$0xff]
        %v3041 = vld [vmem:[%s3 + $0x10] sm:$0xff]
        %v3042 = vld [vmem:[%s3 + $0x18] sm:$0xff]
        %v3043 = vld [vmem:[%s3 + $0x20] sm:$0xff]
        %v3044 = vld [vmem:[%s3 + $0x28] sm:$0xff]
        %v3045 = vld [vmem:[%s3 + $0x30] sm:$0xff]
        %v3046 = vld [vmem:[%s3 + $0x38] sm:$0xff]
        %v3047 = vld [vmem:[%s3 + $0x40] sm:$0xff]
        %v3048 = vld [vmem:[%s3 + $0x48] sm:$0xff]
        %v3049 = vld [vmem:[%s3 + $0x50] sm:$0xff]
        %v3050 = vld [vmem:[%s3 + $0x58] sm:$0xff]
        %v3051 = vld [vmem:[%s3 + $0x60] sm:$0xff]
        %v3052 = vld [vmem:[%s3 + $0x68] sm:$0xff]
        %v3053 = vld [vmem:[%s3 + $0x70] sm:$0xff]
        %v3054 = vld [vmem:[%s3 + $0x78] sm:$0xff]
        %v3055 = vld [vmem:[%s3 + $0x80] sm:$0xff]
        %v3056 = vld [vmem:[%s3 + $0x88] sm:$0xff]
        %v3057 = vld [vmem:[%s3 + $0x90] sm:$0xff]
        %v3058 = vld [vmem:[%s3 + $0x98] sm:$0xff]
        %v3059 = vld [vmem:[%s3 + $0xa0] sm:$0xff]
        %v3060 = vld [vmem:[%s3 + $0xa8] sm:$0xff]
        %v3061 = vld [vmem:[%s3 + $0xb0] sm:$0xff]
        %v3062 = vld [vmem:[%s3 + $0xb8] sm:$0xff]
        %v3063 = vld [vmem:[%s3 + $0xc0] sm:$0xff]
        %v3064 = vld [vmem:[%s3 + $0xc8] sm:$0xff]
        %v3065 = vld [vmem:[%s3 + $0xd0] sm:$0xff]
        %v3066 = vld [vmem:[%s3 + $0xd8] sm:$0xff]
        %v3067 = vld [vmem:[%s3 + $0xe0] sm:$0xff]
        %v3068 = vld [vmem:[%s3 + $0xe8] sm:$0xff]
        %v3069 = vld [vmem:[%s3 + $0xf0] sm:$0xff]
        %v3070 = vld [vmem:[%s3 + $0xf8] sm:$0xff]
        %v3071 = vld [vmem:[%s3 + $0x100] sm:$0xff]
        %v3072 = vld [vmem:[%s3 + $0x108] sm:$0xff]
        %v3073 = vld [vmem:[%s3 + $0x110] sm:$0xff]
        %v3074 = vld [vmem:[%s3 + $0x118] sm:$0xff]
        %v3075 = vld [vmem:[%s3 + $0x120] sm:$0xff]
        %v3076 = vld [vmem:[%s3 + $0x128] sm:$0xff]
        %v3077 = vld [vmem:[%s3 + $0x130] sm:$0xff]
        %v3078 = vld [vmem:[%s3 + $0x138] sm:$0xff]
        %v3079 = vld [vmem:[%s3 + $0x140] sm:$0xff]
        %v3080 = vld [vmem:[%s3 + $0x148] sm:$0xff]
        %v3081 = vld [vmem:[%s3 + $0x150] sm:$0xff]
        %v3082 = vld [vmem:[%s3 + $0x158] sm:$0xff]
        %v3083 = vld [vmem:[%s3 + $0x160] sm:$0xff]
        %v3084 = vld [vmem:[%s3 + $0x168] sm:$0xff]
        %v3085 = vld [vmem:[%s3 + $0x170] sm:$0xff]
        %v3086 = vld [vmem:[%s3 + $0x178] sm:$0xff]
        %v3087 = vld [vmem:[%s3 + $0x180] sm:$0xff]
        %v3088 = vld [vmem:[%s3 + $0x188] sm:$0xff]
        %v3089 = vld [vmem:[%s3 + $0x190] sm:$0xff]
        %v3090 = vld [vmem:[%s3 + $0x198] sm:$0xff]
        %v3091 = vld [vmem:[%s3 + $0x1a0] sm:$0xff]
        %v3092 = vld [vmem:[%s3 + $0x1a8] sm:$0xff]
        %v3093 = vld [vmem:[%s3 + $0x1b0] sm:$0xff]
        %v3094 = vmul.f32 %v1718, %v2928
        %v3095 = vmul.f32 %v1719, %v2929
        %v3096 = vmul.f32 %v1720, %v2930
        %v3097 = vmul.f32 %v1721, %v2931
        %v3098 = vmul.f32 %v1722, %v2932
        %v3099 = vmul.f32 %v1723, %v2933
        %v3100 = vmul.f32 %v1724, %v2934
        %v3101 = vmul.f32 %v1725, %v2935
        %v3102 = vmul.f32 %v1726, %v2936
        %v3103 = vmul.f32 %v1727, %v2937
        %v3104 = vmul.f32 %v1728, %v2938
        %v3105 = vmul.f32 %v1729, %v2939
        %v3106 = vmul.f32 %v1730, %v2940
        %v3107 = vmul.f32 %v1731, %v2941
        %v3108 = vmul.f32 %v1732, %v2942
        %v3109 = vmul.f32 %v1733, %v2943
        %v3110 = vmul.f32 %v1734, %v2944
        %v3111 = vmul.f32 %v1735, %v2945
        %v3112 = vmul.f32 %v1736, %v2946
        %v3113 = vmul.f32 %v1737, %v2947
        %v3114 = vmul.f32 %v1738, %v2948
        %v3115 = vmul.f32 %v1739, %v2949
        %v3116 = vmul.f32 %v1740, %v2950
        %v3117 = vmul.f32 %v1741, %v2951
        %v3118 = vmul.f32 %v1742, %v2952
        %v3119 = vmul.f32 %v1743, %v2953
        %v3120 = vmul.f32 %v1744, %v2954
        %v3121 = vmul.f32 %v1745, %v2955
        %v3122 = vmul.f32 %v1746, %v2956
        %v3123 = vmul.f32 %v1747, %v2957
        %v3124 = vmul.f32 %v1748, %v2958
        %v3125 = vmul.f32 %v1749, %v2959
        %v3126 = vmul.f32 %v1750, %v2960
        %v3127 = vmul.f32 %v1751, %v2961
        %v3128 = vmul.f32 %v1752, %v2962
        %v3129 = vmul.f32 %v1753, %v2963
        %v3130 = vmul.f32 %v1754, %v2964
        %v3131 = vmul.f32 %v1755, %v2965
        %v3132 = vmul.f32 %v1756, %v2966
        %v3133 = vmul.f32 %v1757, %v2967
        %v3134 = vmul.f32 %v1758, %v2968
        %v3135 = vmul.f32 %v1759, %v2969
        %v3136 = vmul.f32 %v1760, %v2970
        %v3137 = vmul.f32 %v1761, %v2971
        %v3138 = vmul.f32 %v1762, %v2972
        %v3139 = vmul.f32 %v1763, %v2973
        %v3140 = vmul.f32 %v1764, %v2974
        %v3141 = vmul.f32 %v1765, %v2975
        %v3142 = vmul.f32 %v1766, %v2976
        %v3143 = vmul.f32 %v1767, %v2977
        %v3144 = vmul.f32 %v1768, %v2978
        %v3145 = vmul.f32 %v1769, %v2979
        %v3146 = vmul.f32 %v1770, %v2980
        %v3147 = vmul.f32 %v1771, %v2981
        %v3148 = vmul.f32 %v1772, %v2982
        %v3149 = vsub.f32 %v3039, %v3094
        %v3150 = vsub.f32 %v3040, %v3095
        %v3151 = vsub.f32 %v3041, %v3096
        %v3152 = vsub.f32 %v3042, %v3097
        %v3153 = vsub.f32 %v3043, %v3098
        %v3154 = vsub.f32 %v3044, %v3099
        %v3155 = vsub.f32 %v3045, %v3100
        %v3156 = vsub.f32 %v3046, %v3101
        %v3157 = vsub.f32 %v3047, %v3102
        %v3158 = vsub.f32 %v3048, %v3103
        %v3159 = vsub.f32 %v3049, %v3104
        %v3160 = vsub.f32 %v3050, %v3105
        %v3161 = vsub.f32 %v3051, %v3106
        %v3162 = vsub.f32 %v3052, %v3107
        %v3163 = vsub.f32 %v3053, %v3108
        %v3164 = vsub.f32 %v3054, %v3109
        %v3165 = vsub.f32 %v3055, %v3110
        %v3166 = vsub.f32 %v3056, %v3111
        %v3167 = vsub.f32 %v3057, %v3112
        %v3168 = vsub.f32 %v3058, %v3113
        %v3169 = vsub.f32 %v3059, %v3114
        %v3170 = vsub.f32 %v3060, %v3115
        %v3171 = vsub.f32 %v3061, %v3116
        %v3172 = vsub.f32 %v3062, %v3117
        %v3173 = vsub.f32 %v3063, %v3118
        %v3174 = vsub.f32 %v3064, %v3119
        %v3175 = vsub.f32 %v3065, %v3120
        %v3176 = vsub.f32 %v3066, %v3121
        %v3177 = vsub.f32 %v3067, %v3122
        %v3178 = vsub.f32 %v3068, %v3123
        %v3179 = vsub.f32 %v3069, %v3124
        %v3180 = vsub.f32 %v3070, %v3125
        %v3181 = vsub.f32 %v3071, %v3126
        %v3182 = vsub.f32 %v3072, %v3127
        %v3183 = vsub.f32 %v3073, %v3128
        %v3184 = vsub.f32 %v3074, %v3129
        %v3185 = vsub.f32 %v3075, %v3130
        %v3186 = vsub.f32 %v3076, %v3131
        %v3187 = vsub.f32 %v3077, %v3132
        %v3188 = vsub.f32 %v3078, %v3133
        %v3189 = vsub.f32 %v3079, %v3134
        %v3190 = vsub.f32 %v3080, %v3135
        %v3191 = vsub.f32 %v3081, %v3136
        %v3192 = vsub.f32 %v3082, %v3137
        %v3193 = vsub.f32 %v3083, %v3138
        %v3194 = vsub.f32 %v3084, %v3139
        %v3195 = vsub.f32 %v3085, %v3140
        %v3196 = vsub.f32 %v3086, %v3141
        %v3197 = vsub.f32 %v3087, %v3142
        %v3198 = vsub.f32 %v3088, %v3143
        %v3199 = vsub.f32 %v3089, %v3144
        %v3200 = vsub.f32 %v3090, %v3145
        %v3201 = vsub.f32 %v3091, %v3146
        %v3202 = vsub.f32 %v3092, %v3147
        %v3203 = vsub.f32 %v3093, %v3148
        %3204 = vst.msk [vmem:[#allocation4] sm:$0xff] %vm2983, %v3149
        %3205 = vst.msk [vmem:[#allocation4 + $0x8] sm:$0xff] %vm2983, %v3150
        %3206 = vst.msk [vmem:[#allocation4 + $0x10] sm:$0xff] %vm2983, %v3151
        %3207 = vst.msk [vmem:[#allocation4 + $0x18] sm:$0xff] %vm2983, %v3152
        %3208 = vst.msk [vmem:[#allocation4 + $0x20] sm:$0xff] %vm2983, %v3153
        %3209 = vst.msk [vmem:[#allocation4 + $0x28] sm:$0xff] %vm2983, %v3154
        %3210 = vst.msk [vmem:[#allocation4 + $0x30] sm:$0xff] %vm2983, %v3155
        %3211 = vst.msk [vmem:[#allocation4 + $0x38] sm:$0xff] %vm2983, %v3156
        %3212 = vst.msk [vmem:[#allocation4 + $0x40] sm:$0xff] %vm2983, %v3157
        %3213 = vst.msk [vmem:[#allocation4 + $0x48] sm:$0xff] %vm2983, %v3158
        %3214 = vst.msk [vmem:[#allocation4 + $0x50] sm:$0xff] %vm2983, %v3159
        %3215 = vst.msk [vmem:[#allocation4 + $0x58] sm:$0xff] %vm2983, %v3160
        %3216 = vst.msk [vmem:[#allocation4 + $0x60] sm:$0xff] %vm2983, %v3161
        %3217 = vst.msk [vmem:[#allocation4 + $0x68] sm:$0xff] %vm2983, %v3162
        %3218 = vst.msk [vmem:[#allocation4 + $0x70] sm:$0xff] %vm2983, %v3163
        %3219 = vst.msk [vmem:[#allocation4 + $0x78] sm:$0xff] %vm2983, %v3164
        %3220 = vst.msk [vmem:[#allocation4 + $0x80] sm:$0xff] %vm2983, %v3165
        %3221 = vst.msk [vmem:[#allocation4 + $0x88] sm:$0xff] %vm2983, %v3166
        %3222 = vst.msk [vmem:[#allocation4 + $0x90] sm:$0xff] %vm2983, %v3167
        %3223 = vst.msk [vmem:[#allocation4 + $0x98] sm:$0xff] %vm2983, %v3168
        %3224 = vst.msk [vmem:[#allocation4 + $0xa0] sm:$0xff] %vm2983, %v3169
        %3225 = vst.msk [vmem:[#allocation4 + $0xa8] sm:$0xff] %vm2983, %v3170
        %3226 = vst.msk [vmem:[#allocation4 + $0xb0] sm:$0xff] %vm2983, %v3171
        %3227 = vst.msk [vmem:[#allocation4 + $0xb8] sm:$0xff] %vm2983, %v3172
        %3228 = vst.msk [vmem:[#allocation4 + $0xc0] sm:$0xff] %vm2983, %v3173
        %3229 = vst.msk [vmem:[#allocation4 + $0xc8] sm:$0xff] %vm2983, %v3174
        %3230 = vst.msk [vmem:[#allocation4 + $0xd0] sm:$0xff] %vm2983, %v3175
        %3231 = vst.msk [vmem:[#allocation4 + $0xd8] sm:$0xff] %vm2983, %v3176
        %3232 = vst.msk [vmem:[#allocation4 + $0xe0] sm:$0xff] %vm2983, %v3177
        %3233 = vst.msk [vmem:[#allocation4 + $0xe8] sm:$0xff] %vm2983, %v3178
        %3234 = vst.msk [vmem:[#allocation4 + $0xf0] sm:$0xff] %vm2983, %v3179
        %3235 = vst.msk [vmem:[#allocation4 + $0xf8] sm:$0xff] %vm2983, %v3180
        %3236 = vst.msk [vmem:[#allocation4 + $0x100] sm:$0xff] %vm2983, %v3181
        %3237 = vst.msk [vmem:[#allocation4 + $0x108] sm:$0xff] %vm2983, %v3182
        %3238 = vst.msk [vmem:[#allocation4 + $0x110] sm:$0xff] %vm2983, %v3183
        %3239 = vst.msk [vmem:[#allocation4 + $0x118] sm:$0xff] %vm2983, %v3184
        %3240 = vst.msk [vmem:[#allocation4 + $0x120] sm:$0xff] %vm2983, %v3185
        %3241 = vst.msk [vmem:[#allocation4 + $0x128] sm:$0xff] %vm2983, %v3186
        %3242 = vst.msk [vmem:[#allocation4 + $0x130] sm:$0xff] %vm2983, %v3187
        %3243 = vst.msk [vmem:[#allocation4 + $0x138] sm:$0xff] %vm2983, %v3188
        %3244 = vst.msk [vmem:[#allocation4 + $0x140] sm:$0xff] %vm2983, %v3189
        %3245 = vst.msk [vmem:[#allocation4 + $0x148] sm:$0xff] %vm2983, %v3190
        %3246 = vst.msk [vmem:[#allocation4 + $0x150] sm:$0xff] %vm2983, %v3191
        %3247 = vst.msk [vmem:[#allocation4 + $0x158] sm:$0xff] %vm2983, %v3192
        %3248 = vst.msk [vmem:[#allocation4 + $0x160] sm:$0xff] %vm2983, %v3193
        %3249 = vst.msk [vmem:[#allocation4 + $0x168] sm:$0xff] %vm2983, %v3194
        %3250 = vst.msk [vmem:[#allocation4 + $0x170] sm:$0xff] %vm2983, %v3195
        %3251 = vst.msk [vmem:[#allocation4 + $0x178] sm:$0xff] %vm2983, %v3196
        %3252 = vst.msk [vmem:[#allocation4 + $0x180] sm:$0xff] %vm2983, %v3197
        %3253 = vst.msk [vmem:[#allocation4 + $0x188] sm:$0xff] %vm2983, %v3198
        %3254 = vst.msk [vmem:[#allocation4 + $0x190] sm:$0xff] %vm2983, %v3199
        %3255 = vst.msk [vmem:[#allocation4 + $0x198] sm:$0xff] %vm2983, %v3200
        %3256 = vst.msk [vmem:[#allocation4 + $0x1a0] sm:$0xff] %vm2983, %v3201
        %3257 = vst.msk [vmem:[#allocation4 + $0x1a8] sm:$0xff] %vm2983, %v3202
        %3258 = vst.msk [vmem:[#allocation4 + $0x1b0] sm:$0xff] %vm2983, %v3203
      $region44: #{tpu_custom_call.1} parent=35 // pred_fallthru
        _
      // Predicated region
      $region45: #{tpu_custom_call.1} parent=35 // pred_check
        %p3259 = pneg %p995
      $region46: #{tpu_custom_call.1} parent=35 // pred_check_branch
        %3261 = sbr.rel (%p3259) target = $region48
      $region47: #{tpu_custom_call.1} parent=35 // pred_region
        %s3262 = smul.u32 %s20, 110
        %s3263 = smul.addr %s3262, 8
        %s3264 = scalar_lea.vmem [#allocation2], %s3263
        %v3265 = vld [vmem:[%s3264] sm:$0xff]
        %v3266 = vld [vmem:[%s3264 + $0x8] sm:$0xff]
        %v3267 = vld [vmem:[%s3264 + $0x10] sm:$0xff]
        %v3268 = vld [vmem:[%s3264 + $0x18] sm:$0xff]
        %v3269 = vld [vmem:[%s3264 + $0x20] sm:$0xff]
        %v3270 = vld [vmem:[%s3264 + $0x28] sm:$0xff]
        %v3271 = vld [vmem:[%s3264 + $0x30] sm:$0xff]
        %v3272 = vld [vmem:[%s3264 + $0x38] sm:$0xff]
        %v3273 = vld [vmem:[%s3264 + $0x40] sm:$0xff]
        %v3274 = vld [vmem:[%s3264 + $0x48] sm:$0xff]
        %v3275 = vld [vmem:[%s3264 + $0x50] sm:$0xff]
        %v3276 = vld [vmem:[%s3264 + $0x58] sm:$0xff]
        %v3277 = vld [vmem:[%s3264 + $0x60] sm:$0xff]
        %v3278 = vld [vmem:[%s3264 + $0x68] sm:$0xff]
        %v3279 = vld [vmem:[%s3264 + $0x70] sm:$0xff]
        %v3280 = vld [vmem:[%s3264 + $0x78] sm:$0xff]
        %v3281 = vld [vmem:[%s3264 + $0x80] sm:$0xff]
        %v3282 = vld [vmem:[%s3264 + $0x88] sm:$0xff]
        %v3283 = vld [vmem:[%s3264 + $0x90] sm:$0xff]
        %v3284 = vld [vmem:[%s3264 + $0x98] sm:$0xff]
        %v3285 = vld [vmem:[%s3264 + $0xa0] sm:$0xff]
        %v3286 = vld [vmem:[%s3264 + $0xa8] sm:$0xff]
        %v3287 = vld [vmem:[%s3264 + $0xb0] sm:$0xff]
        %v3288 = vld [vmem:[%s3264 + $0xb8] sm:$0xff]
        %v3289 = vld [vmem:[%s3264 + $0xc0] sm:$0xff]
        %v3290 = vld [vmem:[%s3264 + $0xc8] sm:$0xff]
        %v3291 = vld [vmem:[%s3264 + $0xd0] sm:$0xff]
        %v3292 = vld [vmem:[%s3264 + $0xd8] sm:$0xff]
        %v3293 = vld [vmem:[%s3264 + $0xe0] sm:$0xff]
        %v3294 = vld [vmem:[%s3264 + $0xe8] sm:$0xff]
        %v3295 = vld [vmem:[%s3264 + $0xf0] sm:$0xff]
        %v3296 = vld [vmem:[%s3264 + $0xf8] sm:$0xff]
        %v3297 = vld [vmem:[%s3264 + $0x100] sm:$0xff]
        %v3298 = vld [vmem:[%s3264 + $0x108] sm:$0xff]
        %v3299 = vld [vmem:[%s3264 + $0x110] sm:$0xff]
        %v3300 = vld [vmem:[%s3264 + $0x118] sm:$0xff]
        %v3301 = vld [vmem:[%s3264 + $0x120] sm:$0xff]
        %v3302 = vld [vmem:[%s3264 + $0x128] sm:$0xff]
        %v3303 = vld [vmem:[%s3264 + $0x130] sm:$0xff]
        %v3304 = vld [vmem:[%s3264 + $0x138] sm:$0xff]
        %v3305 = vld [vmem:[%s3264 + $0x140] sm:$0xff]
        %v3306 = vld [vmem:[%s3264 + $0x148] sm:$0xff]
        %v3307 = vld [vmem:[%s3264 + $0x150] sm:$0xff]
        %v3308 = vld [vmem:[%s3264 + $0x158] sm:$0xff]
        %v3309 = vld [vmem:[%s3264 + $0x160] sm:$0xff]
        %v3310 = vld [vmem:[%s3264 + $0x168] sm:$0xff]
        %v3311 = vld [vmem:[%s3264 + $0x170] sm:$0xff]
        %v3312 = vld [vmem:[%s3264 + $0x178] sm:$0xff]
        %v3313 = vld [vmem:[%s3264 + $0x180] sm:$0xff]
        %v3314 = vld [vmem:[%s3264 + $0x188] sm:$0xff]
        %v3315 = vld [vmem:[%s3264 + $0x190] sm:$0xff]
        %v3316 = vld [vmem:[%s3264 + $0x198] sm:$0xff]
        %v3317 = vld [vmem:[%s3264 + $0x1a0] sm:$0xff]
        %v3318 = vld [vmem:[%s3264 + $0x1a8] sm:$0xff]
        %v3319 = vld [vmem:[%s3264 + $0x1b0] sm:$0xff]
        %v3320 = vld [vmem:[%s3264 + $0x1b8] sm:$0xff]
        %v3321 = vld [vmem:[%s3264 + $0x1c0] sm:$0xff]
        %v3322 = vld [vmem:[%s3264 + $0x1c8] sm:$0xff]
        %v3323 = vld [vmem:[%s3264 + $0x1d0] sm:$0xff]
        %v3324 = vld [vmem:[%s3264 + $0x1d8] sm:$0xff]
        %v3325 = vld [vmem:[%s3264 + $0x1e0] sm:$0xff]
        %v3326 = vld [vmem:[%s3264 + $0x1e8] sm:$0xff]
        %v3327 = vld [vmem:[%s3264 + $0x1f0] sm:$0xff]
        %v3328 = vld [vmem:[%s3264 + $0x1f8] sm:$0xff]
        %v3329 = vld [vmem:[%s3264 + $0x200] sm:$0xff]
        %v3330 = vld [vmem:[%s3264 + $0x208] sm:$0xff]
        %v3331 = vld [vmem:[%s3264 + $0x210] sm:$0xff]
        %v3332 = vld [vmem:[%s3264 + $0x218] sm:$0xff]
        %v3333 = vld [vmem:[%s3264 + $0x220] sm:$0xff]
        %v3334 = vld [vmem:[%s3264 + $0x228] sm:$0xff]
        %v3335 = vld [vmem:[%s3264 + $0x230] sm:$0xff]
        %v3336 = vld [vmem:[%s3264 + $0x238] sm:$0xff]
        %v3337 = vld [vmem:[%s3264 + $0x240] sm:$0xff]
        %v3338 = vld [vmem:[%s3264 + $0x248] sm:$0xff]
        %v3339 = vld [vmem:[%s3264 + $0x250] sm:$0xff]
        %v3340 = vld [vmem:[%s3264 + $0x258] sm:$0xff]
        %v3341 = vld [vmem:[%s3264 + $0x260] sm:$0xff]
        %v3342 = vld [vmem:[%s3264 + $0x268] sm:$0xff]
        %v3343 = vld [vmem:[%s3264 + $0x270] sm:$0xff]
        %v3344 = vld [vmem:[%s3264 + $0x278] sm:$0xff]
        %v3345 = vld [vmem:[%s3264 + $0x280] sm:$0xff]
        %v3346 = vld [vmem:[%s3264 + $0x288] sm:$0xff]
        %v3347 = vld [vmem:[%s3264 + $0x290] sm:$0xff]
        %v3348 = vld [vmem:[%s3264 + $0x298] sm:$0xff]
        %v3349 = vld [vmem:[%s3264 + $0x2a0] sm:$0xff]
        %v3350 = vld [vmem:[%s3264 + $0x2a8] sm:$0xff]
        %v3351 = vld [vmem:[%s3264 + $0x2b0] sm:$0xff]
        %v3352 = vld [vmem:[%s3264 + $0x2b8] sm:$0xff]
        %v3353 = vld [vmem:[%s3264 + $0x2c0] sm:$0xff]
        %v3354 = vld [vmem:[%s3264 + $0x2c8] sm:$0xff]
        %v3355 = vld [vmem:[%s3264 + $0x2d0] sm:$0xff]
        %v3356 = vld [vmem:[%s3264 + $0x2d8] sm:$0xff]
        %v3357 = vld [vmem:[%s3264 + $0x2e0] sm:$0xff]
        %v3358 = vld [vmem:[%s3264 + $0x2e8] sm:$0xff]
        %v3359 = vld [vmem:[%s3264 + $0x2f0] sm:$0xff]
        %v3360 = vld [vmem:[%s3264 + $0x2f8] sm:$0xff]
        %v3361 = vld [vmem:[%s3264 + $0x300] sm:$0xff]
        %v3362 = vld [vmem:[%s3264 + $0x308] sm:$0xff]
        %v3363 = vld [vmem:[%s3264 + $0x310] sm:$0xff]
        %v3364 = vld [vmem:[%s3264 + $0x318] sm:$0xff]
        %v3365 = vld [vmem:[%s3264 + $0x320] sm:$0xff]
        %v3366 = vld [vmem:[%s3264 + $0x328] sm:$0xff]
        %v3367 = vld [vmem:[%s3264 + $0x330] sm:$0xff]
        %v3368 = vld [vmem:[%s3264 + $0x338] sm:$0xff]
        %v3369 = vld [vmem:[%s3264 + $0x340] sm:$0xff]
        %v3370 = vld [vmem:[%s3264 + $0x348] sm:$0xff]
        %v3371 = vld [vmem:[%s3264 + $0x350] sm:$0xff]
        %v3372 = vld [vmem:[%s3264 + $0x358] sm:$0xff]
        %v3373 = vld [vmem:[%s3264 + $0x360] sm:$0xff]
        %v3374 = vld [vmem:[%s3264 + $0x368] sm:$0xff]
        %v3375 = vld [vmem:[#allocation3] sm:$0xff]
        %v3376 = vld [vmem:[#allocation3 + $0x8] sm:$0xff]
        %v3377 = vld [vmem:[#allocation3 + $0x10] sm:$0xff]
        %v3378 = vld [vmem:[#allocation3 + $0x18] sm:$0xff]
        %v3379 = vld [vmem:[#allocation3 + $0x20] sm:$0xff]
        %v3380 = vld [vmem:[#allocation3 + $0x28] sm:$0xff]
        %v3381 = vld [vmem:[#allocation3 + $0x30] sm:$0xff]
        %v3382 = vld [vmem:[#allocation3 + $0x38] sm:$0xff]
        %v3383 = vld [vmem:[#allocation3 + $0x40] sm:$0xff]
        %v3384 = vld [vmem:[#allocation3 + $0x48] sm:$0xff]
        %v3385 = vld [vmem:[#allocation3 + $0x50] sm:$0xff]
        %v3386 = vld [vmem:[#allocation3 + $0x58] sm:$0xff]
        %v3387 = vld [vmem:[#allocation3 + $0x60] sm:$0xff]
        %v3388 = vld [vmem:[#allocation3 + $0x68] sm:$0xff]
        %v3389 = vld [vmem:[#allocation3 + $0x70] sm:$0xff]
        %v3390 = vld [vmem:[#allocation3 + $0x78] sm:$0xff]
        %v3391 = vld [vmem:[#allocation3 + $0x80] sm:$0xff]
        %v3392 = vld [vmem:[#allocation3 + $0x88] sm:$0xff]
        %v3393 = vld [vmem:[#allocation3 + $0x90] sm:$0xff]
        %v3394 = vld [vmem:[#allocation3 + $0x98] sm:$0xff]
        %v3395 = vld [vmem:[#allocation3 + $0xa0] sm:$0xff]
        %v3396 = vld [vmem:[#allocation3 + $0xa8] sm:$0xff]
        %v3397 = vld [vmem:[#allocation3 + $0xb0] sm:$0xff]
        %v3398 = vld [vmem:[#allocation3 + $0xb8] sm:$0xff]
        %v3399 = vld [vmem:[#allocation3 + $0xc0] sm:$0xff]
        %v3400 = vld [vmem:[#allocation3 + $0xc8] sm:$0xff]
        %v3401 = vld [vmem:[#allocation3 + $0xd0] sm:$0xff]
        %v3402 = vld [vmem:[#allocation3 + $0xd8] sm:$0xff]
        %v3403 = vld [vmem:[#allocation3 + $0xe0] sm:$0xff]
        %v3404 = vld [vmem:[#allocation3 + $0xe8] sm:$0xff]
        %v3405 = vld [vmem:[#allocation3 + $0xf0] sm:$0xff]
        %v3406 = vld [vmem:[#allocation3 + $0xf8] sm:$0xff]
        %v3407 = vld [vmem:[#allocation3 + $0x100] sm:$0xff]
        %v3408 = vld [vmem:[#allocation3 + $0x108] sm:$0xff]
        %v3409 = vld [vmem:[#allocation3 + $0x110] sm:$0xff]
        %v3410 = vld [vmem:[#allocation3 + $0x118] sm:$0xff]
        %v3411 = vld [vmem:[#allocation3 + $0x120] sm:$0xff]
        %v3412 = vld [vmem:[#allocation3 + $0x128] sm:$0xff]
        %v3413 = vld [vmem:[#allocation3 + $0x130] sm:$0xff]
        %v3414 = vld [vmem:[#allocation3 + $0x138] sm:$0xff]
        %v3415 = vld [vmem:[#allocation3 + $0x140] sm:$0xff]
        %v3416 = vld [vmem:[#allocation3 + $0x148] sm:$0xff]
        %v3417 = vld [vmem:[#allocation3 + $0x150] sm:$0xff]
        %v3418 = vld [vmem:[#allocation3 + $0x158] sm:$0xff]
        %v3419 = vld [vmem:[#allocation3 + $0x160] sm:$0xff]
        %v3420 = vld [vmem:[#allocation3 + $0x168] sm:$0xff]
        %v3421 = vld [vmem:[#allocation3 + $0x170] sm:$0xff]
        %v3422 = vld [vmem:[#allocation3 + $0x178] sm:$0xff]
        %v3423 = vld [vmem:[#allocation3 + $0x180] sm:$0xff]
        %v3424 = vld [vmem:[#allocation3 + $0x188] sm:$0xff]
        %v3425 = vld [vmem:[#allocation3 + $0x190] sm:$0xff]
        %v3426 = vld [vmem:[#allocation3 + $0x198] sm:$0xff]
        %v3427 = vld [vmem:[#allocation3 + $0x1a0] sm:$0xff]
        %v3428 = vld [vmem:[#allocation3 + $0x1a8] sm:$0xff]
        %v3429 = vld [vmem:[#allocation3 + $0x1b0] sm:$0xff]
        %3431 = vset.pattern.permute.xlu0 0
        %3432 = vperm.xlu0 %3431, %v3375
        %v3433 = vpop.permute.xlu0 %3432
        %3436 = vset.pattern.permute.xlu0 0
        %3437 = vperm.xlu0 %3436, %v3376
        %v3438 = vpop.permute.xlu0 %3437
        %3441 = vset.pattern.permute.xlu0 0
        %3442 = vperm.xlu0 %3441, %v3377
        %v3443 = vpop.permute.xlu0 %3442
        %3446 = vset.pattern.permute.xlu0 0
        %3447 = vperm.xlu0 %3446, %v3378
        %v3448 = vpop.permute.xlu0 %3447
        %3451 = vset.pattern.permute.xlu0 0
        %3452 = vperm.xlu0 %3451, %v3379
        %v3453 = vpop.permute.xlu0 %3452
        %3456 = vset.pattern.permute.xlu0 0
        %3457 = vperm.xlu0 %3456, %v3380
        %v3458 = vpop.permute.xlu0 %3457
        %3461 = vset.pattern.permute.xlu0 0
        %3462 = vperm.xlu0 %3461, %v3381
        %v3463 = vpop.permute.xlu0 %3462
        %3466 = vset.pattern.permute.xlu0 0
        %3467 = vperm.xlu0 %3466, %v3382
        %v3468 = vpop.permute.xlu0 %3467
        %3471 = vset.pattern.permute.xlu0 0
        %3472 = vperm.xlu0 %3471, %v3383
        %v3473 = vpop.permute.xlu0 %3472
        %3476 = vset.pattern.permute.xlu0 0
        %3477 = vperm.xlu0 %3476, %v3384
        %v3478 = vpop.permute.xlu0 %3477
        %3481 = vset.pattern.permute.xlu0 0
        %3482 = vperm.xlu0 %3481, %v3385
        %v3483 = vpop.permute.xlu0 %3482
        %3486 = vset.pattern.permute.xlu0 0
        %3487 = vperm.xlu0 %3486, %v3386
        %v3488 = vpop.permute.xlu0 %3487
        %3491 = vset.pattern.permute.xlu0 0
        %3492 = vperm.xlu0 %3491, %v3387
        %v3493 = vpop.permute.xlu0 %3492
        %3496 = vset.pattern.permute.xlu0 0
        %3497 = vperm.xlu0 %3496, %v3388
        %v3498 = vpop.permute.xlu0 %3497
        %3501 = vset.pattern.permute.xlu0 0
        %3502 = vperm.xlu0 %3501, %v3389
        %v3503 = vpop.permute.xlu0 %3502
        %3506 = vset.pattern.permute.xlu0 0
        %3507 = vperm.xlu0 %3506, %v3390
        %v3508 = vpop.permute.xlu0 %3507
        %3511 = vset.pattern.permute.xlu0 0
        %3512 = vperm.xlu0 %3511, %v3391
        %v3513 = vpop.permute.xlu0 %3512
        %3516 = vset.pattern.permute.xlu0 0
        %3517 = vperm.xlu0 %3516, %v3392
        %v3518 = vpop.permute.xlu0 %3517
        %3521 = vset.pattern.permute.xlu0 0
        %3522 = vperm.xlu0 %3521, %v3393
        %v3523 = vpop.permute.xlu0 %3522
        %3526 = vset.pattern.permute.xlu0 0
        %3527 = vperm.xlu0 %3526, %v3394
        %v3528 = vpop.permute.xlu0 %3527
        %3531 = vset.pattern.permute.xlu0 0
        %3532 = vperm.xlu0 %3531, %v3395
        %v3533 = vpop.permute.xlu0 %3532
        %3536 = vset.pattern.permute.xlu0 0
        %3537 = vperm.xlu0 %3536, %v3396
        %v3538 = vpop.permute.xlu0 %3537
        %3541 = vset.pattern.permute.xlu0 0
        %3542 = vperm.xlu0 %3541, %v3397
        %v3543 = vpop.permute.xlu0 %3542
        %3546 = vset.pattern.permute.xlu0 0
        %3547 = vperm.xlu0 %3546, %v3398
        %v3548 = vpop.permute.xlu0 %3547
        %3551 = vset.pattern.permute.xlu0 0
        %3552 = vperm.xlu0 %3551, %v3399
        %v3553 = vpop.permute.xlu0 %3552
        %3556 = vset.pattern.permute.xlu0 0
        %3557 = vperm.xlu0 %3556, %v3400
        %v3558 = vpop.permute.xlu0 %3557
        %3561 = vset.pattern.permute.xlu0 0
        %3562 = vperm.xlu0 %3561, %v3401
        %v3563 = vpop.permute.xlu0 %3562
        %3566 = vset.pattern.permute.xlu0 0
        %3567 = vperm.xlu0 %3566, %v3402
        %v3568 = vpop.permute.xlu0 %3567
        %3571 = vset.pattern.permute.xlu0 0
        %3572 = vperm.xlu0 %3571, %v3403
        %v3573 = vpop.permute.xlu0 %3572
        %3576 = vset.pattern.permute.xlu0 0
        %3577 = vperm.xlu0 %3576, %v3404
        %v3578 = vpop.permute.xlu0 %3577
        %3581 = vset.pattern.permute.xlu0 0
        %3582 = vperm.xlu0 %3581, %v3405
        %v3583 = vpop.permute.xlu0 %3582
        %3586 = vset.pattern.permute.xlu0 0
        %3587 = vperm.xlu0 %3586, %v3406
        %v3588 = vpop.permute.xlu0 %3587
        %3591 = vset.pattern.permute.xlu0 0
        %3592 = vperm.xlu0 %3591, %v3407
        %v3593 = vpop.permute.xlu0 %3592
        %3596 = vset.pattern.permute.xlu0 0
        %3597 = vperm.xlu0 %3596, %v3408
        %v3598 = vpop.permute.xlu0 %3597
        %3601 = vset.pattern.permute.xlu0 0
        %3602 = vperm.xlu0 %3601, %v3409
        %v3603 = vpop.permute.xlu0 %3602
        %3606 = vset.pattern.permute.xlu0 0
        %3607 = vperm.xlu0 %3606, %v3410
        %v3608 = vpop.permute.xlu0 %3607
        %3611 = vset.pattern.permute.xlu0 0
        %3612 = vperm.xlu0 %3611, %v3411
        %v3613 = vpop.permute.xlu0 %3612
        %3616 = vset.pattern.permute.xlu0 0
        %3617 = vperm.xlu0 %3616, %v3412
        %v3618 = vpop.permute.xlu0 %3617
        %3621 = vset.pattern.permute.xlu0 0
        %3622 = vperm.xlu0 %3621, %v3413
        %v3623 = vpop.permute.xlu0 %3622
        %3626 = vset.pattern.permute.xlu0 0
        %3627 = vperm.xlu0 %3626, %v3414
        %v3628 = vpop.permute.xlu0 %3627
        %3631 = vset.pattern.permute.xlu0 0
        %3632 = vperm.xlu0 %3631, %v3415
        %v3633 = vpop.permute.xlu0 %3632
        %3636 = vset.pattern.permute.xlu0 0
        %3637 = vperm.xlu0 %3636, %v3416
        %v3638 = vpop.permute.xlu0 %3637
        %3641 = vset.pattern.permute.xlu0 0
        %3642 = vperm.xlu0 %3641, %v3417
        %v3643 = vpop.permute.xlu0 %3642
        %3646 = vset.pattern.permute.xlu0 0
        %3647 = vperm.xlu0 %3646, %v3418
        %v3648 = vpop.permute.xlu0 %3647
        %3651 = vset.pattern.permute.xlu0 0
        %3652 = vperm.xlu0 %3651, %v3419
        %v3653 = vpop.permute.xlu0 %3652
        %3656 = vset.pattern.permute.xlu0 0
        %3657 = vperm.xlu0 %3656, %v3420
        %v3658 = vpop.permute.xlu0 %3657
        %3661 = vset.pattern.permute.xlu0 0
        %3662 = vperm.xlu0 %3661, %v3421
        %v3663 = vpop.permute.xlu0 %3662
        %3666 = vset.pattern.permute.xlu0 0
        %3667 = vperm.xlu0 %3666, %v3422
        %v3668 = vpop.permute.xlu0 %3667
        %3671 = vset.pattern.permute.xlu0 0
        %3672 = vperm.xlu0 %3671, %v3423
        %v3673 = vpop.permute.xlu0 %3672
        %3676 = vset.pattern.permute.xlu0 0
        %3677 = vperm.xlu0 %3676, %v3424
        %v3678 = vpop.permute.xlu0 %3677
        %3681 = vset.pattern.permute.xlu0 0
        %3682 = vperm.xlu0 %3681, %v3425
        %v3683 = vpop.permute.xlu0 %3682
        %3686 = vset.pattern.permute.xlu0 0
        %3687 = vperm.xlu0 %3686, %v3426
        %v3688 = vpop.permute.xlu0 %3687
        %3691 = vset.pattern.permute.xlu0 0
        %3692 = vperm.xlu0 %3691, %v3427
        %v3693 = vpop.permute.xlu0 %3692
        %3696 = vset.pattern.permute.xlu0 0
        %3697 = vperm.xlu0 %3696, %v3428
        %v3698 = vpop.permute.xlu0 %3697
        %3701 = vset.pattern.permute.xlu0 0
        %3702 = vperm.xlu0 %3701, %v3429
        %v3703 = vpop.permute.xlu0 %3702
        %v3705 = vmul.f32 %v3265, %v3433
        %v3706 = vmul.f32 %v3266, %v3433
        %v3707 = vmul.f32 %v3267, %v3438
        %v3708 = vmul.f32 %v3268, %v3438
        %v3709 = vmul.f32 %v3269, %v3443
        %v3710 = vmul.f32 %v3270, %v3443
        %v3711 = vmul.f32 %v3271, %v3448
        %v3712 = vmul.f32 %v3272, %v3448
        %v3713 = vmul.f32 %v3273, %v3453
        %v3714 = vmul.f32 %v3274, %v3453
        %v3715 = vmul.f32 %v3275, %v3458
        %v3716 = vmul.f32 %v3276, %v3458
        %v3717 = vmul.f32 %v3277, %v3463
        %v3718 = vmul.f32 %v3278, %v3463
        %v3719 = vmul.f32 %v3279, %v3468
        %v3720 = vmul.f32 %v3280, %v3468
        %v3721 = vmul.f32 %v3281, %v3473
        %v3722 = vmul.f32 %v3282, %v3473
        %v3723 = vmul.f32 %v3283, %v3478
        %v3724 = vmul.f32 %v3284, %v3478
        %v3725 = vmul.f32 %v3285, %v3483
        %v3726 = vmul.f32 %v3286, %v3483
        %v3727 = vmul.f32 %v3287, %v3488
        %v3728 = vmul.f32 %v3288, %v3488
        %v3729 = vmul.f32 %v3289, %v3493
        %v3730 = vmul.f32 %v3290, %v3493
        %v3731 = vmul.f32 %v3291, %v3498
        %v3732 = vmul.f32 %v3292, %v3498
        %v3733 = vmul.f32 %v3293, %v3503
        %v3734 = vmul.f32 %v3294, %v3503
        %v3735 = vmul.f32 %v3295, %v3508
        %v3736 = vmul.f32 %v3296, %v3508
        %v3737 = vmul.f32 %v3297, %v3513
        %v3738 = vmul.f32 %v3298, %v3513
        %v3739 = vmul.f32 %v3299, %v3518
        %v3740 = vmul.f32 %v3300, %v3518
        %v3741 = vmul.f32 %v3301, %v3523
        %v3742 = vmul.f32 %v3302, %v3523
        %v3743 = vmul.f32 %v3303, %v3528
        %v3744 = vmul.f32 %v3304, %v3528
        %v3745 = vmul.f32 %v3305, %v3533
        %v3746 = vmul.f32 %v3306, %v3533
        %v3747 = vmul.f32 %v3307, %v3538
        %v3748 = vmul.f32 %v3308, %v3538
        %v3749 = vmul.f32 %v3309, %v3543
        %v3750 = vmul.f32 %v3310, %v3543
        %v3751 = vmul.f32 %v3311, %v3548
        %v3752 = vmul.f32 %v3312, %v3548
        %v3753 = vmul.f32 %v3313, %v3553
        %v3754 = vmul.f32 %v3314, %v3553
        %v3755 = vmul.f32 %v3315, %v3558
        %v3756 = vmul.f32 %v3316, %v3558
        %v3757 = vmul.f32 %v3317, %v3563
        %v3758 = vmul.f32 %v3318, %v3563
        %v3759 = vmul.f32 %v3319, %v3568
        %v3760 = vmul.f32 %v3320, %v3568
        %v3761 = vmul.f32 %v3321, %v3573
        %v3762 = vmul.f32 %v3322, %v3573
        %v3763 = vmul.f32 %v3323, %v3578
        %v3764 = vmul.f32 %v3324, %v3578
        %v3765 = vmul.f32 %v3325, %v3583
        %v3766 = vmul.f32 %v3326, %v3583
        %v3767 = vmul.f32 %v3327, %v3588
        %v3768 = vmul.f32 %v3328, %v3588
        %v3769 = vmul.f32 %v3329, %v3593
        %v3770 = vmul.f32 %v3330, %v3593
        %v3771 = vmul.f32 %v3331, %v3598
        %v3772 = vmul.f32 %v3332, %v3598
        %v3773 = vmul.f32 %v3333, %v3603
        %v3774 = vmul.f32 %v3334, %v3603
        %v3775 = vmul.f32 %v3335, %v3608
        %v3776 = vmul.f32 %v3336, %v3608
        %v3777 = vmul.f32 %v3337, %v3613
        %v3778 = vmul.f32 %v3338, %v3613
        %v3779 = vmul.f32 %v3339, %v3618
        %v3780 = vmul.f32 %v3340, %v3618
        %v3781 = vmul.f32 %v3341, %v3623
        %v3782 = vmul.f32 %v3342, %v3623
        %v3783 = vmul.f32 %v3343, %v3628
        %v3784 = vmul.f32 %v3344, %v3628
        %v3785 = vmul.f32 %v3345, %v3633
        %v3786 = vmul.f32 %v3346, %v3633
        %v3787 = vmul.f32 %v3347, %v3638
        %v3788 = vmul.f32 %v3348, %v3638
        %v3789 = vmul.f32 %v3349, %v3643
        %v3790 = vmul.f32 %v3350, %v3643
        %v3791 = vmul.f32 %v3351, %v3648
        %v3792 = vmul.f32 %v3352, %v3648
        %v3793 = vmul.f32 %v3353, %v3653
        %v3794 = vmul.f32 %v3354, %v3653
        %v3795 = vmul.f32 %v3355, %v3658
        %v3796 = vmul.f32 %v3356, %v3658
        %v3797 = vmul.f32 %v3357, %v3663
        %v3798 = vmul.f32 %v3358, %v3663
        %v3799 = vmul.f32 %v3359, %v3668
        %v3800 = vmul.f32 %v3360, %v3668
        %v3801 = vmul.f32 %v3361, %v3673
        %v3802 = vmul.f32 %v3362, %v3673
        %v3803 = vmul.f32 %v3363, %v3678
        %v3804 = vmul.f32 %v3364, %v3678
        %v3805 = vmul.f32 %v3365, %v3683
        %v3806 = vmul.f32 %v3366, %v3683
        %v3807 = vmul.f32 %v3367, %v3688
        %v3808 = vmul.f32 %v3368, %v3688
        %v3809 = vmul.f32 %v3369, %v3693
        %v3810 = vmul.f32 %v3370, %v3693
        %v3811 = vmul.f32 %v3371, %v3698
        %v3812 = vmul.f32 %v3372, %v3698
        %v3813 = vmul.f32 %v3373, %v3703
        %v3814 = vmul.f32 %v3374, %v3703
        %v3815 = vld [vmem:[#allocation4] sm:$0xff]
        %v3816 = vld [vmem:[#allocation4 + $0x8] sm:$0xff]
        %v3817 = vld [vmem:[#allocation4 + $0x10] sm:$0xff]
        %v3818 = vld [vmem:[#allocation4 + $0x18] sm:$0xff]
        %v3819 = vld [vmem:[#allocation4 + $0x20] sm:$0xff]
        %v3820 = vld [vmem:[#allocation4 + $0x28] sm:$0xff]
        %v3821 = vld [vmem:[#allocation4 + $0x30] sm:$0xff]
        %v3822 = vld [vmem:[#allocation4 + $0x38] sm:$0xff]
        %v3823 = vld [vmem:[#allocation4 + $0x40] sm:$0xff]
        %v3824 = vld [vmem:[#allocation4 + $0x48] sm:$0xff]
        %v3825 = vld [vmem:[#allocation4 + $0x50] sm:$0xff]
        %v3826 = vld [vmem:[#allocation4 + $0x58] sm:$0xff]
        %v3827 = vld [vmem:[#allocation4 + $0x60] sm:$0xff]
        %v3828 = vld [vmem:[#allocation4 + $0x68] sm:$0xff]
        %v3829 = vld [vmem:[#allocation4 + $0x70] sm:$0xff]
        %v3830 = vld [vmem:[#allocation4 + $0x78] sm:$0xff]
        %v3831 = vld [vmem:[#allocation4 + $0x80] sm:$0xff]
        %v3832 = vld [vmem:[#allocation4 + $0x88] sm:$0xff]
        %v3833 = vld [vmem:[#allocation4 + $0x90] sm:$0xff]
        %v3834 = vld [vmem:[#allocation4 + $0x98] sm:$0xff]
        %v3835 = vld [vmem:[#allocation4 + $0xa0] sm:$0xff]
        %v3836 = vld [vmem:[#allocation4 + $0xa8] sm:$0xff]
        %v3837 = vld [vmem:[#allocation4 + $0xb0] sm:$0xff]
        %v3838 = vld [vmem:[#allocation4 + $0xb8] sm:$0xff]
        %v3839 = vld [vmem:[#allocation4 + $0xc0] sm:$0xff]
        %v3840 = vld [vmem:[#allocation4 + $0xc8] sm:$0xff]
        %v3841 = vld [vmem:[#allocation4 + $0xd0] sm:$0xff]
        %v3842 = vld [vmem:[#allocation4 + $0xd8] sm:$0xff]
        %v3843 = vld [vmem:[#allocation4 + $0xe0] sm:$0xff]
        %v3844 = vld [vmem:[#allocation4 + $0xe8] sm:$0xff]
        %v3845 = vld [vmem:[#allocation4 + $0xf0] sm:$0xff]
        %v3846 = vld [vmem:[#allocation4 + $0xf8] sm:$0xff]
        %v3847 = vld [vmem:[#allocation4 + $0x100] sm:$0xff]
        %v3848 = vld [vmem:[#allocation4 + $0x108] sm:$0xff]
        %v3849 = vld [vmem:[#allocation4 + $0x110] sm:$0xff]
        %v3850 = vld [vmem:[#allocation4 + $0x118] sm:$0xff]
        %v3851 = vld [vmem:[#allocation4 + $0x120] sm:$0xff]
        %v3852 = vld [vmem:[#allocation4 + $0x128] sm:$0xff]
        %v3853 = vld [vmem:[#allocation4 + $0x130] sm:$0xff]
        %v3854 = vld [vmem:[#allocation4 + $0x138] sm:$0xff]
        %v3855 = vld [vmem:[#allocation4 + $0x140] sm:$0xff]
        %v3856 = vld [vmem:[#allocation4 + $0x148] sm:$0xff]
        %v3857 = vld [vmem:[#allocation4 + $0x150] sm:$0xff]
        %v3858 = vld [vmem:[#allocation4 + $0x158] sm:$0xff]
        %v3859 = vld [vmem:[#allocation4 + $0x160] sm:$0xff]
        %v3860 = vld [vmem:[#allocation4 + $0x168] sm:$0xff]
        %v3861 = vld [vmem:[#allocation4 + $0x170] sm:$0xff]
        %v3862 = vld [vmem:[#allocation4 + $0x178] sm:$0xff]
        %v3863 = vld [vmem:[#allocation4 + $0x180] sm:$0xff]
        %v3864 = vld [vmem:[#allocation4 + $0x188] sm:$0xff]
        %v3865 = vld [vmem:[#allocation4 + $0x190] sm:$0xff]
        %v3866 = vld [vmem:[#allocation4 + $0x198] sm:$0xff]
        %v3867 = vld [vmem:[#allocation4 + $0x1a0] sm:$0xff]
        %v3868 = vld [vmem:[#allocation4 + $0x1a8] sm:$0xff]
        %v3869 = vld [vmem:[#allocation4 + $0x1b0] sm:$0xff]
        %3871 = vset.pattern.permute.xlu0 0
        %3872 = vperm.xlu0 %3871, %v3815
        %v3873 = vpop.permute.xlu0 %3872
        %3876 = vset.pattern.permute.xlu0 0
        %3877 = vperm.xlu0 %3876, %v3816
        %v3878 = vpop.permute.xlu0 %3877
        %3881 = vset.pattern.permute.xlu0 0
        %3882 = vperm.xlu0 %3881, %v3817
        %v3883 = vpop.permute.xlu0 %3882
        %3886 = vset.pattern.permute.xlu0 0
        %3887 = vperm.xlu0 %3886, %v3818
        %v3888 = vpop.permute.xlu0 %3887
        %3891 = vset.pattern.permute.xlu0 0
        %3892 = vperm.xlu0 %3891, %v3819
        %v3893 = vpop.permute.xlu0 %3892
        %3896 = vset.pattern.permute.xlu0 0
        %3897 = vperm.xlu0 %3896, %v3820
        %v3898 = vpop.permute.xlu0 %3897
        %3901 = vset.pattern.permute.xlu0 0
        %3902 = vperm.xlu0 %3901, %v3821
        %v3903 = vpop.permute.xlu0 %3902
        %3906 = vset.pattern.permute.xlu0 0
        %3907 = vperm.xlu0 %3906, %v3822
        %v3908 = vpop.permute.xlu0 %3907
        %3911 = vset.pattern.permute.xlu0 0
        %3912 = vperm.xlu0 %3911, %v3823
        %v3913 = vpop.permute.xlu0 %3912
        %3916 = vset.pattern.permute.xlu0 0
        %3917 = vperm.xlu0 %3916, %v3824
        %v3918 = vpop.permute.xlu0 %3917
        %3921 = vset.pattern.permute.xlu0 0
        %3922 = vperm.xlu0 %3921, %v3825
        %v3923 = vpop.permute.xlu0 %3922
        %3926 = vset.pattern.permute.xlu0 0
        %3927 = vperm.xlu0 %3926, %v3826
        %v3928 = vpop.permute.xlu0 %3927
        %3931 = vset.pattern.permute.xlu0 0
        %3932 = vperm.xlu0 %3931, %v3827
        %v3933 = vpop.permute.xlu0 %3932
        %3936 = vset.pattern.permute.xlu0 0
        %3937 = vperm.xlu0 %3936, %v3828
        %v3938 = vpop.permute.xlu0 %3937
        %3941 = vset.pattern.permute.xlu0 0
        %3942 = vperm.xlu0 %3941, %v3829
        %v3943 = vpop.permute.xlu0 %3942
        %3946 = vset.pattern.permute.xlu0 0
        %3947 = vperm.xlu0 %3946, %v3830
        %v3948 = vpop.permute.xlu0 %3947
        %3951 = vset.pattern.permute.xlu0 0
        %3952 = vperm.xlu0 %3951, %v3831
        %v3953 = vpop.permute.xlu0 %3952
        %3956 = vset.pattern.permute.xlu0 0
        %3957 = vperm.xlu0 %3956, %v3832
        %v3958 = vpop.permute.xlu0 %3957
        %3961 = vset.pattern.permute.xlu0 0
        %3962 = vperm.xlu0 %3961, %v3833
        %v3963 = vpop.permute.xlu0 %3962
        %3966 = vset.pattern.permute.xlu0 0
        %3967 = vperm.xlu0 %3966, %v3834
        %v3968 = vpop.permute.xlu0 %3967
        %3971 = vset.pattern.permute.xlu0 0
        %3972 = vperm.xlu0 %3971, %v3835
        %v3973 = vpop.permute.xlu0 %3972
        %3976 = vset.pattern.permute.xlu0 0
        %3977 = vperm.xlu0 %3976, %v3836
        %v3978 = vpop.permute.xlu0 %3977
        %3981 = vset.pattern.permute.xlu0 0
        %3982 = vperm.xlu0 %3981, %v3837
        %v3983 = vpop.permute.xlu0 %3982
        %3986 = vset.pattern.permute.xlu0 0
        %3987 = vperm.xlu0 %3986, %v3838
        %v3988 = vpop.permute.xlu0 %3987
        %3991 = vset.pattern.permute.xlu0 0
        %3992 = vperm.xlu0 %3991, %v3839
        %v3993 = vpop.permute.xlu0 %3992
        %3996 = vset.pattern.permute.xlu0 0
        %3997 = vperm.xlu0 %3996, %v3840
        %v3998 = vpop.permute.xlu0 %3997
        %4001 = vset.pattern.permute.xlu0 0
        %4002 = vperm.xlu0 %4001, %v3841
        %v4003 = vpop.permute.xlu0 %4002
        %4006 = vset.pattern.permute.xlu0 0
        %4007 = vperm.xlu0 %4006, %v3842
        %v4008 = vpop.permute.xlu0 %4007
        %4011 = vset.pattern.permute.xlu0 0
        %4012 = vperm.xlu0 %4011, %v3843
        %v4013 = vpop.permute.xlu0 %4012
        %4016 = vset.pattern.permute.xlu0 0
        %4017 = vperm.xlu0 %4016, %v3844
        %v4018 = vpop.permute.xlu0 %4017
        %4021 = vset.pattern.permute.xlu0 0
        %4022 = vperm.xlu0 %4021, %v3845
        %v4023 = vpop.permute.xlu0 %4022
        %4026 = vset.pattern.permute.xlu0 0
        %4027 = vperm.xlu0 %4026, %v3846
        %v4028 = vpop.permute.xlu0 %4027
        %4031 = vset.pattern.permute.xlu0 0
        %4032 = vperm.xlu0 %4031, %v3847
        %v4033 = vpop.permute.xlu0 %4032
        %4036 = vset.pattern.permute.xlu0 0
        %4037 = vperm.xlu0 %4036, %v3848
        %v4038 = vpop.permute.xlu0 %4037
        %4041 = vset.pattern.permute.xlu0 0
        %4042 = vperm.xlu0 %4041, %v3849
        %v4043 = vpop.permute.xlu0 %4042
        %4046 = vset.pattern.permute.xlu0 0
        %4047 = vperm.xlu0 %4046, %v3850
        %v4048 = vpop.permute.xlu0 %4047
        %4051 = vset.pattern.permute.xlu0 0
        %4052 = vperm.xlu0 %4051, %v3851
        %v4053 = vpop.permute.xlu0 %4052
        %4056 = vset.pattern.permute.xlu0 0
        %4057 = vperm.xlu0 %4056, %v3852
        %v4058 = vpop.permute.xlu0 %4057
        %4061 = vset.pattern.permute.xlu0 0
        %4062 = vperm.xlu0 %4061, %v3853
        %v4063 = vpop.permute.xlu0 %4062
        %4066 = vset.pattern.permute.xlu0 0
        %4067 = vperm.xlu0 %4066, %v3854
        %v4068 = vpop.permute.xlu0 %4067
        %4071 = vset.pattern.permute.xlu0 0
        %4072 = vperm.xlu0 %4071, %v3855
        %v4073 = vpop.permute.xlu0 %4072
        %4076 = vset.pattern.permute.xlu0 0
        %4077 = vperm.xlu0 %4076, %v3856
        %v4078 = vpop.permute.xlu0 %4077
        %4081 = vset.pattern.permute.xlu0 0
        %4082 = vperm.xlu0 %4081, %v3857
        %v4083 = vpop.permute.xlu0 %4082
        %4086 = vset.pattern.permute.xlu0 0
        %4087 = vperm.xlu0 %4086, %v3858
        %v4088 = vpop.permute.xlu0 %4087
        %4091 = vset.pattern.permute.xlu0 0
        %4092 = vperm.xlu0 %4091, %v3859
        %v4093 = vpop.permute.xlu0 %4092
        %4096 = vset.pattern.permute.xlu0 0
        %4097 = vperm.xlu0 %4096, %v3860
        %v4098 = vpop.permute.xlu0 %4097
        %4101 = vset.pattern.permute.xlu0 0
        %4102 = vperm.xlu0 %4101, %v3861
        %v4103 = vpop.permute.xlu0 %4102
        %4106 = vset.pattern.permute.xlu0 0
        %4107 = vperm.xlu0 %4106, %v3862
        %v4108 = vpop.permute.xlu0 %4107
        %4111 = vset.pattern.permute.xlu0 0
        %4112 = vperm.xlu0 %4111, %v3863
        %v4113 = vpop.permute.xlu0 %4112
        %4116 = vset.pattern.permute.xlu0 0
        %4117 = vperm.xlu0 %4116, %v3864
        %v4118 = vpop.permute.xlu0 %4117
        %4121 = vset.pattern.permute.xlu0 0
        %4122 = vperm.xlu0 %4121, %v3865
        %v4123 = vpop.permute.xlu0 %4122
        %4126 = vset.pattern.permute.xlu0 0
        %4127 = vperm.xlu0 %4126, %v3866
        %v4128 = vpop.permute.xlu0 %4127
        %4131 = vset.pattern.permute.xlu0 0
        %4132 = vperm.xlu0 %4131, %v3867
        %v4133 = vpop.permute.xlu0 %4132
        %4136 = vset.pattern.permute.xlu0 0
        %4137 = vperm.xlu0 %4136, %v3868
        %v4138 = vpop.permute.xlu0 %4137
        %4141 = vset.pattern.permute.xlu0 0
        %4142 = vperm.xlu0 %4141, %v3869
        %v4143 = vpop.permute.xlu0 %4142
        %v4145 = vadd.f32 %v3705, %v3873
        %v4146 = vadd.f32 %v3706, %v3873
        %v4147 = vadd.f32 %v3707, %v3878
        %v4148 = vadd.f32 %v3708, %v3878
        %v4149 = vadd.f32 %v3709, %v3883
        %v4150 = vadd.f32 %v3710, %v3883
        %v4151 = vadd.f32 %v3711, %v3888
        %v4152 = vadd.f32 %v3712, %v3888
        %v4153 = vadd.f32 %v3713, %v3893
        %v4154 = vadd.f32 %v3714, %v3893
        %v4155 = vadd.f32 %v3715, %v3898
        %v4156 = vadd.f32 %v3716, %v3898
        %v4157 = vadd.f32 %v3717, %v3903
        %v4158 = vadd.f32 %v3718, %v3903
        %v4159 = vadd.f32 %v3719, %v3908
        %v4160 = vadd.f32 %v3720, %v3908
        %v4161 = vadd.f32 %v3721, %v3913
        %v4162 = vadd.f32 %v3722, %v3913
        %v4163 = vadd.f32 %v3723, %v3918
        %v4164 = vadd.f32 %v3724, %v3918
        %v4165 = vadd.f32 %v3725, %v3923
        %v4166 = vadd.f32 %v3726, %v3923
        %v4167 = vadd.f32 %v3727, %v3928
        %v4168 = vadd.f32 %v3728, %v3928
        %v4169 = vadd.f32 %v3729, %v3933
        %v4170 = vadd.f32 %v3730, %v3933
        %v4171 = vadd.f32 %v3731, %v3938
        %v4172 = vadd.f32 %v3732, %v3938
        %v4173 = vadd.f32 %v3733, %v3943
        %v4174 = vadd.f32 %v3734, %v3943
        %v4175 = vadd.f32 %v3735, %v3948
        %v4176 = vadd.f32 %v3736, %v3948
        %v4177 = vadd.f32 %v3737, %v3953
        %v4178 = vadd.f32 %v3738, %v3953
        %v4179 = vadd.f32 %v3739, %v3958
        %v4180 = vadd.f32 %v3740, %v3958
        %v4181 = vadd.f32 %v3741, %v3963
        %v4182 = vadd.f32 %v3742, %v3963
        %v4183 = vadd.f32 %v3743, %v3968
        %v4184 = vadd.f32 %v3744, %v3968
        %v4185 = vadd.f32 %v3745, %v3973
        %v4186 = vadd.f32 %v3746, %v3973
        %v4187 = vadd.f32 %v3747, %v3978
        %v4188 = vadd.f32 %v3748, %v3978
        %v4189 = vadd.f32 %v3749, %v3983
        %v4190 = vadd.f32 %v3750, %v3983
        %v4191 = vadd.f32 %v3751, %v3988
        %v4192 = vadd.f32 %v3752, %v3988
        %v4193 = vadd.f32 %v3753, %v3993
        %v4194 = vadd.f32 %v3754, %v3993
        %v4195 = vadd.f32 %v3755, %v3998
        %v4196 = vadd.f32 %v3756, %v3998
        %v4197 = vadd.f32 %v3757, %v4003
        %v4198 = vadd.f32 %v3758, %v4003
        %v4199 = vadd.f32 %v3759, %v4008
        %v4200 = vadd.f32 %v3760, %v4008
        %v4201 = vadd.f32 %v3761, %v4013
        %v4202 = vadd.f32 %v3762, %v4013
        %v4203 = vadd.f32 %v3763, %v4018
        %v4204 = vadd.f32 %v3764, %v4018
        %v4205 = vadd.f32 %v3765, %v4023
        %v4206 = vadd.f32 %v3766, %v4023
        %v4207 = vadd.f32 %v3767, %v4028
        %v4208 = vadd.f32 %v3768, %v4028
        %v4209 = vadd.f32 %v3769, %v4033
        %v4210 = vadd.f32 %v3770, %v4033
        %v4211 = vadd.f32 %v3771, %v4038
        %v4212 = vadd.f32 %v3772, %v4038
        %v4213 = vadd.f32 %v3773, %v4043
        %v4214 = vadd.f32 %v3774, %v4043
        %v4215 = vadd.f32 %v3775, %v4048
        %v4216 = vadd.f32 %v3776, %v4048
        %v4217 = vadd.f32 %v3777, %v4053
        %v4218 = vadd.f32 %v3778, %v4053
        %v4219 = vadd.f32 %v3779, %v4058
        %v4220 = vadd.f32 %v3780, %v4058
        %v4221 = vadd.f32 %v3781, %v4063
        %v4222 = vadd.f32 %v3782, %v4063
        %v4223 = vadd.f32 %v3783, %v4068
        %v4224 = vadd.f32 %v3784, %v4068
        %v4225 = vadd.f32 %v3785, %v4073
        %v4226 = vadd.f32 %v3786, %v4073
        %v4227 = vadd.f32 %v3787, %v4078
        %v4228 = vadd.f32 %v3788, %v4078
        %v4229 = vadd.f32 %v3789, %v4083
        %v4230 = vadd.f32 %v3790, %v4083
        %v4231 = vadd.f32 %v3791, %v4088
        %v4232 = vadd.f32 %v3792, %v4088
        %v4233 = vadd.f32 %v3793, %v4093
        %v4234 = vadd.f32 %v3794, %v4093
        %v4235 = vadd.f32 %v3795, %v4098
        %v4236 = vadd.f32 %v3796, %v4098
        %v4237 = vadd.f32 %v3797, %v4103
        %v4238 = vadd.f32 %v3798, %v4103
        %v4239 = vadd.f32 %v3799, %v4108
        %v4240 = vadd.f32 %v3800, %v4108
        %v4241 = vadd.f32 %v3801, %v4113
        %v4242 = vadd.f32 %v3802, %v4113
        %v4243 = vadd.f32 %v3803, %v4118
        %v4244 = vadd.f32 %v3804, %v4118
        %v4245 = vadd.f32 %v3805, %v4123
        %v4246 = vadd.f32 %v3806, %v4123
        %v4247 = vadd.f32 %v3807, %v4128
        %v4248 = vadd.f32 %v3808, %v4128
        %v4249 = vadd.f32 %v3809, %v4133
        %v4250 = vadd.f32 %v3810, %v4133
        %v4251 = vadd.f32 %v3811, %v4138
        %v4252 = vadd.f32 %v3812, %v4138
        %v4253 = vadd.f32 %v3813, %v4143
        %v4254 = vadd.f32 %v3814, %v4143
        %4255 = vst [vmem:[%s234] sm:$0xff] %v4145
        %vm4256 = vcmask 556032
        %4257 = vst.msk [vmem:[%s234 + $0x8] sm:$0xff] %vm4256, %v4146
        %4258 = vst [vmem:[%s234 + $0x10] sm:$0xff] %v4147
        %4259 = vst.msk [vmem:[%s234 + $0x18] sm:$0xff] %vm4256, %v4148
        %4260 = vst [vmem:[%s234 + $0x20] sm:$0xff] %v4149
        %4261 = vst.msk [vmem:[%s234 + $0x28] sm:$0xff] %vm4256, %v4150
        %4262 = vst [vmem:[%s234 + $0x30] sm:$0xff] %v4151
        %4263 = vst.msk [vmem:[%s234 + $0x38] sm:$0xff] %vm4256, %v4152
        %4264 = vst [vmem:[%s234 + $0x40] sm:$0xff] %v4153
        %4265 = vst.msk [vmem:[%s234 + $0x48] sm:$0xff] %vm4256, %v4154
        %4266 = vst [vmem:[%s234 + $0x50] sm:$0xff] %v4155
        %4267 = vst.msk [vmem:[%s234 + $0x58] sm:$0xff] %vm4256, %v4156
        %4268 = vst [vmem:[%s234 + $0x60] sm:$0xff] %v4157
        %4269 = vst.msk [vmem:[%s234 + $0x68] sm:$0xff] %vm4256, %v4158
        %4270 = vst [vmem:[%s234 + $0x70] sm:$0xff] %v4159
        %4271 = vst.msk [vmem:[%s234 + $0x78] sm:$0xff] %vm4256, %v4160
        %4272 = vst [vmem:[%s234 + $0x80] sm:$0xff] %v4161
        %4273 = vst.msk [vmem:[%s234 + $0x88] sm:$0xff] %vm4256, %v4162
        %4274 = vst [vmem:[%s234 + $0x90] sm:$0xff] %v4163
        %4275 = vst.msk [vmem:[%s234 + $0x98] sm:$0xff] %vm4256, %v4164
        %4276 = vst [vmem:[%s234 + $0xa0] sm:$0xff] %v4165
        %4277 = vst.msk [vmem:[%s234 + $0xa8] sm:$0xff] %vm4256, %v4166
        %4278 = vst [vmem:[%s234 + $0xb0] sm:$0xff] %v4167
        %4279 = vst.msk [vmem:[%s234 + $0xb8] sm:$0xff] %vm4256, %v4168
        %4280 = vst [vmem:[%s234 + $0xc0] sm:$0xff] %v4169
        %4281 = vst.msk [vmem:[%s234 + $0xc8] sm:$0xff] %vm4256, %v4170
        %4282 = vst [vmem:[%s234 + $0xd0] sm:$0xff] %v4171
        %4283 = vst.msk [vmem:[%s234 + $0xd8] sm:$0xff] %vm4256, %v4172
        %4284 = vst [vmem:[%s234 + $0xe0] sm:$0xff] %v4173
        %4285 = vst.msk [vmem:[%s234 + $0xe8] sm:$0xff] %vm4256, %v4174
        %4286 = vst [vmem:[%s234 + $0xf0] sm:$0xff] %v4175
        %4287 = vst.msk [vmem:[%s234 + $0xf8] sm:$0xff] %vm4256, %v4176
        %4288 = vst [vmem:[%s234 + $0x100] sm:$0xff] %v4177
        %4289 = vst.msk [vmem:[%s234 + $0x108] sm:$0xff] %vm4256, %v4178
        %4290 = vst [vmem:[%s234 + $0x110] sm:$0xff] %v4179
        %4291 = vst.msk [vmem:[%s234 + $0x118] sm:$0xff] %vm4256, %v4180
        %4292 = vst [vmem:[%s234 + $0x120] sm:$0xff] %v4181
        %4293 = vst.msk [vmem:[%s234 + $0x128] sm:$0xff] %vm4256, %v4182
        %4294 = vst [vmem:[%s234 + $0x130] sm:$0xff] %v4183
        %4295 = vst.msk [vmem:[%s234 + $0x138] sm:$0xff] %vm4256, %v4184
        %4296 = vst [vmem:[%s234 + $0x140] sm:$0xff] %v4185
        %4297 = vst.msk [vmem:[%s234 + $0x148] sm:$0xff] %vm4256, %v4186
        %4298 = vst [vmem:[%s234 + $0x150] sm:$0xff] %v4187
        %4299 = vst.msk [vmem:[%s234 + $0x158] sm:$0xff] %vm4256, %v4188
        %4300 = vst [vmem:[%s234 + $0x160] sm:$0xff] %v4189
        %4301 = vst.msk [vmem:[%s234 + $0x168] sm:$0xff] %vm4256, %v4190
        %4302 = vst [vmem:[%s234 + $0x170] sm:$0xff] %v4191
        %4303 = vst.msk [vmem:[%s234 + $0x178] sm:$0xff] %vm4256, %v4192
        %4304 = vst [vmem:[%s234 + $0x180] sm:$0xff] %v4193
        %4305 = vst.msk [vmem:[%s234 + $0x188] sm:$0xff] %vm4256, %v4194
        %4306 = vst [vmem:[%s234 + $0x190] sm:$0xff] %v4195
        %4307 = vst.msk [vmem:[%s234 + $0x198] sm:$0xff] %vm4256, %v4196
        %4308 = vst [vmem:[%s234 + $0x1a0] sm:$0xff] %v4197
        %4309 = vst.msk [vmem:[%s234 + $0x1a8] sm:$0xff] %vm4256, %v4198
        %4310 = vst [vmem:[%s234 + $0x1b0] sm:$0xff] %v4199
        %4311 = vst.msk [vmem:[%s234 + $0x1b8] sm:$0xff] %vm4256, %v4200
        %4312 = vst [vmem:[%s234 + $0x1c0] sm:$0xff] %v4201
        %4313 = vst.msk [vmem:[%s234 + $0x1c8] sm:$0xff] %vm4256, %v4202
        %4314 = vst [vmem:[%s234 + $0x1d0] sm:$0xff] %v4203
        %4315 = vst.msk [vmem:[%s234 + $0x1d8] sm:$0xff] %vm4256, %v4204
        %4316 = vst [vmem:[%s234 + $0x1e0] sm:$0xff] %v4205
        %4317 = vst.msk [vmem:[%s234 + $0x1e8] sm:$0xff] %vm4256, %v4206
        %4318 = vst [vmem:[%s234 + $0x1f0] sm:$0xff] %v4207
        %4319 = vst.msk [vmem:[%s234 + $0x1f8] sm:$0xff] %vm4256, %v4208
        %4320 = vst [vmem:[%s234 + $0x200] sm:$0xff] %v4209
        %4321 = vst.msk [vmem:[%s234 + $0x208] sm:$0xff] %vm4256, %v4210
        %4322 = vst [vmem:[%s234 + $0x210] sm:$0xff] %v4211
        %4323 = vst.msk [vmem:[%s234 + $0x218] sm:$0xff] %vm4256, %v4212
        %4324 = vst [vmem:[%s234 + $0x220] sm:$0xff] %v4213
        %4325 = vst.msk [vmem:[%s234 + $0x228] sm:$0xff] %vm4256, %v4214
        %4326 = vst [vmem:[%s234 + $0x230] sm:$0xff] %v4215
        %4327 = vst.msk [vmem:[%s234 + $0x238] sm:$0xff] %vm4256, %v4216
        %4328 = vst [vmem:[%s234 + $0x240] sm:$0xff] %v4217
        %4329 = vst.msk [vmem:[%s234 + $0x248] sm:$0xff] %vm4256, %v4218
        %4330 = vst [vmem:[%s234 + $0x250] sm:$0xff] %v4219
        %4331 = vst.msk [vmem:[%s234 + $0x258] sm:$0xff] %vm4256, %v4220
        %4332 = vst [vmem:[%s234 + $0x260] sm:$0xff] %v4221
        %4333 = vst.msk [vmem:[%s234 + $0x268] sm:$0xff] %vm4256, %v4222
        %4334 = vst [vmem:[%s234 + $0x270] sm:$0xff] %v4223
        %4335 = vst.msk [vmem:[%s234 + $0x278] sm:$0xff] %vm4256, %v4224
        %4336 = vst [vmem:[%s234 + $0x280] sm:$0xff] %v4225
        %4337 = vst.msk [vmem:[%s234 + $0x288] sm:$0xff] %vm4256, %v4226
        %4338 = vst [vmem:[%s234 + $0x290] sm:$0xff] %v4227
        %4339 = vst.msk [vmem:[%s234 + $0x298] sm:$0xff] %vm4256, %v4228
        %4340 = vst [vmem:[%s234 + $0x2a0] sm:$0xff] %v4229
        %4341 = vst.msk [vmem:[%s234 + $0x2a8] sm:$0xff] %vm4256, %v4230
        %4342 = vst [vmem:[%s234 + $0x2b0] sm:$0xff] %v4231
        %4343 = vst.msk [vmem:[%s234 + $0x2b8] sm:$0xff] %vm4256, %v4232
        %4344 = vst [vmem:[%s234 + $0x2c0] sm:$0xff] %v4233
        %4345 = vst.msk [vmem:[%s234 + $0x2c8] sm:$0xff] %vm4256, %v4234
        %4346 = vst [vmem:[%s234 + $0x2d0] sm:$0xff] %v4235
        %4347 = vst.msk [vmem:[%s234 + $0x2d8] sm:$0xff] %vm4256, %v4236
        %4348 = vst [vmem:[%s234 + $0x2e0] sm:$0xff] %v4237
        %4349 = vst.msk [vmem:[%s234 + $0x2e8] sm:$0xff] %vm4256, %v4238
        %4350 = vst [vmem:[%s234 + $0x2f0] sm:$0xff] %v4239
        %4351 = vst.msk [vmem:[%s234 + $0x2f8] sm:$0xff] %vm4256, %v4240
        %4352 = vst [vmem:[%s234 + $0x300] sm:$0xff] %v4241
        %4353 = vst.msk [vmem:[%s234 + $0x308] sm:$0xff] %vm4256, %v4242
        %4354 = vst [vmem:[%s234 + $0x310] sm:$0xff] %v4243
        %4355 = vst.msk [vmem:[%s234 + $0x318] sm:$0xff] %vm4256, %v4244
        %4356 = vst [vmem:[%s234 + $0x320] sm:$0xff] %v4245
        %4357 = vst.msk [vmem:[%s234 + $0x328] sm:$0xff] %vm4256, %v4246
        %4358 = vst [vmem:[%s234 + $0x330] sm:$0xff] %v4247
        %4359 = vst.msk [vmem:[%s234 + $0x338] sm:$0xff] %vm4256, %v4248
        %4360 = vst [vmem:[%s234 + $0x340] sm:$0xff] %v4249
        %4361 = vst.msk [vmem:[%s234 + $0x348] sm:$0xff] %vm4256, %v4250
        %4362 = vst [vmem:[%s234 + $0x350] sm:$0xff] %v4251
        %4363 = vst.msk [vmem:[%s234 + $0x358] sm:$0xff] %vm4256, %v4252
        %4364 = vst [vmem:[%s234 + $0x360] sm:$0xff] %v4253
        %4365 = vst.msk [vmem:[%s234 + $0x368] sm:$0xff] %vm4256, %v4254
      $region48: #{tpu_custom_call.1} parent=35 // pred_fallthru
        _
      %s4366 = smul.u32 %s19, %s20
      %p4367 = scmp.lt.s32.totalorder %s4366, 1
      %s4368 = scalar_select %p4367, %s4366, 1
      %s4369 = smul.addr %s4368, 110
      %s4370 = smul.addr %s4369, 8
      %s4371 = scalar_lea.vmem %s4, %s4370
      // Predicated region
      $region49: #{tpu_custom_call.1} parent=35 // pred_check
        %p4372 = pneg %p142
      $region50: #{tpu_custom_call.1} parent=35 // pred_check_branch
        %4374 = sbr.rel (%p4372) target = $region52
      $region51: #{tpu_custom_call.1} parent=35 // pred_region
        %s4375 = smul.u32 %s19, %s20
      $region52: #{tpu_custom_call.1} parent=35 // pred_fallthru
        _
    $region36: #{tpu_custom_call.1} parent=5 // pred_fallthru
      _
    %p4376 = scmp.le.s32.totalorder 2, %s10
    // Predicated region
    $region53: #{tpu_custom_call.1} parent=5 // pred_check
      %p4377 = pneg %p4376
    $region54: #{tpu_custom_call.1} parent=5 // pred_check_branch
      %4379 = sbr.rel (%p4377) target = $region56
    $region55: #{tpu_custom_call.1} parent=5 // pred_region
      %s4380 = ssub.s32 %s10, 2
      // Predicated region
      $region57: #{tpu_custom_call.1} parent=55 // pred_check
        %p4381 = pneg %p148
      $region58: #{tpu_custom_call.1} parent=55 // pred_check_branch
        %4383 = sbr.rel (%p4381) target = $region60
      $region59: #{tpu_custom_call.1} parent=55 // pred_region
        %s4384 = smul.u32 %s21, %s22
        %p4385 = scmp.lt.s32.totalorder %s4384, 1
        %s4386 = scalar_select %p4385, %s4384, 1
        %s4387 = smul.addr %s4386, 110
        %s4388 = smul.addr %s4387, 8
        %s4389 = scalar_lea.vmem %s4, %s4388
      $region60: #{tpu_custom_call.1} parent=55 // pred_fallthru
        _
    $region56: #{tpu_custom_call.1} parent=5 // pred_fallthru
      _
  $region6: #{tpu_custom_call.1} parent=0 // loop_footer
    %s14 = sadd.s32 1, %s10
  $region7: #{tpu_custom_call.1} parent=0 // loop_footer_branch
    %9 = sbr.rel target = $region3
  $region8: #{tpu_custom_call.1} parent=0 // loop_exit
    _

</llo_original>
